<compile_context>
chip_gen: v7x
topology: tpu7x:2x2x1
jax: 0.10.0
libtpu: 0.0.40
codegen_flags: <defaults>
</compile_context>

<pallas_src>
import functools
import math

import jax
import jax.numpy as jnp
from jax.experimental import pallas as pl
from jax.experimental.pallas import tpu as pltpu

BN_EPS = 1e-5


def _vmem_budget():
    """(scoped VMEM limit per pallas_call, per-tile working-set budget) for this chip."""
    try:
        phys = getattr(pltpu.get_tpu_info(), "vmem_capacity_bytes", 64 << 20)
    except Exception:
        phys = 64 << 20                       # conservative fallback (v7x-sized)
    if phys >= (100 << 20):                   # v5e / v6e: 128 MiB physical VMEM
        return 100 << 20, 56 << 20
    return 44 << 20, 24 << 20                 # v7x: 64 MiB physical VMEM


_VMEM_LIMIT_BYTES, _VMEM_TILE_BUDGET = _vmem_budget()


def _pick_free_tile(free, bytes_per_row, *, align, n_batch, min_total_blocks=8):
    """Largest divisor of `free` that is a multiple of `align` (lane/sublane block-tiling
    rule) or the full axis, whose per-tile working set fits the VMEM budget.  Among the
    fitting tiles, prefer the largest one that still yields >= min_total_blocks grid blocks
    so the double-buffered pipeline (and both v7x TensorCores) has work to overlap."""
    cands = [t for t in range(1, free + 1)
             if free % t == 0 and (t % align == 0 or t == free)]
    fits = [t for t in cands if t * bytes_per_row <= _VMEM_TILE_BUDGET]
    if not fits:
        return min(cands)
    multi = [t for t in fits if n_batch * (free // t) >= min_total_blocks]
    return max(multi) if multi else max(fits)


# ----------------------------- Pallas kernels -------------------------------

def _conv_bn_fused_kernel(*refs, taps, pad_lo, conv_axis, cin, cout, fuse_affine):
    """'same'-padded conv along one spatial axis of an NCHW block (VPU shifted FMAs), with
    the previous BatchNorm's affine optionally fused into the input and a BN-stats epilogue.

    Refs (fuse_affine=True):  x, w, b, scale, shift, o, stats
         (fuse_affine=False): x, w, b, o, stats
      x_ref:  (cin, A, B) VMEM;  conv_axis 0 -> conv along A (sublanes), 1 -> along B (lanes)
      w_ref:  (cout*cin*taps,) SMEM, index = (co*cin + ci)*taps + t
      b_ref:  (cout,) SMEM
      scale_ref / shift_ref: (cin,) SMEM  previous-BN per-channel affine
      o_ref:  (cout, A, B) VMEM  raw conv output (pre-BN)
      st_ref: (2, cout, B) VMEM  per-channel lane-dense partial sum / sum-of-squares
    """
    if fuse_affine:
        x_ref, w_ref, b_ref, scale_ref, shift_ref, o_ref, st_ref = refs
    else:
        x_ref, w_ref, b_ref, o_ref, st_ref = refs

    A, B = x_ref.shape[1], x_ref.shape[2]
    pad_hi = taps - 1 - pad_lo

    accs = [None] * cout
    for ci in range(cin):
        plane = x_ref[ci]                                    # (A, B), lane-dense
        if fuse_affine:                                      # previous BN affine, pre-pad
            plane = plane * scale_ref[ci] + shift_ref[ci]

        # PyTorch padding='same' zero padding along the conv axis, built once per channel
        # in VMEM only (no HBM amplification).
        pieces = []
        if pad_lo > 0:
            shp = (pad_lo, B) if conv_axis == 0 else (A, pad_lo)
            pieces.append(jnp.zeros(shp, jnp.float32))
        pieces.append(plane)
        if pad_hi > 0:
            shp = (pad_hi, B) if conv_axis == 0 else (A, pad_hi)
            pieces.append(jnp.zeros(shp, jnp.float32))
        xp = jnp.concatenate(pieces, axis=conv_axis) if len(pieces) > 1 else plane

        # Shifted multiply-adds: one shift per (ci, t), reused for every output channel;
        # scalar weights come from SMEM so each term is a single broadcast mul + add.
        for t in range(taps):
            sl = xp[t:t + A, :] if conv_axis == 0 else xp[:, t:t + B]
            for co in range(cout):
                term = sl * w_ref[(co * cin + ci) * taps + t]
                accs[co] = term if accs[co] is None else accs[co] + term

    for co in range(cout):
        out = accs[co] + b_ref[co]
        o_ref[co] = out
        # BN-stats epilogue: lane-dense per-channel partials (sliced stores, no zero fill)
        # so the following BatchNorm never re-reads the activation from HBM.
        st_ref[0:1, co, :] = jnp.sum(out, axis=0, keepdims=True)
        st_ref[1:2, co, :] = jnp.sum(out * out, axis=0, keepdims=True)


def _bn_affine_kernel(x_ref, scale_ref, shift_ref, o_ref, *, ch):
    """Per-channel affine y = x*scale + shift (final BatchNorm normalize, aliased in place)."""
    for c in range(ch):
        o_ref[c] = x_ref[c] * scale_ref[c] + shift_ref[c]


# ------------------------------ JAX wrappers ---------------------------------

def conv_same_bn_fused(x, w_flat, bias, in_scale, in_shift, cout, taps, *, conv_axis):
    """'same'-padded conv of an NCHW tensor along H (conv_axis=2, PyTorch kernel (k,1)) or
    W (conv_axis=3, kernel (1,k)).  Returns (raw_out, stats); stats[:, 0]/[:, 1] hold
    lane-dense per-tile channel partial sums / sums-of-squares of raw_out."""
    N, cin, H, W = x.shape
    pad_lo = (taps - 1) // 2          # PyTorch padding='same': begin pad = (k-1)//2

    if conv_axis == 2:                # conv over H: full H per block, tile W (lane axis)
        conv_len, free, align = H, W, 128
    else:                             # conv over W: full W per block, tile H (sublane axis)
        conv_len, free, align = W, H, 8

    # Per-free-row working set: DMA'd x/o blocks double-buffered (2x), in-kernel
    # temporaries (cout accumulators + one padded plane / slice / term) charged once.
    bytes_per_row = 4 * (2 * cin * conv_len + 2 * cout * conv_len
                         + cout * conv_len + 3 * (conv_len + taps))
    tile = _pick_free_tile(free, bytes_per_row, align=align, n_batch=N)
    n_tiles = free // tile

    if conv_axis == 2:
        x_spec = pl.BlockSpec((None, cin, H, tile), lambda n, j: (n, 0, 0, j))
        o_spec = pl.BlockSpec((None, cout, H, tile), lambda n, j: (n, 0, 0, j))
        st_lanes = tile
    else:
        x_spec = pl.BlockSpec((None, cin, tile, W), lambda n, j: (n, 0, j, 0))
        o_spec = pl.BlockSpec((None, cout, tile, W), lambda n, j: (n, 0, j, 0))
        st_lanes = W
    st_spec = pl.BlockSpec((None, 2, cout, st_lanes),
                           lambda n, j: (n * n_tiles + j, 0, 0, 0))
    smem = pl.BlockSpec(memory_space=pltpu.MemorySpace.SMEM)

    fuse_affine = in_scale is not None
    kernel = functools.partial(_conv_bn_fused_kernel, taps=taps, pad_lo=pad_lo,
                               conv_axis=0 if conv_axis == 2 else 1,
                               cin=cin, cout=cout, fuse_affine=fuse_affine)
    operands = [x, w_flat, bias] + ([in_scale, in_shift] if fuse_affine else [])
    in_specs = [x_spec, smem, smem] + ([smem, smem] if fuse_affine else [])

    return pl.pallas_call(
        kernel,
        grid=(N, n_tiles),
        in_specs=in_specs,
        out_specs=(o_spec, st_spec),
        out_shape=(jax.ShapeDtypeStruct((N, cout, H, W), jnp.float32),
                   jax.ShapeDtypeStruct((N * n_tiles, 2, cout, st_lanes), jnp.float32)),
        compiler_params=pltpu.CompilerParams(
            dimension_semantics=("parallel", "parallel"),
            vmem_limit_bytes=_VMEM_LIMIT_BYTES),
    )(*operands)


def batch_norm_apply(x, scale, shift):
    """Final BatchNorm normalize: gridded per-channel affine, aliased in place so it adds
    no HBM allocation (single read+write of the tensor)."""
    N, C, H, W = x.shape
    bytes_per_row = 4 * 4 * C * W            # 2x input block + 2x output block
    tile = _pick_free_tile(H, bytes_per_row, align=8, n_batch=N)
    n_tiles = H // tile
    blk = pl.BlockSpec((None, C, tile, W), lambda n, i: (n, 0, i, 0))
    smem = pl.BlockSpec(memory_space=pltpu.MemorySpace.SMEM)
    return pl.pallas_call(
        functools.partial(_bn_affine_kernel, ch=C),
        grid=(N, n_tiles),
        in_specs=[blk, smem, smem],
        out_specs=blk,
        out_shape=jax.ShapeDtypeStruct((N, C, H, W), jnp.float32),
        input_output_aliases={0: 0},
        compiler_params=pltpu.CompilerParams(
            dimension_semantics=("parallel", "parallel"),
            vmem_limit_bytes=_VMEM_LIMIT_BYTES),
    )(x, scale, shift)


def _bn_scale_shift(stats, count, gamma, beta):
    """Finalize training-mode BatchNorm2d from the per-tile lane-dense partials.  Returns
    (scale, shift) so that  x*scale + shift == (x - mean) * rsqrt(var + eps) * gamma + beta.
    Variance uses E[x^2]-E[x]^2 in f32 with a clamp; conv outputs here are near zero-mean
    so cancellation is benign at these scales."""
    ssum = jnp.sum(stats[:, 0], axis=(0, -1))
    ssq = jnp.sum(stats[:, 1], axis=(0, -1))
    mean = ssum / count
    var = jnp.maximum(ssq / count - mean * mean, 0.0)   # biased variance (training-mode BN)
    scale = gamma * jax.lax.rsqrt(var + BN_EPS)
    shift = beta - mean * scale
    return scale, shift


# --------------------------- parameters & module -------------------------------

def _conv_params(key, cin, cout, taps):
    """PyTorch Conv2d default init; weights flattened (co, ci, t)-major: (cout*cin*taps,)."""
    wkey, bkey = jax.random.split(key)
    bound = 1.0 / math.sqrt(cin * taps)
    w = jax.random.uniform(wkey, (cout * cin * taps,), jnp.float32, -bound, bound)
    b = jax.random.uniform(bkey, (cout,), jnp.float32, -bound, bound)
    return w, b


class SeparatedConv2D:
    """Pallas/JAX forward-pass equivalent of the PyTorch SeparatedConv2D (NCHW activations).

    The nn.BatchNorm2d layers are constructed inside forward() in the reference, so they run
    in training mode: batch statistics (biased variance, eps=1e-5), gamma=1, beta=0."""

    def __init__(self, key, in_channels, out_channels, kernel_size):
        k1, k2 = jax.random.split(key)
        self.cin, self.cout, self.k = in_channels, out_channels, kernel_size
        self.w1, self.b1 = _conv_params(k1, in_channels, in_channels, kernel_size)   # (k,1)
        self.w2, self.b2 = _conv_params(k2, in_channels, out_channels, kernel_size)  # (1,k)
        self.g1 = jnp.ones((in_channels,), jnp.float32)
        self.be1 = jnp.zeros((in_channels,), jnp.float32)
        self.g2 = jnp.ones((out_channels,), jnp.float32)
        self.be2 = jnp.zeros((out_channels,), jnp.float32)

    def __call__(self, x):                       # x: (N, Cin, H, W) NCHW
        N, _, H, W = x.shape
        count = N * H * W
        # Conv (k,1) over H; no input affine on the first conv (static skip); stats -> BN1.
        y1, st1 = conv_same_bn_fused(x, self.w1, self.b1, None, None,
                                     self.cin, self.k, conv_axis=2)
        s1, t1 = _bn_scale_shift(st1, count, self.g1, self.be1)
        # Conv (1,k) over W with BN1's affine fused into the input load; stats -> BN2.
        y2, st2 = conv_same_bn_fused(y1, self.w2, self.b2, s1, t1,
                                     self.cout, self.k, conv_axis=3)
        s2, t2 = _bn_scale_shift(st2, count, self.g2, self.be2)
        # Final BN2 normalize: aliased in-place elementwise pass.
        return batch_norm_apply(y2, s2, t2)


# ---------------------------------- main ---------------------------------------

if __name__ == "__main__":
    key = jax.random.PRNGKey(0)
    pkey1, pkey2, xkey = jax.random.split(key, 3)

    # PyTorch-native NCHW input at small shapes (no transpose needed: NCHW keeps the wide
    # spatial axis on TPU lanes and the tiny channel axis leading).
    x = jax.random.normal(xkey, (2, 4, 16, 16), jnp.float32)

    mod3 = SeparatedConv2D(pkey1, in_channels=4, out_channels=4, kernel_size=3)
    mod6 = SeparatedConv2D(pkey2, in_channels=4, out_channels=8, kernel_size=6)  # DUCK-Net uses k=6

    y3 = jax.jit(lambda t: mod3(t))(x)
    y6 = jax.jit(lambda t: mod6(t))(x)
    jax.block_until_ready((y3, y6))

    assert y3.shape == (2, 4, 16, 16)
    assert y6.shape == (2, 8, 16, 16)
    assert bool(jnp.all(jnp.isfinite(y3))) and bool(jnp.all(jnp.isfinite(y6)))
    print("KERNEL_OK")
</pallas_src>

<mosaic_0001>
module attributes {stable_mosaic.version = 11 : i64} {
  func.func @_conv_bn_fused_kernel(%arg0: i32, %arg1: i32, %arg2: memref<1x4x16x16xf32, #tpu.memory_space<vmem>>, %arg3: memref<48xf32, #tpu.memory_space<smem>>, %arg4: memref<4xf32, #tpu.memory_space<smem>>, %arg5: memref<1x4x16x16xf32, #tpu.memory_space<vmem>>, %arg6: memref<1x2x4x16xf32, #tpu.memory_space<vmem>>) attributes {dimension_semantics = [#tpu.dimension_semantics<parallel>, #tpu.dimension_semantics<parallel>], iteration_bounds = array<i64: 2, 1>, scalar_prefetch = 0 : i64, scratch_operands = 0 : i64, tpu.core_type = #tpu.core_type<tc>, window_params = [{transform_indices = @transform_0, window_bounds = array<i64: 1, 4, 16, 16>}, {transform_indices = @transform_1, window_bounds = array<i64: 48>}, {transform_indices = @transform_2, window_bounds = array<i64: 4>}, {transform_indices = @transform_3, window_bounds = array<i64: 1, 4, 16, 16>}, {transform_indices = @transform_4, window_bounds = array<i64: 1, 2, 4, 16>}]} {
    %c0 = arith.constant 0 : index
    %c0_0 = arith.constant 0 : index
    %c0_1 = arith.constant 0 : index
    %c0_2 = arith.constant 0 : index
    %0 = vector.load %arg2[%c0, %c0_0, %c0_1, %c0_2] : memref<1x4x16x16xf32, #tpu.memory_space<vmem>>, vector<1x1x16x16xf32>
    %1 = vector.shape_cast %0 : vector<1x1x16x16xf32> to vector<16x16xf32>
    %cst = arith.constant 0.000000e+00 : f32
    %2 = vector.broadcast %cst : f32 to vector<1x16xf32>
    %cst_3 = arith.constant 0.000000e+00 : f32
    %3 = vector.broadcast %cst_3 : f32 to vector<1x16xf32>
    %4 = tpu.concatenate %2, %1, %3 in 0 : vector<1x16xf32>, vector<16x16xf32>, vector<1x16xf32> -> vector<18x16xf32>
    %5 = vector.extract_strided_slice %4 {offsets = [0, 0], sizes = [16, 16], strides = [1, 1]} : vector<18x16xf32> to vector<16x16xf32>
    %c0_4 = arith.constant 0 : index
    %6 = memref.load %arg3[%c0_4] : memref<48xf32, #tpu.memory_space<smem>>
    %7 = vector.broadcast %6 : f32 to vector<16x16xf32>
    %8 = arith.mulf %5, %7 : vector<16x16xf32>
    %c12 = arith.constant 12 : index
    %9 = memref.load %arg3[%c12] : memref<48xf32, #tpu.memory_space<smem>>
    %10 = vector.broadcast %9 : f32 to vector<16x16xf32>
    %11 = arith.mulf %5, %10 : vector<16x16xf32>
    %c24 = arith.constant 24 : index
    %12 = memref.load %arg3[%c24] : memref<48xf32, #tpu.memory_space<smem>>
    %13 = vector.broadcast %12 : f32 to vector<16x16xf32>
    %14 = arith.mulf %5, %13 : vector<16x16xf32>
    %c36 = arith.constant 36 : index
    %15 = memref.load %arg3[%c36] : memref<48xf32, #tpu.memory_space<smem>>
    %16 = vector.broadcast %15 : f32 to vector<16x16xf32>
    %17 = arith.mulf %5, %16 : vector<16x16xf32>
    %18 = vector.extract_strided_slice %4 {offsets = [1, 0], sizes = [16, 16], strides = [1, 1]} : vector<18x16xf32> to vector<16x16xf32>
    %c1 = arith.constant 1 : index
    %19 = memref.load %arg3[%c1] : memref<48xf32, #tpu.memory_space<smem>>
    %20 = vector.broadcast %19 : f32 to vector<16x16xf32>
    %21 = arith.mulf %18, %20 : vector<16x16xf32>
    %22 = arith.addf %8, %21 : vector<16x16xf32>
    %c13 = arith.constant 13 : index
    %23 = memref.load %arg3[%c13] : memref<48xf32, #tpu.memory_space<smem>>
    %24 = vector.broadcast %23 : f32 to vector<16x16xf32>
    %25 = arith.mulf %18, %24 : vector<16x16xf32>
    %26 = arith.addf %11, %25 : vector<16x16xf32>
    %c25 = arith.constant 25 : index
    %27 = memref.load %arg3[%c25] : memref<48xf32, #tpu.memory_space<smem>>
    %28 = vector.broadcast %27 : f32 to vector<16x16xf32>
    %29 = arith.mulf %18, %28 : vector<16x16xf32>
    %30 = arith.addf %14, %29 : vector<16x16xf32>
    %c37 = arith.constant 37 : index
    %31 = memref.load %arg3[%c37] : memref<48xf32, #tpu.memory_space<smem>>
    %32 = vector.broadcast %31 : f32 to vector<16x16xf32>
    %33 = arith.mulf %18, %32 : vector<16x16xf32>
    %34 = arith.addf %17, %33 : vector<16x16xf32>
    %35 = vector.extract_strided_slice %4 {offsets = [2, 0], sizes = [16, 16], strides = [1, 1]} : vector<18x16xf32> to vector<16x16xf32>
    %c2 = arith.constant 2 : index
    %36 = memref.load %arg3[%c2] : memref<48xf32, #tpu.memory_space<smem>>
    %37 = vector.broadcast %36 : f32 to vector<16x16xf32>
    %38 = arith.mulf %35, %37 : vector<16x16xf32>
    %39 = arith.addf %22, %38 : vector<16x16xf32>
    %c14 = arith.constant 14 : index
    %40 = memref.load %arg3[%c14] : memref<48xf32, #tpu.memory_space<smem>>
    %41 = vector.broadcast %40 : f32 to vector<16x16xf32>
    %42 = arith.mulf %35, %41 : vector<16x16xf32>
    %43 = arith.addf %26, %42 : vector<16x16xf32>
    %c26 = arith.constant 26 : index
    %44 = memref.load %arg3[%c26] : memref<48xf32, #tpu.memory_space<smem>>
    %45 = vector.broadcast %44 : f32 to vector<16x16xf32>
    %46 = arith.mulf %35, %45 : vector<16x16xf32>
    %47 = arith.addf %30, %46 : vector<16x16xf32>
    %c38 = arith.constant 38 : index
    %48 = memref.load %arg3[%c38] : memref<48xf32, #tpu.memory_space<smem>>
    %49 = vector.broadcast %48 : f32 to vector<16x16xf32>
    %50 = arith.mulf %35, %49 : vector<16x16xf32>
    %51 = arith.addf %34, %50 : vector<16x16xf32>
    %c0_5 = arith.constant 0 : index
    %c1_6 = arith.constant 1 : index
    %c0_7 = arith.constant 0 : index
    %c0_8 = arith.constant 0 : index
    %52 = vector.load %arg2[%c0_5, %c1_6, %c0_7, %c0_8] : memref<1x4x16x16xf32, #tpu.memory_space<vmem>>, vector<1x1x16x16xf32>
    %53 = vector.shape_cast %52 : vector<1x1x16x16xf32> to vector<16x16xf32>
    %cst_9 = arith.constant 0.000000e+00 : f32
    %54 = vector.broadcast %cst_9 : f32 to vector<1x16xf32>
    %cst_10 = arith.constant 0.000000e+00 : f32
    %55 = vector.broadcast %cst_10 : f32 to vector<1x16xf32>
    %56 = tpu.concatenate %54, %53, %55 in 0 : vector<1x16xf32>, vector<16x16xf32>, vector<1x16xf32> -> vector<18x16xf32>
    %57 = vector.extract_strided_slice %56 {offsets = [0, 0], sizes = [16, 16], strides = [1, 1]} : vector<18x16xf32> to vector<16x16xf32>
    %c3 = arith.constant 3 : index
    %58 = memref.load %arg3[%c3] : memref<48xf32, #tpu.memory_space<smem>>
    %59 = vector.broadcast %58 : f32 to vector<16x16xf32>
    %60 = arith.mulf %57, %59 : vector<16x16xf32>
    %61 = arith.addf %39, %60 : vector<16x16xf32>
    %c15 = arith.constant 15 : index
    %62 = memref.load %arg3[%c15] : memref<48xf32, #tpu.memory_space<smem>>
    %63 = vector.broadcast %62 : f32 to vector<16x16xf32>
    %64 = arith.mulf %57, %63 : vector<16x16xf32>
    %65 = arith.addf %43, %64 : vector<16x16xf32>
    %c27 = arith.constant 27 : index
    %66 = memref.load %arg3[%c27] : memref<48xf32, #tpu.memory_space<smem>>
    %67 = vector.broadcast %66 : f32 to vector<16x16xf32>
    %68 = arith.mulf %57, %67 : vector<16x16xf32>
    %69 = arith.addf %47, %68 : vector<16x16xf32>
    %c39 = arith.constant 39 : index
    %70 = memref.load %arg3[%c39] : memref<48xf32, #tpu.memory_space<smem>>
    %71 = vector.broadcast %70 : f32 to vector<16x16xf32>
    %72 = arith.mulf %57, %71 : vector<16x16xf32>
    %73 = arith.addf %51, %72 : vector<16x16xf32>
    %74 = vector.extract_strided_slice %56 {offsets = [1, 0], sizes = [16, 16], strides = [1, 1]} : vector<18x16xf32> to vector<16x16xf32>
    %c4 = arith.constant 4 : index
    %75 = memref.load %arg3[%c4] : memref<48xf32, #tpu.memory_space<smem>>
    %76 = vector.broadcast %75 : f32 to vector<16x16xf32>
    %77 = arith.mulf %74, %76 : vector<16x16xf32>
    %78 = arith.addf %61, %77 : vector<16x16xf32>
    %c16 = arith.constant 16 : index
    %79 = memref.load %arg3[%c16] : memref<48xf32, #tpu.memory_space<smem>>
    %80 = vector.broadcast %79 : f32 to vector<16x16xf32>
    %81 = arith.mulf %74, %80 : vector<16x16xf32>
    %82 = arith.addf %65, %81 : vector<16x16xf32>
    %c28 = arith.constant 28 : index
    %83 = memref.load %arg3[%c28] : memref<48xf32, #tpu.memory_space<smem>>
    %84 = vector.broadcast %83 : f32 to vector<16x16xf32>
    %85 = arith.mulf %74, %84 : vector<16x16xf32>
    %86 = arith.addf %69, %85 : vector<16x16xf32>
    %c40 = arith.constant 40 : index
    %87 = memref.load %arg3[%c40] : memref<48xf32, #tpu.memory_space<smem>>
    %88 = vector.broadcast %87 : f32 to vector<16x16xf32>
    %89 = arith.mulf %74, %88 : vector<16x16xf32>
    %90 = arith.addf %73, %89 : vector<16x16xf32>
    %91 = vector.extract_strided_slice %56 {offsets = [2, 0], sizes = [16, 16], strides = [1, 1]} : vector<18x16xf32> to vector<16x16xf32>
    %c5 = arith.constant 5 : index
    %92 = memref.load %arg3[%c5] : memref<48xf32, #tpu.memory_space<smem>>
    %93 = vector.broadcast %92 : f32 to vector<16x16xf32>
    %94 = arith.mulf %91, %93 : vector<16x16xf32>
    %95 = arith.addf %78, %94 : vector<16x16xf32>
    %c17 = arith.constant 17 : index
    %96 = memref.load %arg3[%c17] : memref<48xf32, #tpu.memory_space<smem>>
    %97 = vector.broadcast %96 : f32 to vector<16x16xf32>
    %98 = arith.mulf %91, %97 : vector<16x16xf32>
    %99 = arith.addf %82, %98 : vector<16x16xf32>
    %c29 = arith.constant 29 : index
    %100 = memref.load %arg3[%c29] : memref<48xf32, #tpu.memory_space<smem>>
    %101 = vector.broadcast %100 : f32 to vector<16x16xf32>
    %102 = arith.mulf %91, %101 : vector<16x16xf32>
    %103 = arith.addf %86, %102 : vector<16x16xf32>
    %c41 = arith.constant 41 : index
    %104 = memref.load %arg3[%c41] : memref<48xf32, #tpu.memory_space<smem>>
    %105 = vector.broadcast %104 : f32 to vector<16x16xf32>
    %106 = arith.mulf %91, %105 : vector<16x16xf32>
    %107 = arith.addf %90, %106 : vector<16x16xf32>
    %c0_11 = arith.constant 0 : index
    %c2_12 = arith.constant 2 : index
    %c0_13 = arith.constant 0 : index
    %c0_14 = arith.constant 0 : index
    %108 = vector.load %arg2[%c0_11, %c2_12, %c0_13, %c0_14] : memref<1x4x16x16xf32, #tpu.memory_space<vmem>>, vector<1x1x16x16xf32>
    %109 = vector.shape_cast %108 : vector<1x1x16x16xf32> to vector<16x16xf32>
    %cst_15 = arith.constant 0.000000e+00 : f32
    %110 = vector.broadcast %cst_15 : f32 to vector<1x16xf32>
    %cst_16 = arith.constant 0.000000e+00 : f32
    %111 = vector.broadcast %cst_16 : f32 to vector<1x16xf32>
    %112 = tpu.concatenate %110, %109, %111 in 0 : vector<1x16xf32>, vector<16x16xf32>, vector<1x16xf32> -> vector<18x16xf32>
    %113 = vector.extract_strided_slice %112 {offsets = [0, 0], sizes = [16, 16], strides = [1, 1]} : vector<18x16xf32> to vector<16x16xf32>
    %c6 = arith.constant 6 : index
    %114 = memref.load %arg3[%c6] : memref<48xf32, #tpu.memory_space<smem>>
    %115 = vector.broadcast %114 : f32 to vector<16x16xf32>
    %116 = arith.mulf %113, %115 : vector<16x16xf32>
    %117 = arith.addf %95, %116 : vector<16x16xf32>
    %c18 = arith.constant 18 : index
    %118 = memref.load %arg3[%c18] : memref<48xf32, #tpu.memory_space<smem>>
    %119 = vector.broadcast %118 : f32 to vector<16x16xf32>
    %120 = arith.mulf %113, %119 : vector<16x16xf32>
    %121 = arith.addf %99, %120 : vector<16x16xf32>
    %c30 = arith.constant 30 : index
    %122 = memref.load %arg3[%c30] : memref<48xf32, #tpu.memory_space<smem>>
    %123 = vector.broadcast %122 : f32 to vector<16x16xf32>
    %124 = arith.mulf %113, %123 : vector<16x16xf32>
    %125 = arith.addf %103, %124 : vector<16x16xf32>
    %c42 = arith.constant 42 : index
    %126 = memref.load %arg3[%c42] : memref<48xf32, #tpu.memory_space<smem>>
    %127 = vector.broadcast %126 : f32 to vector<16x16xf32>
    %128 = arith.mulf %113, %127 : vector<16x16xf32>
    %129 = arith.addf %107, %128 : vector<16x16xf32>
    %130 = vector.extract_strided_slice %112 {offsets = [1, 0], sizes = [16, 16], strides = [1, 1]} : vector<18x16xf32> to vector<16x16xf32>
    %c7 = arith.constant 7 : index
    %131 = memref.load %arg3[%c7] : memref<48xf32, #tpu.memory_space<smem>>
    %132 = vector.broadcast %131 : f32 to vector<16x16xf32>
    %133 = arith.mulf %130, %132 : vector<16x16xf32>
    %134 = arith.addf %117, %133 : vector<16x16xf32>
    %c19 = arith.constant 19 : index
    %135 = memref.load %arg3[%c19] : memref<48xf32, #tpu.memory_space<smem>>
    %136 = vector.broadcast %135 : f32 to vector<16x16xf32>
    %137 = arith.mulf %130, %136 : vector<16x16xf32>
    %138 = arith.addf %121, %137 : vector<16x16xf32>
    %c31 = arith.constant 31 : index
    %139 = memref.load %arg3[%c31] : memref<48xf32, #tpu.memory_space<smem>>
    %140 = vector.broadcast %139 : f32 to vector<16x16xf32>
    %141 = arith.mulf %130, %140 : vector<16x16xf32>
    %142 = arith.addf %125, %141 : vector<16x16xf32>
    %c43 = arith.constant 43 : index
    %143 = memref.load %arg3[%c43] : memref<48xf32, #tpu.memory_space<smem>>
    %144 = vector.broadcast %143 : f32 to vector<16x16xf32>
    %145 = arith.mulf %130, %144 : vector<16x16xf32>
    %146 = arith.addf %129, %145 : vector<16x16xf32>
    %147 = vector.extract_strided_slice %112 {offsets = [2, 0], sizes = [16, 16], strides = [1, 1]} : vector<18x16xf32> to vector<16x16xf32>
    %c8 = arith.constant 8 : index
    %148 = memref.load %arg3[%c8] : memref<48xf32, #tpu.memory_space<smem>>
    %149 = vector.broadcast %148 : f32 to vector<16x16xf32>
    %150 = arith.mulf %147, %149 : vector<16x16xf32>
    %151 = arith.addf %134, %150 : vector<16x16xf32>
    %c20 = arith.constant 20 : index
    %152 = memref.load %arg3[%c20] : memref<48xf32, #tpu.memory_space<smem>>
    %153 = vector.broadcast %152 : f32 to vector<16x16xf32>
    %154 = arith.mulf %147, %153 : vector<16x16xf32>
    %155 = arith.addf %138, %154 : vector<16x16xf32>
    %c32 = arith.constant 32 : index
    %156 = memref.load %arg3[%c32] : memref<48xf32, #tpu.memory_space<smem>>
    %157 = vector.broadcast %156 : f32 to vector<16x16xf32>
    %158 = arith.mulf %147, %157 : vector<16x16xf32>
    %159 = arith.addf %142, %158 : vector<16x16xf32>
    %c44 = arith.constant 44 : index
    %160 = memref.load %arg3[%c44] : memref<48xf32, #tpu.memory_space<smem>>
    %161 = vector.broadcast %160 : f32 to vector<16x16xf32>
    %162 = arith.mulf %147, %161 : vector<16x16xf32>
    %163 = arith.addf %146, %162 : vector<16x16xf32>
    %c0_17 = arith.constant 0 : index
    %c3_18 = arith.constant 3 : index
    %c0_19 = arith.constant 0 : index
    %c0_20 = arith.constant 0 : index
    %164 = vector.load %arg2[%c0_17, %c3_18, %c0_19, %c0_20] : memref<1x4x16x16xf32, #tpu.memory_space<vmem>>, vector<1x1x16x16xf32>
    %165 = vector.shape_cast %164 : vector<1x1x16x16xf32> to vector<16x16xf32>
    %cst_21 = arith.constant 0.000000e+00 : f32
    %166 = vector.broadcast %cst_21 : f32 to vector<1x16xf32>
    %cst_22 = arith.constant 0.000000e+00 : f32
    %167 = vector.broadcast %cst_22 : f32 to vector<1x16xf32>
    %168 = tpu.concatenate %166, %165, %167 in 0 : vector<1x16xf32>, vector<16x16xf32>, vector<1x16xf32> -> vector<18x16xf32>
    %169 = vector.extract_strided_slice %168 {offsets = [0, 0], sizes = [16, 16], strides = [1, 1]} : vector<18x16xf32> to vector<16x16xf32>
    %c9 = arith.constant 9 : index
    %170 = memref.load %arg3[%c9] : memref<48xf32, #tpu.memory_space<smem>>
    %171 = vector.broadcast %170 : f32 to vector<16x16xf32>
    %172 = arith.mulf %169, %171 : vector<16x16xf32>
    %173 = arith.addf %151, %172 : vector<16x16xf32>
    %c21 = arith.constant 21 : index
    %174 = memref.load %arg3[%c21] : memref<48xf32, #tpu.memory_space<smem>>
    %175 = vector.broadcast %174 : f32 to vector<16x16xf32>
    %176 = arith.mulf %169, %175 : vector<16x16xf32>
    %177 = arith.addf %155, %176 : vector<16x16xf32>
    %c33 = arith.constant 33 : index
    %178 = memref.load %arg3[%c33] : memref<48xf32, #tpu.memory_space<smem>>
    %179 = vector.broadcast %178 : f32 to vector<16x16xf32>
    %180 = arith.mulf %169, %179 : vector<16x16xf32>
    %181 = arith.addf %159, %180 : vector<16x16xf32>
    %c45 = arith.constant 45 : index
    %182 = memref.load %arg3[%c45] : memref<48xf32, #tpu.memory_space<smem>>
    %183 = vector.broadcast %182 : f32 to vector<16x16xf32>
    %184 = arith.mulf %169, %183 : vector<16x16xf32>
    %185 = arith.addf %163, %184 : vector<16x16xf32>
    %186 = vector.extract_strided_slice %168 {offsets = [1, 0], sizes = [16, 16], strides = [1, 1]} : vector<18x16xf32> to vector<16x16xf32>
    %c10 = arith.constant 10 : index
    %187 = memref.load %arg3[%c10] : memref<48xf32, #tpu.memory_space<smem>>
    %188 = vector.broadcast %187 : f32 to vector<16x16xf32>
    %189 = arith.mulf %186, %188 : vector<16x16xf32>
    %190 = arith.addf %173, %189 : vector<16x16xf32>
    %c22 = arith.constant 22 : index
    %191 = memref.load %arg3[%c22] : memref<48xf32, #tpu.memory_space<smem>>
    %192 = vector.broadcast %191 : f32 to vector<16x16xf32>
    %193 = arith.mulf %186, %192 : vector<16x16xf32>
    %194 = arith.addf %177, %193 : vector<16x16xf32>
    %c34 = arith.constant 34 : index
    %195 = memref.load %arg3[%c34] : memref<48xf32, #tpu.memory_space<smem>>
    %196 = vector.broadcast %195 : f32 to vector<16x16xf32>
    %197 = arith.mulf %186, %196 : vector<16x16xf32>
    %198 = arith.addf %181, %197 : vector<16x16xf32>
    %c46 = arith.constant 46 : index
    %199 = memref.load %arg3[%c46] : memref<48xf32, #tpu.memory_space<smem>>
    %200 = vector.broadcast %199 : f32 to vector<16x16xf32>
    %201 = arith.mulf %186, %200 : vector<16x16xf32>
    %202 = arith.addf %185, %201 : vector<16x16xf32>
    %203 = vector.extract_strided_slice %168 {offsets = [2, 0], sizes = [16, 16], strides = [1, 1]} : vector<18x16xf32> to vector<16x16xf32>
    %c11 = arith.constant 11 : index
    %204 = memref.load %arg3[%c11] : memref<48xf32, #tpu.memory_space<smem>>
    %205 = vector.broadcast %204 : f32 to vector<16x16xf32>
    %206 = arith.mulf %203, %205 : vector<16x16xf32>
    %207 = arith.addf %190, %206 : vector<16x16xf32>
    %c23 = arith.constant 23 : index
    %208 = memref.load %arg3[%c23] : memref<48xf32, #tpu.memory_space<smem>>
    %209 = vector.broadcast %208 : f32 to vector<16x16xf32>
    %210 = arith.mulf %203, %209 : vector<16x16xf32>
    %211 = arith.addf %194, %210 : vector<16x16xf32>
    %c35 = arith.constant 35 : index
    %212 = memref.load %arg3[%c35] : memref<48xf32, #tpu.memory_space<smem>>
    %213 = vector.broadcast %212 : f32 to vector<16x16xf32>
    %214 = arith.mulf %203, %213 : vector<16x16xf32>
    %215 = arith.addf %198, %214 : vector<16x16xf32>
    %c47 = arith.constant 47 : index
    %216 = memref.load %arg3[%c47] : memref<48xf32, #tpu.memory_space<smem>>
    %217 = vector.broadcast %216 : f32 to vector<16x16xf32>
    %218 = arith.mulf %203, %217 : vector<16x16xf32>
    %219 = arith.addf %202, %218 : vector<16x16xf32>
    %c0_23 = arith.constant 0 : index
    %220 = memref.load %arg4[%c0_23] : memref<4xf32, #tpu.memory_space<smem>>
    %221 = vector.broadcast %220 : f32 to vector<16x16xf32>
    %222 = arith.addf %207, %221 : vector<16x16xf32>
    %c0_24 = arith.constant 0 : index
    %c0_25 = arith.constant 0 : index
    %c0_26 = arith.constant 0 : index
    %c0_27 = arith.constant 0 : index
    %223 = vector.load %arg5[%c0_24, %c0_25, %c0_26, %c0_27] : memref<1x4x16x16xf32, #tpu.memory_space<vmem>>, vector<1x1x16x16xf32>
    %224 = vector.shape_cast %223 : vector<1x1x16x16xf32> to vector<16x16xf32>
    %225 = vector.shape_cast %222 : vector<16x16xf32> to vector<1x1x16x16xf32>
    tpu.vector_store %arg5[%c0_24, %c0_25, %c0_26, %c0_27], %225 {strides = array<i32>} : memref<1x4x16x16xf32, #tpu.memory_space<vmem>>, vector<1x1x16x16xf32>,
    %cst_28 = arith.constant dense<0.000000e+00> : vector<16xf32>
    %226 = vector.multi_reduction <add>, %222, %cst_28 [0] : vector<16x16xf32> to vector<16xf32>
    %227 = vector.shape_cast %226 : vector<16xf32> to vector<1x16xf32>
    %c0_29 = arith.constant 0 : index
    %c0_30 = arith.constant 0 : index
    %c0_31 = arith.constant 0 : index
    %c0_32 = arith.constant 0 : index
    %228 = vector.load %arg6[%c0_29, %c0_30, %c0_31, %c0_32] : memref<1x2x4x16xf32, #tpu.memory_space<vmem>>, vector<1x1x1x16xf32>
    %229 = vector.shape_cast %228 : vector<1x1x1x16xf32> to vector<1x16xf32>
    %230 = vector.shape_cast %227 : vector<1x16xf32> to vector<1x1x1x16xf32>
    tpu.vector_store %arg6[%c0_29, %c0_30, %c0_31, %c0_32], %230 {strides = array<i32>} : memref<1x2x4x16xf32, #tpu.memory_space<vmem>>, vector<1x1x1x16xf32>,
    %231 = arith.mulf %222, %222 : vector<16x16xf32>
    %cst_33 = arith.constant dense<0.000000e+00> : vector<16xf32>
    %232 = vector.multi_reduction <add>, %231, %cst_33 [0] : vector<16x16xf32> to vector<16xf32>
    %233 = vector.shape_cast %232 : vector<16xf32> to vector<1x16xf32>
    %c0_34 = arith.constant 0 : index
    %c1_35 = arith.constant 1 : index
    %c0_36 = arith.constant 0 : index
    %c0_37 = arith.constant 0 : index
    %234 = vector.load %arg6[%c0_34, %c1_35, %c0_36, %c0_37] : memref<1x2x4x16xf32, #tpu.memory_space<vmem>>, vector<1x1x1x16xf32>
    %235 = vector.shape_cast %234 : vector<1x1x1x16xf32> to vector<1x16xf32>
    %236 = vector.shape_cast %233 : vector<1x16xf32> to vector<1x1x1x16xf32>
    tpu.vector_store %arg6[%c0_34, %c1_35, %c0_36, %c0_37], %236 {strides = array<i32>} : memref<1x2x4x16xf32, #tpu.memory_space<vmem>>, vector<1x1x1x16xf32>,
    %c1_38 = arith.constant 1 : index
    %237 = memref.load %arg4[%c1_38] : memref<4xf32, #tpu.memory_space<smem>>
    %238 = vector.broadcast %237 : f32 to vector<16x16xf32>
    %239 = arith.addf %211, %238 : vector<16x16xf32>
    %c0_39 = arith.constant 0 : index
    %c1_40 = arith.constant 1 : index
    %c0_41 = arith.constant 0 : index
    %c0_42 = arith.constant 0 : index
    %240 = vector.load %arg5[%c0_39, %c1_40, %c0_41, %c0_42] : memref<1x4x16x16xf32, #tpu.memory_space<vmem>>, vector<1x1x16x16xf32>
    %241 = vector.shape_cast %240 : vector<1x1x16x16xf32> to vector<16x16xf32>
    %242 = vector.shape_cast %239 : vector<16x16xf32> to vector<1x1x16x16xf32>
    tpu.vector_store %arg5[%c0_39, %c1_40, %c0_41, %c0_42], %242 {strides = array<i32>} : memref<1x4x16x16xf32, #tpu.memory_space<vmem>>, vector<1x1x16x16xf32>,
    %cst_43 = arith.constant dense<0.000000e+00> : vector<16xf32>
    %243 = vector.multi_reduction <add>, %239, %cst_43 [0] : vector<16x16xf32> to vector<16xf32>
    %244 = vector.shape_cast %243 : vector<16xf32> to vector<1x16xf32>
    %c0_44 = arith.constant 0 : index
    %c0_45 = arith.constant 0 : index
    %c1_46 = arith.constant 1 : index
    %c0_47 = arith.constant 0 : index
    %245 = vector.load %arg6[%c0_44, %c0_45, %c1_46, %c0_47] : memref<1x2x4x16xf32, #tpu.memory_space<vmem>>, vector<1x1x1x16xf32>
    %246 = vector.shape_cast %245 : vector<1x1x1x16xf32> to vector<1x16xf32>
    %247 = vector.shape_cast %244 : vector<1x16xf32> to vector<1x1x1x16xf32>
    tpu.vector_store %arg6[%c0_44, %c0_45, %c1_46, %c0_47], %247 {strides = array<i32>} : memref<1x2x4x16xf32, #tpu.memory_space<vmem>>, vector<1x1x1x16xf32>,
    %248 = arith.mulf %239, %239 : vector<16x16xf32>
    %cst_48 = arith.constant dense<0.000000e+00> : vector<16xf32>
    %249 = vector.multi_reduction <add>, %248, %cst_48 [0] : vector<16x16xf32> to vector<16xf32>
    %250 = vector.shape_cast %249 : vector<16xf32> to vector<1x16xf32>
    %c0_49 = arith.constant 0 : index
    %c1_50 = arith.constant 1 : index
    %c1_51 = arith.constant 1 : index
    %c0_52 = arith.constant 0 : index
    %251 = vector.load %arg6[%c0_49, %c1_50, %c1_51, %c0_52] : memref<1x2x4x16xf32, #tpu.memory_space<vmem>>, vector<1x1x1x16xf32>
    %252 = vector.shape_cast %251 : vector<1x1x1x16xf32> to vector<1x16xf32>
    %253 = vector.shape_cast %250 : vector<1x16xf32> to vector<1x1x1x16xf32>
    tpu.vector_store %arg6[%c0_49, %c1_50, %c1_51, %c0_52], %253 {strides = array<i32>} : memref<1x2x4x16xf32, #tpu.memory_space<vmem>>, vector<1x1x1x16xf32>,
    %c2_53 = arith.constant 2 : index
    %254 = memref.load %arg4[%c2_53] : memref<4xf32, #tpu.memory_space<smem>>
    %255 = vector.broadcast %254 : f32 to vector<16x16xf32>
    %256 = arith.addf %215, %255 : vector<16x16xf32>
    %c0_54 = arith.constant 0 : index
    %c2_55 = arith.constant 2 : index
    %c0_56 = arith.constant 0 : index
    %c0_57 = arith.constant 0 : index
    %257 = vector.load %arg5[%c0_54, %c2_55, %c0_56, %c0_57] : memref<1x4x16x16xf32, #tpu.memory_space<vmem>>, vector<1x1x16x16xf32>
    %258 = vector.shape_cast %257 : vector<1x1x16x16xf32> to vector<16x16xf32>
    %259 = vector.shape_cast %256 : vector<16x16xf32> to vector<1x1x16x16xf32>
    tpu.vector_store %arg5[%c0_54, %c2_55, %c0_56, %c0_57], %259 {strides = array<i32>} : memref<1x4x16x16xf32, #tpu.memory_space<vmem>>, vector<1x1x16x16xf32>,
    %cst_58 = arith.constant dense<0.000000e+00> : vector<16xf32>
    %260 = vector.multi_reduction <add>, %256, %cst_58 [0] : vector<16x16xf32> to vector<16xf32>
    %261 = vector.shape_cast %260 : vector<16xf32> to vector<1x16xf32>
    %c0_59 = arith.constant 0 : index
    %c0_60 = arith.constant 0 : index
    %c2_61 = arith.constant 2 : index
    %c0_62 = arith.constant 0 : index
    %262 = vector.load %arg6[%c0_59, %c0_60, %c2_61, %c0_62] : memref<1x2x4x16xf32, #tpu.memory_space<vmem>>, vector<1x1x1x16xf32>
    %263 = vector.shape_cast %262 : vector<1x1x1x16xf32> to vector<1x16xf32>
    %264 = vector.shape_cast %261 : vector<1x16xf32> to vector<1x1x1x16xf32>
    tpu.vector_store %arg6[%c0_59, %c0_60, %c2_61, %c0_62], %264 {strides = array<i32>} : memref<1x2x4x16xf32, #tpu.memory_space<vmem>>, vector<1x1x1x16xf32>,
    %265 = arith.mulf %256, %256 : vector<16x16xf32>
    %cst_63 = arith.constant dense<0.000000e+00> : vector<16xf32>
    %266 = vector.multi_reduction <add>, %265, %cst_63 [0] : vector<16x16xf32> to vector<16xf32>
    %267 = vector.shape_cast %266 : vector<16xf32> to vector<1x16xf32>
    %c0_64 = arith.constant 0 : index
    %c1_65 = arith.constant 1 : index
    %c2_66 = arith.constant 2 : index
    %c0_67 = arith.constant 0 : index
    %268 = vector.load %arg6[%c0_64, %c1_65, %c2_66, %c0_67] : memref<1x2x4x16xf32, #tpu.memory_space<vmem>>, vector<1x1x1x16xf32>
    %269 = vector.shape_cast %268 : vector<1x1x1x16xf32> to vector<1x16xf32>
    %270 = vector.shape_cast %267 : vector<1x16xf32> to vector<1x1x1x16xf32>
    tpu.vector_store %arg6[%c0_64, %c1_65, %c2_66, %c0_67], %270 {strides = array<i32>} : memref<1x2x4x16xf32, #tpu.memory_space<vmem>>, vector<1x1x1x16xf32>,
    %c3_68 = arith.constant 3 : index
    %271 = memref.load %arg4[%c3_68] : memref<4xf32, #tpu.memory_space<smem>>
    %272 = vector.broadcast %271 : f32 to vector<16x16xf32>
    %273 = arith.addf %219, %272 : vector<16x16xf32>
    %c0_69 = arith.constant 0 : index
    %c3_70 = arith.constant 3 : index
    %c0_71 = arith.constant 0 : index
    %c0_72 = arith.constant 0 : index
    %274 = vector.load %arg5[%c0_69, %c3_70, %c0_71, %c0_72] : memref<1x4x16x16xf32, #tpu.memory_space<vmem>>, vector<1x1x16x16xf32>
    %275 = vector.shape_cast %274 : vector<1x1x16x16xf32> to vector<16x16xf32>
    %276 = vector.shape_cast %273 : vector<16x16xf32> to vector<1x1x16x16xf32>
    tpu.vector_store %arg5[%c0_69, %c3_70, %c0_71, %c0_72], %276 {strides = array<i32>} : memref<1x4x16x16xf32, #tpu.memory_space<vmem>>, vector<1x1x16x16xf32>,
    %cst_73 = arith.constant dense<0.000000e+00> : vector<16xf32>
    %277 = vector.multi_reduction <add>, %273, %cst_73 [0] : vector<16x16xf32> to vector<16xf32>
    %278 = vector.shape_cast %277 : vector<16xf32> to vector<1x16xf32>
    %c0_74 = arith.constant 0 : index
    %c0_75 = arith.constant 0 : index
    %c3_76 = arith.constant 3 : index
    %c0_77 = arith.constant 0 : index
    %279 = vector.load %arg6[%c0_74, %c0_75, %c3_76, %c0_77] : memref<1x2x4x16xf32, #tpu.memory_space<vmem>>, vector<1x1x1x16xf32>
    %280 = vector.shape_cast %279 : vector<1x1x1x16xf32> to vector<1x16xf32>
    %281 = vector.shape_cast %278 : vector<1x16xf32> to vector<1x1x1x16xf32>
    tpu.vector_store %arg6[%c0_74, %c0_75, %c3_76, %c0_77], %281 {strides = array<i32>} : memref<1x2x4x16xf32, #tpu.memory_space<vmem>>, vector<1x1x1x16xf32>,
    %282 = arith.mulf %273, %273 : vector<16x16xf32>
    %cst_78 = arith.constant dense<0.000000e+00> : vector<16xf32>
    %283 = vector.multi_reduction <add>, %282, %cst_78 [0] : vector<16x16xf32> to vector<16xf32>
    %284 = vector.shape_cast %283 : vector<16xf32> to vector<1x16xf32>
    %c0_79 = arith.constant 0 : index
    %c1_80 = arith.constant 1 : index
    %c3_81 = arith.constant 3 : index
    %c0_82 = arith.constant 0 : index
    %285 = vector.load %arg6[%c0_79, %c1_80, %c3_81, %c0_82] : memref<1x2x4x16xf32, #tpu.memory_space<vmem>>, vector<1x1x1x16xf32>
    %286 = vector.shape_cast %285 : vector<1x1x1x16xf32> to vector<1x16xf32>
    %287 = vector.shape_cast %284 : vector<1x16xf32> to vector<1x1x1x16xf32>
    tpu.vector_store %arg6[%c0_79, %c1_80, %c3_81, %c0_82], %287 {strides = array<i32>} : memref<1x2x4x16xf32, #tpu.memory_space<vmem>>, vector<1x1x1x16xf32>,
    return
  }
  func.func @transform_0(%arg0: i32, %arg1: i32) -> (i32, i32, i32, i32) {
    %c0_i32 = arith.constant 0 : i32
    %c0_i32_0 = arith.constant 0 : i32
    %c0_i32_1 = arith.constant 0 : i32
    return %arg0, %c0_i32, %c0_i32_0, %arg1 : i32, i32, i32, i32
  }
  func.func @transform_1(%arg0: i32, %arg1: i32) -> i32 {
    %c0_i32 = arith.constant 0 : i32
    %c0_i32_0 = arith.constant 0 : i32
    return %c0_i32 : i32
  }
  func.func @transform_2(%arg0: i32, %arg1: i32) -> i32 {
    %c0_i32 = arith.constant 0 : i32
    %c0_i32_0 = arith.constant 0 : i32
    return %c0_i32 : i32
  }
  func.func @transform_3(%arg0: i32, %arg1: i32) -> (i32, i32, i32, i32) {
    %c0_i32 = arith.constant 0 : i32
    %c0_i32_0 = arith.constant 0 : i32
    %c0_i32_1 = arith.constant 0 : i32
    return %arg0, %c0_i32, %c0_i32_0, %arg1 : i32, i32, i32, i32
  }
  func.func @transform_4(%arg0: i32, %arg1: i32) -> (i32, i32, i32, i32) {
    %c1_i32 = arith.constant 1 : i32
    %0 = arith.muli %arg0, %c1_i32 : i32
    %1 = arith.addi %0, %arg1 : i32
    %c0_i32 = arith.constant 0 : i32
    %c0_i32_0 = arith.constant 0 : i32
    %c0_i32_1 = arith.constant 0 : i32
    %c0_i32_2 = arith.constant 0 : i32
    return %1, %c0_i32, %c0_i32_0, %c0_i32_1 : i32, i32, i32, i32
  }
}

module attributes {stable_mosaic.version = 11 : i64} {
  func.func @_conv_bn_fused_kernel(%arg0: i32, %arg1: i32, %arg2: memref<1x4x16x16xf32, #tpu.memory_space<vmem>>, %arg3: memref<48xf32, #tpu.memory_space<smem>>, %arg4: memref<4xf32, #tpu.memory_space<smem>>, %arg5: memref<4xf32, #tpu.memory_space<smem>>, %arg6: memref<4xf32, #tpu.memory_space<smem>>, %arg7: memref<1x4x16x16xf32, #tpu.memory_space<vmem>>, %arg8: memref<1x2x4x16xf32, #tpu.memory_space<vmem>>) attributes {dimension_semantics = [#tpu.dimension_semantics<parallel>, #tpu.dimension_semantics<parallel>], iteration_bounds = array<i64: 2, 1>, scalar_prefetch = 0 : i64, scratch_operands = 0 : i64, tpu.core_type = #tpu.core_type<tc>, window_params = [{transform_indices = @transform_0, window_bounds = array<i64: 1, 4, 16, 16>}, {transform_indices = @transform_1, window_bounds = array<i64: 48>}, {transform_indices = @transform_2, window_bounds = array<i64: 4>}, {transform_indices = @transform_3, window_bounds = array<i64: 4>}, {transform_indices = @transform_4, window_bounds = array<i64: 4>}, {transform_indices = @transform_5, window_bounds = array<i64: 1, 4, 16, 16>}, {transform_indices = @transform_6, window_bounds = array<i64: 1, 2, 4, 16>}]} {
    %c0 = arith.constant 0 : index
    %c0_0 = arith.constant 0 : index
    %c0_1 = arith.constant 0 : index
    %c0_2 = arith.constant 0 : index
    %0 = vector.load %arg2[%c0, %c0_0, %c0_1, %c0_2] : memref<1x4x16x16xf32, #tpu.memory_space<vmem>>, vector<1x1x16x16xf32>
    %1 = vector.shape_cast %0 : vector<1x1x16x16xf32> to vector<16x16xf32>
    %c0_3 = arith.constant 0 : index
    %2 = memref.load %arg5[%c0_3] : memref<4xf32, #tpu.memory_space<smem>>
    %3 = vector.broadcast %2 : f32 to vector<16x16xf32>
    %4 = arith.mulf %1, %3 : vector<16x16xf32>
    %c0_4 = arith.constant 0 : index
    %5 = memref.load %arg6[%c0_4] : memref<4xf32, #tpu.memory_space<smem>>
    %6 = vector.broadcast %5 : f32 to vector<16x16xf32>
    %7 = arith.addf %4, %6 : vector<16x16xf32>
    %cst = arith.constant 0.000000e+00 : f32
    %8 = vector.broadcast %cst : f32 to vector<16x1xf32>
    %cst_5 = arith.constant 0.000000e+00 : f32
    %9 = vector.broadcast %cst_5 : f32 to vector<16x1xf32>
    %10 = tpu.concatenate %8, %7, %9 in 1 : vector<16x1xf32>, vector<16x16xf32>, vector<16x1xf32> -> vector<16x18xf32>
    %11 = vector.extract_strided_slice %10 {offsets = [0, 0], sizes = [16, 16], strides = [1, 1]} : vector<16x18xf32> to vector<16x16xf32>
    %c0_6 = arith.constant 0 : index
    %12 = memref.load %arg3[%c0_6] : memref<48xf32, #tpu.memory_space<smem>>
    %13 = vector.broadcast %12 : f32 to vector<16x16xf32>
    %14 = arith.mulf %11, %13 : vector<16x16xf32>
    %c12 = arith.constant 12 : index
    %15 = memref.load %arg3[%c12] : memref<48xf32, #tpu.memory_space<smem>>
    %16 = vector.broadcast %15 : f32 to vector<16x16xf32>
    %17 = arith.mulf %11, %16 : vector<16x16xf32>
    %c24 = arith.constant 24 : index
    %18 = memref.load %arg3[%c24] : memref<48xf32, #tpu.memory_space<smem>>
    %19 = vector.broadcast %18 : f32 to vector<16x16xf32>
    %20 = arith.mulf %11, %19 : vector<16x16xf32>
    %c36 = arith.constant 36 : index
    %21 = memref.load %arg3[%c36] : memref<48xf32, #tpu.memory_space<smem>>
    %22 = vector.broadcast %21 : f32 to vector<16x16xf32>
    %23 = arith.mulf %11, %22 : vector<16x16xf32>
    %24 = vector.extract_strided_slice %10 {offsets = [0, 1], sizes = [16, 16], strides = [1, 1]} : vector<16x18xf32> to vector<16x16xf32>
    %c1 = arith.constant 1 : index
    %25 = memref.load %arg3[%c1] : memref<48xf32, #tpu.memory_space<smem>>
    %26 = vector.broadcast %25 : f32 to vector<16x16xf32>
    %27 = arith.mulf %24, %26 : vector<16x16xf32>
    %28 = arith.addf %14, %27 : vector<16x16xf32>
    %c13 = arith.constant 13 : index
    %29 = memref.load %arg3[%c13] : memref<48xf32, #tpu.memory_space<smem>>
    %30 = vector.broadcast %29 : f32 to vector<16x16xf32>
    %31 = arith.mulf %24, %30 : vector<16x16xf32>
    %32 = arith.addf %17, %31 : vector<16x16xf32>
    %c25 = arith.constant 25 : index
    %33 = memref.load %arg3[%c25] : memref<48xf32, #tpu.memory_space<smem>>
    %34 = vector.broadcast %33 : f32 to vector<16x16xf32>
    %35 = arith.mulf %24, %34 : vector<16x16xf32>
    %36 = arith.addf %20, %35 : vector<16x16xf32>
    %c37 = arith.constant 37 : index
    %37 = memref.load %arg3[%c37] : memref<48xf32, #tpu.memory_space<smem>>
    %38 = vector.broadcast %37 : f32 to vector<16x16xf32>
    %39 = arith.mulf %24, %38 : vector<16x16xf32>
    %40 = arith.addf %23, %39 : vector<16x16xf32>
    %41 = vector.extract_strided_slice %10 {offsets = [0, 2], sizes = [16, 16], strides = [1, 1]} : vector<16x18xf32> to vector<16x16xf32>
    %c2 = arith.constant 2 : index
    %42 = memref.load %arg3[%c2] : memref<48xf32, #tpu.memory_space<smem>>
    %43 = vector.broadcast %42 : f32 to vector<16x16xf32>
    %44 = arith.mulf %41, %43 : vector<16x16xf32>
    %45 = arith.addf %28, %44 : vector<16x16xf32>
    %c14 = arith.constant 14 : index
    %46 = memref.load %arg3[%c14] : memref<48xf32, #tpu.memory_space<smem>>
    %47 = vector.broadcast %46 : f32 to vector<16x16xf32>
    %48 = arith.mulf %41, %47 : vector<16x16xf32>
    %49 = arith.addf %32, %48 : vector<16x16xf32>
    %c26 = arith.constant 26 : index
    %50 = memref.load %arg3[%c26] : memref<48xf32, #tpu.memory_space<smem>>
    %51 = vector.broadcast %50 : f32 to vector<16x16xf32>
    %52 = arith.mulf %41, %51 : vector<16x16xf32>
    %53 = arith.addf %36, %52 : vector<16x16xf32>
    %c38 = arith.constant 38 : index
    %54 = memref.load %arg3[%c38] : memref<48xf32, #tpu.memory_space<smem>>
    %55 = vector.broadcast %54 : f32 to vector<16x16xf32>
    %56 = arith.mulf %41, %55 : vector<16x16xf32>
    %57 = arith.addf %40, %56 : vector<16x16xf32>
    %c0_7 = arith.constant 0 : index
    %c1_8 = arith.constant 1 : index
    %c0_9 = arith.constant 0 : index
    %c0_10 = arith.constant 0 : index
    %58 = vector.load %arg2[%c0_7, %c1_8, %c0_9, %c0_10] : memref<1x4x16x16xf32, #tpu.memory_space<vmem>>, vector<1x1x16x16xf32>
    %59 = vector.shape_cast %58 : vector<1x1x16x16xf32> to vector<16x16xf32>
    %c1_11 = arith.constant 1 : index
    %60 = memref.load %arg5[%c1_11] : memref<4xf32, #tpu.memory_space<smem>>
    %61 = vector.broadcast %60 : f32 to vector<16x16xf32>
    %62 = arith.mulf %59, %61 : vector<16x16xf32>
    %c1_12 = arith.constant 1 : index
    %63 = memref.load %arg6[%c1_12] : memref<4xf32, #tpu.memory_space<smem>>
    %64 = vector.broadcast %63 : f32 to vector<16x16xf32>
    %65 = arith.addf %62, %64 : vector<16x16xf32>
    %cst_13 = arith.constant 0.000000e+00 : f32
    %66 = vector.broadcast %cst_13 : f32 to vector<16x1xf32>
    %cst_14 = arith.constant 0.000000e+00 : f32
    %67 = vector.broadcast %cst_14 : f32 to vector<16x1xf32>
    %68 = tpu.concatenate %66, %65, %67 in 1 : vector<16x1xf32>, vector<16x16xf32>, vector<16x1xf32> -> vector<16x18xf32>
    %69 = vector.extract_strided_slice %68 {offsets = [0, 0], sizes = [16, 16], strides = [1, 1]} : vector<16x18xf32> to vector<16x16xf32>
    %c3 = arith.constant 3 : index
    %70 = memref.load %arg3[%c3] : memref<48xf32, #tpu.memory_space<smem>>
    %71 = vector.broadcast %70 : f32 to vector<16x16xf32>
    %72 = arith.mulf %69, %71 : vector<16x16xf32>
    %73 = arith.addf %45, %72 : vector<16x16xf32>
    %c15 = arith.constant 15 : index
    %74 = memref.load %arg3[%c15] : memref<48xf32, #tpu.memory_space<smem>>
    %75 = vector.broadcast %74 : f32 to vector<16x16xf32>
    %76 = arith.mulf %69, %75 : vector<16x16xf32>
    %77 = arith.addf %49, %76 : vector<16x16xf32>
    %c27 = arith.constant 27 : index
    %78 = memref.load %arg3[%c27] : memref<48xf32, #tpu.memory_space<smem>>
    %79 = vector.broadcast %78 : f32 to vector<16x16xf32>
    %80 = arith.mulf %69, %79 : vector<16x16xf32>
    %81 = arith.addf %53, %80 : vector<16x16xf32>
    %c39 = arith.constant 39 : index
    %82 = memref.load %arg3[%c39] : memref<48xf32, #tpu.memory_space<smem>>
    %83 = vector.broadcast %82 : f32 to vector<16x16xf32>
    %84 = arith.mulf %69, %83 : vector<16x16xf32>
    %85 = arith.addf %57, %84 : vector<16x16xf32>
    %86 = vector.extract_strided_slice %68 {offsets = [0, 1], sizes = [16, 16], strides = [1, 1]} : vector<16x18xf32> to vector<16x16xf32>
    %c4 = arith.constant 4 : index
    %87 = memref.load %arg3[%c4] : memref<48xf32, #tpu.memory_space<smem>>
    %88 = vector.broadcast %87 : f32 to vector<16x16xf32>
    %89 = arith.mulf %86, %88 : vector<16x16xf32>
    %90 = arith.addf %73, %89 : vector<16x16xf32>
    %c16 = arith.constant 16 : index
    %91 = memref.load %arg3[%c16] : memref<48xf32, #tpu.memory_space<smem>>
    %92 = vector.broadcast %91 : f32 to vector<16x16xf32>
    %93 = arith.mulf %86, %92 : vector<16x16xf32>
    %94 = arith.addf %77, %93 : vector<16x16xf32>
    %c28 = arith.constant 28 : index
    %95 = memref.load %arg3[%c28] : memref<48xf32, #tpu.memory_space<smem>>
    %96 = vector.broadcast %95 : f32 to vector<16x16xf32>
    %97 = arith.mulf %86, %96 : vector<16x16xf32>
    %98 = arith.addf %81, %97 : vector<16x16xf32>
    %c40 = arith.constant 40 : index
    %99 = memref.load %arg3[%c40] : memref<48xf32, #tpu.memory_space<smem>>
    %100 = vector.broadcast %99 : f32 to vector<16x16xf32>
    %101 = arith.mulf %86, %100 : vector<16x16xf32>
    %102 = arith.addf %85, %101 : vector<16x16xf32>
    %103 = vector.extract_strided_slice %68 {offsets = [0, 2], sizes = [16, 16], strides = [1, 1]} : vector<16x18xf32> to vector<16x16xf32>
    %c5 = arith.constant 5 : index
    %104 = memref.load %arg3[%c5] : memref<48xf32, #tpu.memory_space<smem>>
    %105 = vector.broadcast %104 : f32 to vector<16x16xf32>
    %106 = arith.mulf %103, %105 : vector<16x16xf32>
    %107 = arith.addf %90, %106 : vector<16x16xf32>
    %c17 = arith.constant 17 : index
    %108 = memref.load %arg3[%c17] : memref<48xf32, #tpu.memory_space<smem>>
    %109 = vector.broadcast %108 : f32 to vector<16x16xf32>
    %110 = arith.mulf %103, %109 : vector<16x16xf32>
    %111 = arith.addf %94, %110 : vector<16x16xf32>
    %c29 = arith.constant 29 : index
    %112 = memref.load %arg3[%c29] : memref<48xf32, #tpu.memory_space<smem>>
    %113 = vector.broadcast %112 : f32 to vector<16x16xf32>
    %114 = arith.mulf %103, %113 : vector<16x16xf32>
    %115 = arith.addf %98, %114 : vector<16x16xf32>
    %c41 = arith.constant 41 : index
    %116 = memref.load %arg3[%c41] : memref<48xf32, #tpu.memory_space<smem>>
    %117 = vector.broadcast %116 : f32 to vector<16x16xf32>
    %118 = arith.mulf %103, %117 : vector<16x16xf32>
    %119 = arith.addf %102, %118 : vector<16x16xf32>
    %c0_15 = arith.constant 0 : index
    %c2_16 = arith.constant 2 : index
    %c0_17 = arith.constant 0 : index
    %c0_18 = arith.constant 0 : index
    %120 = vector.load %arg2[%c0_15, %c2_16, %c0_17, %c0_18] : memref<1x4x16x16xf32, #tpu.memory_space<vmem>>, vector<1x1x16x16xf32>
    %121 = vector.shape_cast %120 : vector<1x1x16x16xf32> to vector<16x16xf32>
    %c2_19 = arith.constant 2 : index
    %122 = memref.load %arg5[%c2_19] : memref<4xf32, #tpu.memory_space<smem>>
    %123 = vector.broadcast %122 : f32 to vector<16x16xf32>
    %124 = arith.mulf %121, %123 : vector<16x16xf32>
    %c2_20 = arith.constant 2 : index
    %125 = memref.load %arg6[%c2_20] : memref<4xf32, #tpu.memory_space<smem>>
    %126 = vector.broadcast %125 : f32 to vector<16x16xf32>
    %127 = arith.addf %124, %126 : vector<16x16xf32>
    %cst_21 = arith.constant 0.000000e+00 : f32
    %128 = vector.broadcast %cst_21 : f32 to vector<16x1xf32>
    %cst_22 = arith.constant 0.000000e+00 : f32
    %129 = vector.broadcast %cst_22 : f32 to vector<16x1xf32>
    %130 = tpu.concatenate %128, %127, %129 in 1 : vector<16x1xf32>, vector<16x16xf32>, vector<16x1xf32> -> vector<16x18xf32>
    %131 = vector.extract_strided_slice %130 {offsets = [0, 0], sizes = [16, 16], strides = [1, 1]} : vector<16x18xf32> to vector<16x16xf32>
    %c6 = arith.constant 6 : index
    %132 = memref.load %arg3[%c6] : memref<48xf32, #tpu.memory_space<smem>>
    %133 = vector.broadcast %132 : f32 to vector<16x16xf32>
    %134 = arith.mulf %131, %133 : vector<16x16xf32>
    %135 = arith.addf %107, %134 : vector<16x16xf32>
    %c18 = arith.constant 18 : index
    %136 = memref.load %arg3[%c18] : memref<48xf32, #tpu.memory_space<smem>>
    %137 = vector.broadcast %136 : f32 to vector<16x16xf32>
    %138 = arith.mulf %131, %137 : vector<16x16xf32>
    %139 = arith.addf %111, %138 : vector<16x16xf32>
    %c30 = arith.constant 30 : index
    %140 = memref.load %arg3[%c30] : memref<48xf32, #tpu.memory_space<smem>>
    %141 = vector.broadcast %140 : f32 to vector<16x16xf32>
    %142 = arith.mulf %131, %141 : vector<16x16xf32>
    %143 = arith.addf %115, %142 : vector<16x16xf32>
    %c42 = arith.constant 42 : index
    %144 = memref.load %arg3[%c42] : memref<48xf32, #tpu.memory_space<smem>>
    %145 = vector.broadcast %144 : f32 to vector<16x16xf32>
    %146 = arith.mulf %131, %145 : vector<16x16xf32>
    %147 = arith.addf %119, %146 : vector<16x16xf32>
    %148 = vector.extract_strided_slice %130 {offsets = [0, 1], sizes = [16, 16], strides = [1, 1]} : vector<16x18xf32> to vector<16x16xf32>
    %c7 = arith.constant 7 : index
    %149 = memref.load %arg3[%c7] : memref<48xf32, #tpu.memory_space<smem>>
    %150 = vector.broadcast %149 : f32 to vector<16x16xf32>
    %151 = arith.mulf %148, %150 : vector<16x16xf32>
    %152 = arith.addf %135, %151 : vector<16x16xf32>
    %c19 = arith.constant 19 : index
    %153 = memref.load %arg3[%c19] : memref<48xf32, #tpu.memory_space<smem>>
    %154 = vector.broadcast %153 : f32 to vector<16x16xf32>
    %155 = arith.mulf %148, %154 : vector<16x16xf32>
    %156 = arith.addf %139, %155 : vector<16x16xf32>
    %c31 = arith.constant 31 : index
    %157 = memref.load %arg3[%c31] : memref<48xf32, #tpu.memory_space<smem>>
    %158 = vector.broadcast %157 : f32 to vector<16x16xf32>
    %159 = arith.mulf %148, %158 : vector<16x16xf32>
    %160 = arith.addf %143, %159 : vector<16x16xf32>
    %c43 = arith.constant 43 : index
    %161 = memref.load %arg3[%c43] : memref<48xf32, #tpu.memory_space<smem>>
    %162 = vector.broadcast %161 : f32 to vector<16x16xf32>
    %163 = arith.mulf %148, %162 : vector<16x16xf32>
    %164 = arith.addf %147, %163 : vector<16x16xf32>
    %165 = vector.extract_strided_slice %130 {offsets = [0, 2], sizes = [16, 16], strides = [1, 1]} : vector<16x18xf32> to vector<16x16xf32>
    %c8 = arith.constant 8 : index
    %166 = memref.load %arg3[%c8] : memref<48xf32, #tpu.memory_space<smem>>
    %167 = vector.broadcast %166 : f32 to vector<16x16xf32>
    %168 = arith.mulf %165, %167 : vector<16x16xf32>
    %169 = arith.addf %152, %168 : vector<16x16xf32>
    %c20 = arith.constant 20 : index
    %170 = memref.load %arg3[%c20] : memref<48xf32, #tpu.memory_space<smem>>
    %171 = vector.broadcast %170 : f32 to vector<16x16xf32>
    %172 = arith.mulf %165, %171 : vector<16x16xf32>
    %173 = arith.addf %156, %172 : vector<16x16xf32>
    %c32 = arith.constant 32 : index
    %174 = memref.load %arg3[%c32] : memref<48xf32, #tpu.memory_space<smem>>
    %175 = vector.broadcast %174 : f32 to vector<16x16xf32>
    %176 = arith.mulf %165, %175 : vector<16x16xf32>
    %177 = arith.addf %160, %176 : vector<16x16xf32>
    %c44 = arith.constant 44 : index
    %178 = memref.load %arg3[%c44] : memref<48xf32, #tpu.memory_space<smem>>
    %179 = vector.broadcast %178 : f32 to vector<16x16xf32>
    %180 = arith.mulf %165, %179 : vector<16x16xf32>
    %181 = arith.addf %164, %180 : vector<16x16xf32>
    %c0_23 = arith.constant 0 : index
    %c3_24 = arith.constant 3 : index
    %c0_25 = arith.constant 0 : index
    %c0_26 = arith.constant 0 : index
    %182 = vector.load %arg2[%c0_23, %c3_24, %c0_25, %c0_26] : memref<1x4x16x16xf32, #tpu.memory_space<vmem>>, vector<1x1x16x16xf32>
    %183 = vector.shape_cast %182 : vector<1x1x16x16xf32> to vector<16x16xf32>
    %c3_27 = arith.constant 3 : index
    %184 = memref.load %arg5[%c3_27] : memref<4xf32, #tpu.memory_space<smem>>
    %185 = vector.broadcast %184 : f32 to vector<16x16xf32>
    %186 = arith.mulf %183, %185 : vector<16x16xf32>
    %c3_28 = arith.constant 3 : index
    %187 = memref.load %arg6[%c3_28] : memref<4xf32, #tpu.memory_space<smem>>
    %188 = vector.broadcast %187 : f32 to vector<16x16xf32>
    %189 = arith.addf %186, %188 : vector<16x16xf32>
    %cst_29 = arith.constant 0.000000e+00 : f32
    %190 = vector.broadcast %cst_29 : f32 to vector<16x1xf32>
    %cst_30 = arith.constant 0.000000e+00 : f32
    %191 = vector.broadcast %cst_30 : f32 to vector<16x1xf32>
    %192 = tpu.concatenate %190, %189, %191 in 1 : vector<16x1xf32>, vector<16x16xf32>, vector<16x1xf32> -> vector<16x18xf32>
    %193 = vector.extract_strided_slice %192 {offsets = [0, 0], sizes = [16, 16], strides = [1, 1]} : vector<16x18xf32> to vector<16x16xf32>
    %c9 = arith.constant 9 : index
    %194 = memref.load %arg3[%c9] : memref<48xf32, #tpu.memory_space<smem>>
    %195 = vector.broadcast %194 : f32 to vector<16x16xf32>
    %196 = arith.mulf %193, %195 : vector<16x16xf32>
    %197 = arith.addf %169, %196 : vector<16x16xf32>
    %c21 = arith.constant 21 : index
    %198 = memref.load %arg3[%c21] : memref<48xf32, #tpu.memory_space<smem>>
    %199 = vector.broadcast %198 : f32 to vector<16x16xf32>
    %200 = arith.mulf %193, %199 : vector<16x16xf32>
    %201 = arith.addf %173, %200 : vector<16x16xf32>
    %c33 = arith.constant 33 : index
    %202 = memref.load %arg3[%c33] : memref<48xf32, #tpu.memory_space<smem>>
    %203 = vector.broadcast %202 : f32 to vector<16x16xf32>
    %204 = arith.mulf %193, %203 : vector<16x16xf32>
    %205 = arith.addf %177, %204 : vector<16x16xf32>
    %c45 = arith.constant 45 : index
    %206 = memref.load %arg3[%c45] : memref<48xf32, #tpu.memory_space<smem>>
    %207 = vector.broadcast %206 : f32 to vector<16x16xf32>
    %208 = arith.mulf %193, %207 : vector<16x16xf32>
    %209 = arith.addf %181, %208 : vector<16x16xf32>
    %210 = vector.extract_strided_slice %192 {offsets = [0, 1], sizes = [16, 16], strides = [1, 1]} : vector<16x18xf32> to vector<16x16xf32>
    %c10 = arith.constant 10 : index
    %211 = memref.load %arg3[%c10] : memref<48xf32, #tpu.memory_space<smem>>
    %212 = vector.broadcast %211 : f32 to vector<16x16xf32>
    %213 = arith.mulf %210, %212 : vector<16x16xf32>
    %214 = arith.addf %197, %213 : vector<16x16xf32>
    %c22 = arith.constant 22 : index
    %215 = memref.load %arg3[%c22] : memref<48xf32, #tpu.memory_space<smem>>
    %216 = vector.broadcast %215 : f32 to vector<16x16xf32>
    %217 = arith.mulf %210, %216 : vector<16x16xf32>
    %218 = arith.addf %201, %217 : vector<16x16xf32>
    %c34 = arith.constant 34 : index
    %219 = memref.load %arg3[%c34] : memref<48xf32, #tpu.memory_space<smem>>
    %220 = vector.broadcast %219 : f32 to vector<16x16xf32>
    %221 = arith.mulf %210, %220 : vector<16x16xf32>
    %222 = arith.addf %205, %221 : vector<16x16xf32>
    %c46 = arith.constant 46 : index
    %223 = memref.load %arg3[%c46] : memref<48xf32, #tpu.memory_space<smem>>
    %224 = vector.broadcast %223 : f32 to vector<16x16xf32>
    %225 = arith.mulf %210, %224 : vector<16x16xf32>
    %226 = arith.addf %209, %225 : vector<16x16xf32>
    %227 = vector.extract_strided_slice %192 {offsets = [0, 2], sizes = [16, 16], strides = [1, 1]} : vector<16x18xf32> to vector<16x16xf32>
    %c11 = arith.constant 11 : index
    %228 = memref.load %arg3[%c11] : memref<48xf32, #tpu.memory_space<smem>>
    %229 = vector.broadcast %228 : f32 to vector<16x16xf32>
    %230 = arith.mulf %227, %229 : vector<16x16xf32>
    %231 = arith.addf %214, %230 : vector<16x16xf32>
    %c23 = arith.constant 23 : index
    %232 = memref.load %arg3[%c23] : memref<48xf32, #tpu.memory_space<smem>>
    %233 = vector.broadcast %232 : f32 to vector<16x16xf32>
    %234 = arith.mulf %227, %233 : vector<16x16xf32>
    %235 = arith.addf %218, %234 : vector<16x16xf32>
    %c35 = arith.constant 35 : index
    %236 = memref.load %arg3[%c35] : memref<48xf32, #tpu.memory_space<smem>>
    %237 = vector.broadcast %236 : f32 to vector<16x16xf32>
    %238 = arith.mulf %227, %237 : vector<16x16xf32>
    %239 = arith.addf %222, %238 : vector<16x16xf32>
    %c47 = arith.constant 47 : index
    %240 = memref.load %arg3[%c47] : memref<48xf32, #tpu.memory_space<smem>>
    %241 = vector.broadcast %240 : f32 to vector<16x16xf32>
    %242 = arith.mulf %227, %241 : vector<16x16xf32>
    %243 = arith.addf %226, %242 : vector<16x16xf32>
    %c0_31 = arith.constant 0 : index
    %244 = memref.load %arg4[%c0_31] : memref<4xf32, #tpu.memory_space<smem>>
    %245 = vector.broadcast %244 : f32 to vector<16x16xf32>
    %246 = arith.addf %231, %245 : vector<16x16xf32>
    %c0_32 = arith.constant 0 : index
    %c0_33 = arith.constant 0 : index
    %c0_34 = arith.constant 0 : index
    %c0_35 = arith.constant 0 : index
    %247 = vector.load %arg7[%c0_32, %c0_33, %c0_34, %c0_35] : memref<1x4x16x16xf32, #tpu.memory_space<vmem>>, vector<1x1x16x16xf32>
    %248 = vector.shape_cast %247 : vector<1x1x16x16xf32> to vector<16x16xf32>
    %249 = vector.shape_cast %246 : vector<16x16xf32> to vector<1x1x16x16xf32>
    tpu.vector_store %arg7[%c0_32, %c0_33, %c0_34, %c0_35], %249 {strides = array<i32>} : memref<1x4x16x16xf32, #tpu.memory_space<vmem>>, vector<1x1x16x16xf32>,
    %cst_36 = arith.constant dense<0.000000e+00> : vector<16xf32>
    %250 = vector.multi_reduction <add>, %246, %cst_36 [0] : vector<16x16xf32> to vector<16xf32>
    %251 = vector.shape_cast %250 : vector<16xf32> to vector<1x16xf32>
    %c0_37 = arith.constant 0 : index
    %c0_38 = arith.constant 0 : index
    %c0_39 = arith.constant 0 : index
    %c0_40 = arith.constant 0 : index
    %252 = vector.load %arg8[%c0_37, %c0_38, %c0_39, %c0_40] : memref<1x2x4x16xf32, #tpu.memory_space<vmem>>, vector<1x1x1x16xf32>
    %253 = vector.shape_cast %252 : vector<1x1x1x16xf32> to vector<1x16xf32>
    %254 = vector.shape_cast %251 : vector<1x16xf32> to vector<1x1x1x16xf32>
    tpu.vector_store %arg8[%c0_37, %c0_38, %c0_39, %c0_40], %254 {strides = array<i32>} : memref<1x2x4x16xf32, #tpu.memory_space<vmem>>, vector<1x1x1x16xf32>,
    %255 = arith.mulf %246, %246 : vector<16x16xf32>
    %cst_41 = arith.constant dense<0.000000e+00> : vector<16xf32>
    %256 = vector.multi_reduction <add>, %255, %cst_41 [0] : vector<16x16xf32> to vector<16xf32>
    %257 = vector.shape_cast %256 : vector<16xf32> to vector<1x16xf32>
    %c0_42 = arith.constant 0 : index
    %c1_43 = arith.constant 1 : index
    %c0_44 = arith.constant 0 : index
    %c0_45 = arith.constant 0 : index
    %258 = vector.load %arg8[%c0_42, %c1_43, %c0_44, %c0_45] : memref<1x2x4x16xf32, #tpu.memory_space<vmem>>, vector<1x1x1x16xf32>
    %259 = vector.shape_cast %258 : vector<1x1x1x16xf32> to vector<1x16xf32>
    %260 = vector.shape_cast %257 : vector<1x16xf32> to vector<1x1x1x16xf32>
    tpu.vector_store %arg8[%c0_42, %c1_43, %c0_44, %c0_45], %260 {strides = array<i32>} : memref<1x2x4x16xf32, #tpu.memory_space<vmem>>, vector<1x1x1x16xf32>,
    %c1_46 = arith.constant 1 : index
    %261 = memref.load %arg4[%c1_46] : memref<4xf32, #tpu.memory_space<smem>>
    %262 = vector.broadcast %261 : f32 to vector<16x16xf32>
    %263 = arith.addf %235, %262 : vector<16x16xf32>
    %c0_47 = arith.constant 0 : index
    %c1_48 = arith.constant 1 : index
    %c0_49 = arith.constant 0 : index
    %c0_50 = arith.constant 0 : index
    %264 = vector.load %arg7[%c0_47, %c1_48, %c0_49, %c0_50] : memref<1x4x16x16xf32, #tpu.memory_space<vmem>>, vector<1x1x16x16xf32>
    %265 = vector.shape_cast %264 : vector<1x1x16x16xf32> to vector<16x16xf32>
    %266 = vector.shape_cast %263 : vector<16x16xf32> to vector<1x1x16x16xf32>
    tpu.vector_store %arg7[%c0_47, %c1_48, %c0_49, %c0_50], %266 {strides = array<i32>} : memref<1x4x16x16xf32, #tpu.memory_space<vmem>>, vector<1x1x16x16xf32>,
    %cst_51 = arith.constant dense<0.000000e+00> : vector<16xf32>
    %267 = vector.multi_reduction <add>, %263, %cst_51 [0] : vector<16x16xf32> to vector<16xf32>
    %268 = vector.shape_cast %267 : vector<16xf32> to vector<1x16xf32>
    %c0_52 = arith.constant 0 : index
    %c0_53 = arith.constant 0 : index
    %c1_54 = arith.constant 1 : index
    %c0_55 = arith.constant 0 : index
    %269 = vector.load %arg8[%c0_52, %c0_53, %c1_54, %c0_55] : memref<1x2x4x16xf32, #tpu.memory_space<vmem>>, vector<1x1x1x16xf32>
    %270 = vector.shape_cast %269 : vector<1x1x1x16xf32> to vector<1x16xf32>
    %271 = vector.shape_cast %268 : vector<1x16xf32> to vector<1x1x1x16xf32>
    tpu.vector_store %arg8[%c0_52, %c0_53, %c1_54, %c0_55], %271 {strides = array<i32>} : memref<1x2x4x16xf32, #tpu.memory_space<vmem>>, vector<1x1x1x16xf32>,
    %272 = arith.mulf %263, %263 : vector<16x16xf32>
    %cst_56 = arith.constant dense<0.000000e+00> : vector<16xf32>
    %273 = vector.multi_reduction <add>, %272, %cst_56 [0] : vector<16x16xf32> to vector<16xf32>
    %274 = vector.shape_cast %273 : vector<16xf32> to vector<1x16xf32>
    %c0_57 = arith.constant 0 : index
    %c1_58 = arith.constant 1 : index
    %c1_59 = arith.constant 1 : index
    %c0_60 = arith.constant 0 : index
    %275 = vector.load %arg8[%c0_57, %c1_58, %c1_59, %c0_60] : memref<1x2x4x16xf32, #tpu.memory_space<vmem>>, vector<1x1x1x16xf32>
    %276 = vector.shape_cast %275 : vector<1x1x1x16xf32> to vector<1x16xf32>
    %277 = vector.shape_cast %274 : vector<1x16xf32> to vector<1x1x1x16xf32>
    tpu.vector_store %arg8[%c0_57, %c1_58, %c1_59, %c0_60], %277 {strides = array<i32>} : memref<1x2x4x16xf32, #tpu.memory_space<vmem>>, vector<1x1x1x16xf32>,
    %c2_61 = arith.constant 2 : index
    %278 = memref.load %arg4[%c2_61] : memref<4xf32, #tpu.memory_space<smem>>
    %279 = vector.broadcast %278 : f32 to vector<16x16xf32>
    %280 = arith.addf %239, %279 : vector<16x16xf32>
    %c0_62 = arith.constant 0 : index
    %c2_63 = arith.constant 2 : index
    %c0_64 = arith.constant 0 : index
    %c0_65 = arith.constant 0 : index
    %281 = vector.load %arg7[%c0_62, %c2_63, %c0_64, %c0_65] : memref<1x4x16x16xf32, #tpu.memory_space<vmem>>, vector<1x1x16x16xf32>
    %282 = vector.shape_cast %281 : vector<1x1x16x16xf32> to vector<16x16xf32>
    %283 = vector.shape_cast %280 : vector<16x16xf32> to vector<1x1x16x16xf32>
    tpu.vector_store %arg7[%c0_62, %c2_63, %c0_64, %c0_65], %283 {strides = array<i32>} : memref<1x4x16x16xf32, #tpu.memory_space<vmem>>, vector<1x1x16x16xf32>,
    %cst_66 = arith.constant dense<0.000000e+00> : vector<16xf32>
    %284 = vector.multi_reduction <add>, %280, %cst_66 [0] : vector<16x16xf32> to vector<16xf32>
    %285 = vector.shape_cast %284 : vector<16xf32> to vector<1x16xf32>
    %c0_67 = arith.constant 0 : index
    %c0_68 = arith.constant 0 : index
    %c2_69 = arith.constant 2 : index
    %c0_70 = arith.constant 0 : index
    %286 = vector.load %arg8[%c0_67, %c0_68, %c2_69, %c0_70] : memref<1x2x4x16xf32, #tpu.memory_space<vmem>>, vector<1x1x1x16xf32>
    %287 = vector.shape_cast %286 : vector<1x1x1x16xf32> to vector<1x16xf32>
    %288 = vector.shape_cast %285 : vector<1x16xf32> to vector<1x1x1x16xf32>
    tpu.vector_store %arg8[%c0_67, %c0_68, %c2_69, %c0_70], %288 {strides = array<i32>} : memref<1x2x4x16xf32, #tpu.memory_space<vmem>>, vector<1x1x1x16xf32>,
    %289 = arith.mulf %280, %280 : vector<16x16xf32>
    %cst_71 = arith.constant dense<0.000000e+00> : vector<16xf32>
    %290 = vector.multi_reduction <add>, %289, %cst_71 [0] : vector<16x16xf32> to vector<16xf32>
    %291 = vector.shape_cast %290 : vector<16xf32> to vector<1x16xf32>
    %c0_72 = arith.constant 0 : index
    %c1_73 = arith.constant 1 : index
    %c2_74 = arith.constant 2 : index
    %c0_75 = arith.constant 0 : index
    %292 = vector.load %arg8[%c0_72, %c1_73, %c2_74, %c0_75] : memref<1x2x4x16xf32, #tpu.memory_space<vmem>>, vector<1x1x1x16xf32>
    %293 = vector.shape_cast %292 : vector<1x1x1x16xf32> to vector<1x16xf32>
    %294 = vector.shape_cast %291 : vector<1x16xf32> to vector<1x1x1x16xf32>
    tpu.vector_store %arg8[%c0_72, %c1_73, %c2_74, %c0_75], %294 {strides = array<i32>} : memref<1x2x4x16xf32, #tpu.memory_space<vmem>>, vector<1x1x1x16xf32>,
    %c3_76 = arith.constant 3 : index
    %295 = memref.load %arg4[%c3_76] : memref<4xf32, #tpu.memory_space<smem>>
    %296 = vector.broadcast %295 : f32 to vector<16x16xf32>
    %297 = arith.addf %243, %296 : vector<16x16xf32>
    %c0_77 = arith.constant 0 : index
    %c3_78 = arith.constant 3 : index
    %c0_79 = arith.constant 0 : index
    %c0_80 = arith.constant 0 : index
    %298 = vector.load %arg7[%c0_77, %c3_78, %c0_79, %c0_80] : memref<1x4x16x16xf32, #tpu.memory_space<vmem>>, vector<1x1x16x16xf32>
    %299 = vector.shape_cast %298 : vector<1x1x16x16xf32> to vector<16x16xf32>
    %300 = vector.shape_cast %297 : vector<16x16xf32> to vector<1x1x16x16xf32>
    tpu.vector_store %arg7[%c0_77, %c3_78, %c0_79, %c0_80], %300 {strides = array<i32>} : memref<1x4x16x16xf32, #tpu.memory_space<vmem>>, vector<1x1x16x16xf32>,
    %cst_81 = arith.constant dense<0.000000e+00> : vector<16xf32>
    %301 = vector.multi_reduction <add>, %297, %cst_81 [0] : vector<16x16xf32> to vector<16xf32>
    %302 = vector.shape_cast %301 : vector<16xf32> to vector<1x16xf32>
    %c0_82 = arith.constant 0 : index
    %c0_83 = arith.constant 0 : index
    %c3_84 = arith.constant 3 : index
    %c0_85 = arith.constant 0 : index
    %303 = vector.load %arg8[%c0_82, %c0_83, %c3_84, %c0_85] : memref<1x2x4x16xf32, #tpu.memory_space<vmem>>, vector<1x1x1x16xf32>
    %304 = vector.shape_cast %303 : vector<1x1x1x16xf32> to vector<1x16xf32>
    %305 = vector.shape_cast %302 : vector<1x16xf32> to vector<1x1x1x16xf32>
    tpu.vector_store %arg8[%c0_82, %c0_83, %c3_84, %c0_85], %305 {strides = array<i32>} : memref<1x2x4x16xf32, #tpu.memory_space<vmem>>, vector<1x1x1x16xf32>,
    %306 = arith.mulf %297, %297 : vector<16x16xf32>
    %cst_86 = arith.constant dense<0.000000e+00> : vector<16xf32>
    %307 = vector.multi_reduction <add>, %306, %cst_86 [0] : vector<16x16xf32> to vector<16xf32>
    %308 = vector.shape_cast %307 : vector<16xf32> to vector<1x16xf32>
    %c0_87 = arith.constant 0 : index
    %c1_88 = arith.constant 1 : index
    %c3_89 = arith.constant 3 : index
    %c0_90 = arith.constant 0 : index
    %309 = vector.load %arg8[%c0_87, %c1_88, %c3_89, %c0_90] : memref<1x2x4x16xf32, #tpu.memory_space<vmem>>, vector<1x1x1x16xf32>
    %310 = vector.shape_cast %309 : vector<1x1x1x16xf32> to vector<1x16xf32>
    %311 = vector.shape_cast %308 : vector<1x16xf32> to vector<1x1x1x16xf32>
    tpu.vector_store %arg8[%c0_87, %c1_88, %c3_89, %c0_90], %311 {strides = array<i32>} : memref<1x2x4x16xf32, #tpu.memory_space<vmem>>, vector<1x1x1x16xf32>,
    return
  }
  func.func @transform_0(%arg0: i32, %arg1: i32) -> (i32, i32, i32, i32) {
    %c0_i32 = arith.constant 0 : i32
    %c0_i32_0 = arith.constant 0 : i32
    %c0_i32_1 = arith.constant 0 : i32
    return %arg0, %c0_i32, %arg1, %c0_i32_0 : i32, i32, i32, i32
  }
  func.func @transform_1(%arg0: i32, %arg1: i32) -> i32 {
    %c0_i32 = arith.constant 0 : i32
    %c0_i32_0 = arith.constant 0 : i32
    return %c0_i32 : i32
  }
  func.func @transform_2(%arg0: i32, %arg1: i32) -> i32 {
    %c0_i32 = arith.constant 0 : i32
    %c0_i32_0 = arith.constant 0 : i32
    return %c0_i32 : i32
  }
  func.func @transform_3(%arg0: i32, %arg1: i32) -> i32 {
    %c0_i32 = arith.constant 0 : i32
    %c0_i32_0 = arith.constant 0 : i32
    return %c0_i32 : i32
  }
  func.func @transform_4(%arg0: i32, %arg1: i32) -> i32 {
    %c0_i32 = arith.constant 0 : i32
    %c0_i32_0 = arith.constant 0 : i32
    return %c0_i32 : i32
  }
  func.func @transform_5(%arg0: i32, %arg1: i32) -> (i32, i32, i32, i32) {
    %c0_i32 = arith.constant 0 : i32
    %c0_i32_0 = arith.constant 0 : i32
    %c0_i32_1 = arith.constant 0 : i32
    return %arg0, %c0_i32, %arg1, %c0_i32_0 : i32, i32, i32, i32
  }
  func.func @transform_6(%arg0: i32, %arg1: i32) -> (i32, i32, i32, i32) {
    %c1_i32 = arith.constant 1 : i32
    %0 = arith.muli %arg0, %c1_i32 : i32
    %1 = arith.addi %0, %arg1 : i32
    %c0_i32 = arith.constant 0 : i32
    %c0_i32_0 = arith.constant 0 : i32
    %c0_i32_1 = arith.constant 0 : i32
    %c0_i32_2 = arith.constant 0 : i32
    return %1, %c0_i32, %c0_i32_0, %c0_i32_1 : i32, i32, i32, i32
  }
}

module attributes {stable_mosaic.version = 11 : i64} {
  func.func @_bn_affine_kernel(%arg0: i32, %arg1: i32, %arg2: memref<1x4x16x16xf32, #tpu.memory_space<vmem>>, %arg3: memref<4xf32, #tpu.memory_space<smem>>, %arg4: memref<4xf32, #tpu.memory_space<smem>>, %arg5: memref<1x4x16x16xf32, #tpu.memory_space<vmem>>) attributes {dimension_semantics = [#tpu.dimension_semantics<parallel>, #tpu.dimension_semantics<parallel>], iteration_bounds = array<i64: 2, 1>, scalar_prefetch = 0 : i64, scratch_operands = 0 : i64, tpu.core_type = #tpu.core_type<tc>, window_params = [{transform_indices = @transform_0, window_bounds = array<i64: 1, 4, 16, 16>}, {transform_indices = @transform_1, window_bounds = array<i64: 4>}, {transform_indices = @transform_2, window_bounds = array<i64: 4>}, {transform_indices = @transform_3, window_bounds = array<i64: 1, 4, 16, 16>}]} {
    %c0 = arith.constant 0 : index
    %c0_0 = arith.constant 0 : index
    %c0_1 = arith.constant 0 : index
    %c0_2 = arith.constant 0 : index
    %0 = vector.load %arg2[%c0, %c0_0, %c0_1, %c0_2] : memref<1x4x16x16xf32, #tpu.memory_space<vmem>>, vector<1x1x16x16xf32>
    %1 = vector.shape_cast %0 : vector<1x1x16x16xf32> to vector<16x16xf32>
    %c0_3 = arith.constant 0 : index
    %2 = memref.load %arg3[%c0_3] : memref<4xf32, #tpu.memory_space<smem>>
    %3 = vector.broadcast %2 : f32 to vector<16x16xf32>
    %4 = arith.mulf %1, %3 : vector<16x16xf32>
    %c0_4 = arith.constant 0 : index
    %5 = memref.load %arg4[%c0_4] : memref<4xf32, #tpu.memory_space<smem>>
    %6 = vector.broadcast %5 : f32 to vector<16x16xf32>
    %7 = arith.addf %4, %6 : vector<16x16xf32>
    %c0_5 = arith.constant 0 : index
    %c0_6 = arith.constant 0 : index
    %c0_7 = arith.constant 0 : index
    %c0_8 = arith.constant 0 : index
    %8 = vector.load %arg5[%c0_5, %c0_6, %c0_7, %c0_8] : memref<1x4x16x16xf32, #tpu.memory_space<vmem>>, vector<1x1x16x16xf32>
    %9 = vector.shape_cast %8 : vector<1x1x16x16xf32> to vector<16x16xf32>
    %10 = vector.shape_cast %7 : vector<16x16xf32> to vector<1x1x16x16xf32>
    tpu.vector_store %arg5[%c0_5, %c0_6, %c0_7, %c0_8], %10 {strides = array<i32>} : memref<1x4x16x16xf32, #tpu.memory_space<vmem>>, vector<1x1x16x16xf32>,
    %c0_9 = arith.constant 0 : index
    %c1 = arith.constant 1 : index
    %c0_10 = arith.constant 0 : index
    %c0_11 = arith.constant 0 : index
    %11 = vector.load %arg2[%c0_9, %c1, %c0_10, %c0_11] : memref<1x4x16x16xf32, #tpu.memory_space<vmem>>, vector<1x1x16x16xf32>
    %12 = vector.shape_cast %11 : vector<1x1x16x16xf32> to vector<16x16xf32>
    %c1_12 = arith.constant 1 : index
    %13 = memref.load %arg3[%c1_12] : memref<4xf32, #tpu.memory_space<smem>>
    %14 = vector.broadcast %13 : f32 to vector<16x16xf32>
    %15 = arith.mulf %12, %14 : vector<16x16xf32>
    %c1_13 = arith.constant 1 : index
    %16 = memref.load %arg4[%c1_13] : memref<4xf32, #tpu.memory_space<smem>>
    %17 = vector.broadcast %16 : f32 to vector<16x16xf32>
    %18 = arith.addf %15, %17 : vector<16x16xf32>
    %c0_14 = arith.constant 0 : index
    %c1_15 = arith.constant 1 : index
    %c0_16 = arith.constant 0 : index
    %c0_17 = arith.constant 0 : index
    %19 = vector.load %arg5[%c0_14, %c1_15, %c0_16, %c0_17] : memref<1x4x16x16xf32, #tpu.memory_space<vmem>>, vector<1x1x16x16xf32>
    %20 = vector.shape_cast %19 : vector<1x1x16x16xf32> to vector<16x16xf32>
    %21 = vector.shape_cast %18 : vector<16x16xf32> to vector<1x1x16x16xf32>
    tpu.vector_store %arg5[%c0_14, %c1_15, %c0_16, %c0_17], %21 {strides = array<i32>} : memref<1x4x16x16xf32, #tpu.memory_space<vmem>>, vector<1x1x16x16xf32>,
    %c0_18 = arith.constant 0 : index
    %c2 = arith.constant 2 : index
    %c0_19 = arith.constant 0 : index
    %c0_20 = arith.constant 0 : index
    %22 = vector.load %arg2[%c0_18, %c2, %c0_19, %c0_20] : memref<1x4x16x16xf32, #tpu.memory_space<vmem>>, vector<1x1x16x16xf32>
    %23 = vector.shape_cast %22 : vector<1x1x16x16xf32> to vector<16x16xf32>
    %c2_21 = arith.constant 2 : index
    %24 = memref.load %arg3[%c2_21] : memref<4xf32, #tpu.memory_space<smem>>
    %25 = vector.broadcast %24 : f32 to vector<16x16xf32>
    %26 = arith.mulf %23, %25 : vector<16x16xf32>
    %c2_22 = arith.constant 2 : index
    %27 = memref.load %arg4[%c2_22] : memref<4xf32, #tpu.memory_space<smem>>
    %28 = vector.broadcast %27 : f32 to vector<16x16xf32>
    %29 = arith.addf %26, %28 : vector<16x16xf32>
    %c0_23 = arith.constant 0 : index
    %c2_24 = arith.constant 2 : index
    %c0_25 = arith.constant 0 : index
    %c0_26 = arith.constant 0 : index
    %30 = vector.load %arg5[%c0_23, %c2_24, %c0_25, %c0_26] : memref<1x4x16x16xf32, #tpu.memory_space<vmem>>, vector<1x1x16x16xf32>
    %31 = vector.shape_cast %30 : vector<1x1x16x16xf32> to vector<16x16xf32>
    %32 = vector.shape_cast %29 : vector<16x16xf32> to vector<1x1x16x16xf32>
    tpu.vector_store %arg5[%c0_23, %c2_24, %c0_25, %c0_26], %32 {strides = array<i32>} : memref<1x4x16x16xf32, #tpu.memory_space<vmem>>, vector<1x1x16x16xf32>,
    %c0_27 = arith.constant 0 : index
    %c3 = arith.constant 3 : index
    %c0_28 = arith.constant 0 : index
    %c0_29 = arith.constant 0 : index
    %33 = vector.load %arg2[%c0_27, %c3, %c0_28, %c0_29] : memref<1x4x16x16xf32, #tpu.memory_space<vmem>>, vector<1x1x16x16xf32>
    %34 = vector.shape_cast %33 : vector<1x1x16x16xf32> to vector<16x16xf32>
    %c3_30 = arith.constant 3 : index
    %35 = memref.load %arg3[%c3_30] : memref<4xf32, #tpu.memory_space<smem>>
    %36 = vector.broadcast %35 : f32 to vector<16x16xf32>
    %37 = arith.mulf %34, %36 : vector<16x16xf32>
    %c3_31 = arith.constant 3 : index
    %38 = memref.load %arg4[%c3_31] : memref<4xf32, #tpu.memory_space<smem>>
    %39 = vector.broadcast %38 : f32 to vector<16x16xf32>
    %40 = arith.addf %37, %39 : vector<16x16xf32>
    %c0_32 = arith.constant 0 : index
    %c3_33 = arith.constant 3 : index
    %c0_34 = arith.constant 0 : index
    %c0_35 = arith.constant 0 : index
    %41 = vector.load %arg5[%c0_32, %c3_33, %c0_34, %c0_35] : memref<1x4x16x16xf32, #tpu.memory_space<vmem>>, vector<1x1x16x16xf32>
    %42 = vector.shape_cast %41 : vector<1x1x16x16xf32> to vector<16x16xf32>
    %43 = vector.shape_cast %40 : vector<16x16xf32> to vector<1x1x16x16xf32>
    tpu.vector_store %arg5[%c0_32, %c3_33, %c0_34, %c0_35], %43 {strides = array<i32>} : memref<1x4x16x16xf32, #tpu.memory_space<vmem>>, vector<1x1x16x16xf32>,
    return
  }
  func.func @transform_0(%arg0: i32, %arg1: i32) -> (i32, i32, i32, i32) {
    %c0_i32 = arith.constant 0 : i32
    %c0_i32_0 = arith.constant 0 : i32
    %c0_i32_1 = arith.constant 0 : i32
    return %arg0, %c0_i32, %arg1, %c0_i32_0 : i32, i32, i32, i32
  }
  func.func @transform_1(%arg0: i32, %arg1: i32) -> i32 {
    %c0_i32 = arith.constant 0 : i32
    %c0_i32_0 = arith.constant 0 : i32
    return %c0_i32 : i32
  }
  func.func @transform_2(%arg0: i32, %arg1: i32) -> i32 {
    %c0_i32 = arith.constant 0 : i32
    %c0_i32_0 = arith.constant 0 : i32
    return %c0_i32 : i32
  }
  func.func @transform_3(%arg0: i32, %arg1: i32) -> (i32, i32, i32, i32) {
    %c0_i32 = arith.constant 0 : i32
    %c0_i32_0 = arith.constant 0 : i32
    %c0_i32_1 = arith.constant 0 : i32
    return %arg0, %c0_i32, %arg1, %c0_i32_0 : i32, i32, i32, i32
  }
}

</mosaic_0001>

<llo_original>
// kernel: _lambda_.5
$region0: #{_lambda_.5}
  #allocation0 [shape = 'u32[]', space=smem, size = 0x4, offset = 0x4, fixed_abs, tag = 'smem constant byte address 0x4 - core index']
  #allocation1 [shape = 'u32[144,128]{1,0:T(1,128)}', space=vmem, size = 0x12000, scoped, tag = 'internal scratch']
  %s0 = inlined_call_operand.hbm [shape: f32[2,4,16,16], index: 0, kind: input, shape index: {}, may-alias: {0,3}]
  %s1 = inlined_call_operand.vmem [shape: f32[4], index: 1, kind: input, shape index: {}]
  %s2 = inlined_call_operand.vmem [shape: f32[4], index: 2, kind: input, shape index: {}]
  %s3 = inlined_call_operand.hbm [shape: f32[2,4,16,16], index: 3, kind: output, shape index: {}, may-alias: {0,3}]
  %s4 = sld [smem:[#allocation0]]
  $region57: #{_lambda_.5} parent=0
    _
  %s6 = ssub.s32 1, %s4
  %s7 = scalar_select 0, %s6, %s4
  $region1: #{_lambda_.5} parent=0
    #allocation2 [shape = 'u8[65536]{0}', space=vmem, size = 0x10000, scoped, tag = 'input window, operand 0']
    #allocation3 [shape = 's32[2]{0}', space=sflag, size = 0x8, scoped, tag = 'scoped memory for _lambda_.5']
    #allocation4 [shape = 's32[2]{0}', space=sflag, size = 0x8, scoped, tag = 'scoped memory for _lambda_.5']
    #allocation5 [shape = 's32[2]{0}', space=sflag, size = 0x8, scoped, tag = 'scoped memory for _lambda_.5']
    #allocation6 [shape = 'u8[512]{0}', space=smem, size = 0x200, scoped, tag = 'input window, operand 1, single buffered']
    #allocation7 [shape = 'u8[512]{0}', space=smem, size = 0x200, scoped, tag = 'input window, operand 2, single buffered']
    #allocation8 [shape = 's32[1]{0}', space=sflag, size = 0x4, scoped, tag = 'scoped memory for _lambda_.5']
    #allocation9 [shape = 'u8[65536]{0}', space=vmem, size = 0x10000, scoped, tag = 'output window, operand 0']
    %8 = vsyncpa [#allocation3], 0
    %s9 = scalar_lea.sflag [#allocation3], 1
    %10 = vsyncpa %s9, 0
    %11 = vsyncpa [#allocation5], 0
    %12 = vsyncpa [#allocation8], 0
    %13 = vsyncpa [#allocation4], 0
    %s14 = scalar_lea.sflag [#allocation4], 1
    %15 = vsyncpa %s14, 0
    loop: start=0, step=1, limit=4
    $region2: #{_lambda_.5} parent=1 // loop_pre_header
      _
    $region3: #{_lambda_.5} parent=1 // loop_header
      %s17 = sphi 0, %s21
      %p18 = scmp.ge.s32.totalorder %s17, 4
      %s24 = sphi 0, %s36
      %s25 = sphi 0, %s32
      %s26 = sphi 0, %s24
      %s27 = sphi 0, %s25
      %s28 = sphi 0, %s26
      %s29 = sphi 0, %s27
      %s41 = sphi 0, %s43
      %s44 = sphi 0, %s41
      %s45 = sphi 0, %s44
      %s61 = sphi 0, %s45
      %s65 = sphi 0, %s65
      %s67 = sphi 0, %s65
      %s68 = sphi 0, %s67
      %s82 = sphi 0, %s68
      %s86 = sphi 0, %s86
      %s88 = sphi 0, %s86
      %s89 = sphi 0, %s88
      %s103 = sphi 0, %s89
      %s111 = sphi 0, %s113
      %s114 = sphi 0, %s111
      %s115 = sphi 0, %s114
      %s131 = sphi 0, %s115
    $region4: #{_lambda_.5} parent=1 // loop_header_branch
      %20 = sbr.rel (%p18) target = $region8
    $region5: #{_lambda_.5} parent=1 // loop_body
      %s22 = ssub.s32 %s17, 1
      %s23 = ssub.s32 %s17, 2
      %s30 = sadd.s32 1, %s25
      %p31 = scmp.ge.s32.totalorder %s30, 1
      %s32 = scalar_select %p31, 0, %s30
      %s33 = sadd.s32 1, %s24
      %s34 = scalar_select %p31, %s33, %s24
      %p35 = scmp.ge.s32.totalorder %s34, 2
      %s36 = scalar_select %p35, 0, %s34
      %s37 = ssub.s32 %s24, %s36
      %s38 = ssub.s32 %s25, %s32
      %s39 = sor.u32 %s37, %s38
      %p40 = scmp.eq.s32.totalorder %s39, 0
      %s42 = sadd.s32 %s41, 1
      %s43 = scalar_select %p40, %s41, %s42
      %p46 = pneg %p40
      %p47 = scmp.eq.s32.totalorder %s17, 1
      %p48 = por %p46, %p47
      %p49 = scmp.ne.s32.totalorder %s41, %s44
      %p50 = scmp.eq.s32.totalorder %s17, 0
      %p51 = por %p49, %p50
      %p52 = scmp.ne.s32.totalorder %s41, %s44
      %p53 = scmp.eq.s32.totalorder %s22, 1
      %p54 = por %p52, %p53
      %p55 = scmp.ne.s32.totalorder %s44, %s45
      %p56 = scmp.eq.s32.totalorder %s22, 0
      %p57 = por %p55, %p56
      %p58 = scmp.ne.s32.totalorder %s44, %s45
      %p59 = scmp.eq.s32.totalorder %s23, 1
      %p60 = por %p58, %p59
      %p62 = scmp.ne.s32.totalorder %s45, %s61
      %p63 = scmp.eq.s32.totalorder %s23, 0
      %p64 = por %p62, %p63
      %s66 = sadd.s32 %s65, 1
      %p69 = scmp.eq.s32.totalorder %s17, 1
      %p70 = scmp.ne.s32.totalorder %s65, %s67
      %p71 = scmp.eq.s32.totalorder %s17, 0
      %p72 = por %p70, %p71
      %p73 = scmp.ne.s32.totalorder %s65, %s67
      %p74 = scmp.eq.s32.totalorder %s22, 1
      %p75 = por %p73, %p74
      %p76 = scmp.ne.s32.totalorder %s67, %s68
      %p77 = scmp.eq.s32.totalorder %s22, 0
      %p78 = por %p76, %p77
      %p79 = scmp.ne.s32.totalorder %s67, %s68
      %p80 = scmp.eq.s32.totalorder %s23, 1
      %p81 = por %p79, %p80
      %p83 = scmp.ne.s32.totalorder %s68, %s82
      %p84 = scmp.eq.s32.totalorder %s23, 0
      %p85 = por %p83, %p84
      %s87 = sadd.s32 %s86, 1
      %p90 = scmp.eq.s32.totalorder %s17, 1
      %p91 = scmp.ne.s32.totalorder %s86, %s88
      %p92 = scmp.eq.s32.totalorder %s17, 0
      %p93 = por %p91, %p92
      %p94 = scmp.ne.s32.totalorder %s86, %s88
      %p95 = scmp.eq.s32.totalorder %s22, 1
      %p96 = por %p94, %p95
      %p97 = scmp.ne.s32.totalorder %s88, %s89
      %p98 = scmp.eq.s32.totalorder %s22, 0
      %p99 = por %p97, %p98
      %p100 = scmp.ne.s32.totalorder %s88, %s89
      %p101 = scmp.eq.s32.totalorder %s23, 1
      %p102 = por %p100, %p101
      %p104 = scmp.ne.s32.totalorder %s89, %s103
      %p105 = scmp.eq.s32.totalorder %s23, 0
      %p106 = por %p104, %p105
      %s107 = ssub.s32 %s24, %s36
      %s108 = ssub.s32 %s25, %s32
      %s109 = sor.u32 %s107, %s108
      %p110 = scmp.eq.s32.totalorder %s109, 0
      %s112 = sadd.s32 %s111, 1
      %s113 = scalar_select %p110, %s111, %s112
      %p116 = pneg %p110
      %p117 = scmp.eq.s32.totalorder %s17, 1
      %p118 = por %p116, %p117
      %p119 = scmp.ne.s32.totalorder %s111, %s114
      %p120 = scmp.eq.s32.totalorder %s17, 0
      %p121 = por %p119, %p120
      %p122 = scmp.ne.s32.totalorder %s111, %s114
      %p123 = scmp.eq.s32.totalorder %s22, 1
      %p124 = por %p122, %p123
      %p125 = scmp.ne.s32.totalorder %s114, %s115
      %p126 = scmp.eq.s32.totalorder %s22, 0
      %p127 = por %p125, %p126
      %p128 = scmp.ne.s32.totalorder %s114, %s115
      %p129 = scmp.eq.s32.totalorder %s23, 1
      %p130 = por %p128, %p129
      %p132 = scmp.ne.s32.totalorder %s115, %s131
      %p133 = scmp.eq.s32.totalorder %s23, 0
      %p134 = por %p132, %p133
      %p135 = scmp.le.s32.totalorder 1, %s17
      %p136 = scmp.lt.s32.totalorder %s17, 3
      %p137 = pnand %p135, %p136
      %p138 = pneg %p137
      // Predicated region
      $region9: #{_lambda_.5} parent=5 // pred_check
        _
      $region10: #{_lambda_.5} parent=5 // pred_check_branch
        %140 = sbr.rel (%p137) target = $region12
      $region11: #{_lambda_.5} parent=5 // pred_region
        %s141 = ssub.s32 %s17, 1
        // Predicated region
        $region13: #{_lambda_.5} parent=11 // pred_check
          %p142 = pneg %p78
        $region14: #{_lambda_.5} parent=11 // pred_check_branch
          %144 = sbr.rel (%p142) target = $region16
        $region15: #{_lambda_.5} parent=11 // pred_region
          %s146 = ssub.s32 16, 16
          %147 = vsyncadd [#allocation5], %s146
          %s149 = sshll.u32 %s1, 4
          %s150 = int_to_ptr.vmem [resolvable:$true] %s149
          %152 = dma.vmem_to_smem %s150, 16, [#allocation6], [#allocation5]
        $region16: #{_lambda_.5} parent=11 // pred_fallthru
          _
        // Predicated region
        $region17: #{_lambda_.5} parent=11 // pred_check
          %p153 = pneg %p99
        $region18: #{_lambda_.5} parent=11 // pred_check_branch
          %155 = sbr.rel (%p153) target = $region20
        $region19: #{_lambda_.5} parent=11 // pred_region
          %s157 = ssub.s32 16, 16
          %158 = vsyncadd [#allocation8], %s157
          %s160 = sshll.u32 %s2, 4
          %s161 = int_to_ptr.vmem [resolvable:$true] %s160
          %163 = dma.vmem_to_smem %s161, 16, [#allocation7], [#allocation8]
        $region20: #{_lambda_.5} parent=11 // pred_fallthru
          _
      $region12: #{_lambda_.5} parent=5 // pred_fallthru
        _
      %p164 = scmp.lt.s32.totalorder %s17, 2
      // Predicated region
      $region21: #{_lambda_.5} parent=5 // pred_check
        %p165 = pneg %p164
      $region22: #{_lambda_.5} parent=5 // pred_check_branch
        %167 = sbr.rel (%p165) target = $region24
      $region23: #{_lambda_.5} parent=5 // pred_region
        // Predicated region
        $region25: #{_lambda_.5} parent=23 // pred_check
          %p168 = pneg %p51
        $region26: #{_lambda_.5} parent=23 // pred_check_branch
          %170 = sbr.rel (%p168) target = $region28
        $region27: #{_lambda_.5} parent=23 // pred_region
          %s171 = sand.u32 %s41, 1
          %s172 = scalar_lea.sflag [#allocation3], %s171
          %s173 = sand.u32 %s41, 1
          %s174 = smul.addr %s173, 64
          %s175 = scalar_lea.vmem [#allocation2], %s174
          %s176 = smul.u32 2, %s25
          %s178 = ssub.s32 1024, 1024
          %179 = vsyncadd %s172, %s178
          %s180 = smul.addr %s24, 8
          %s181 = sadd.s32 %s176, %s180
          %s182 = smul.addr %s181, 128
          %s183 = scalar_lea.hbm %s0, %s182
          %s184 = sshll.u32 %s175, 4
          %s185 = int_to_ptr.vmem [resolvable:$true] %s184
          %190 = dma.hbm_to_vmem [thread:$0]  %s183, 1024, %s185, %s172, 128, 128, 8
        $region28: #{_lambda_.5} parent=23 // pred_fallthru
          _
      $region24: #{_lambda_.5} parent=5 // pred_fallthru
        _
      %p191 = scmp.le.s32.totalorder 1, %s17
      %p192 = scmp.lt.s32.totalorder %s17, 3
      %p193 = pnand %p191, %p192
      %p194 = pneg %p193
      // Predicated region
      $region29: #{_lambda_.5} parent=5 // pred_check
        _
      $region30: #{_lambda_.5} parent=5 // pred_check_branch
        %196 = sbr.rel (%p193) target = $region32
      $region31: #{_lambda_.5} parent=5 // pred_region
        %s197 = ssub.s32 %s17, 1
        %s198 = sand.u32 %s44, 1
        %s199 = scalar_lea.sflag [#allocation3], %s198
        %s200 = sand.u32 %s44, 1
        %s201 = smul.addr %s200, 64
        %s202 = scalar_lea.vmem [#allocation2], %s201
        // Predicated region
        $region33: #{_lambda_.5} parent=31 // pred_check
          %p203 = pneg %p57
        $region34: #{_lambda_.5} parent=31 // pred_check_branch
          %205 = sbr.rel (%p203) target = $region36
        $region35: #{_lambda_.5} parent=31 // pred_region
          %206 = dma.done %s199, 1024
        $region36: #{_lambda_.5} parent=31 // pred_fallthru
          _
        // Predicated region
        $region37: #{_lambda_.5} parent=31 // pred_check
          %p207 = pneg %p78
        $region38: #{_lambda_.5} parent=31 // pred_check_branch
          %209 = sbr.rel (%p207) target = $region40
        $region39: #{_lambda_.5} parent=31 // pred_region
          %210 = dma.done [#allocation5], 16
        $region40: #{_lambda_.5} parent=31 // pred_fallthru
          _
        // Predicated region
        $region41: #{_lambda_.5} parent=31 // pred_check
          %p211 = pneg %p99
        $region42: #{_lambda_.5} parent=31 // pred_check_branch
          %213 = sbr.rel (%p211) target = $region44
        $region43: #{_lambda_.5} parent=31 // pred_region
          %214 = dma.done [#allocation8], 16
        $region44: #{_lambda_.5} parent=31 // pred_fallthru
          _
        %215 = sfence
        %s216 = sand.u32 %s44, 1
        %s217 = scalar_lea.sflag [#allocation3], %s216
        %s218 = sand.u32 %s44, 1
        %s219 = smul.addr %s218, 64
        %s220 = scalar_lea.vmem [#allocation2], %s219
        %p221 = pneg %p57
        %p222 = pneg %p54
        %p223 = pneg %p78
        %p224 = pneg %p75
        %p225 = pneg %p99
        %p226 = pneg %p96
        %p227 = pneg %p127
        %p228 = pneg %p124
        %s229 = sand.u32 %s114, 1
        %s230 = scalar_lea.sflag [#allocation4], %s229
        %s231 = sand.u32 %s114, 1
        %s232 = smul.addr %s231, 64
        %s233 = scalar_lea.vmem [#allocation9], %s232
        %s234 = smul.u32 2, %s27
        %s235 = smul.u32 2, %s27
        %v236 = vld [vmem:[%s202] sm:$0xff]
        %v237 = vld [vmem:[%s202 + $0x8] sm:$0xff]
        %s238 = sld [smem:[#allocation6]]
        %v239 = vstv %s238
        %v240 = vmul.f32 %v236, %v239
        %v241 = vmul.f32 %v237, %v239
        %s242 = sld [smem:[#allocation7]]
        %v243 = vstv %s242
        %v244 = vadd.f32 %v240, %v243
        %v245 = vadd.f32 %v241, %v243
        %vm246 = vcmask 130048
        %247 = vst.msk [vmem:[%s233] sm:$0xff] %vm246, %v244
        %248 = vst.msk [vmem:[%s233 + $0x8] sm:$0xff] %vm246, %v245
        %s249 = scalar_lea.vmem %s202, 16 [#allocation2]
        %v250 = vld [vmem:[%s249] sm:$0xff]
        %v251 = vld [vmem:[%s249 + $0x8] sm:$0xff]
        %s252 = sld [smem:[#allocation6 + $0x1]]
        %v253 = vstv %s252
        %v254 = vmul.f32 %v250, %v253
        %v255 = vmul.f32 %v251, %v253
        %s256 = sld [smem:[#allocation7 + $0x1]]
        %v257 = vstv %s256
        %v258 = vadd.f32 %v254, %v257
        %v259 = vadd.f32 %v255, %v257
        %s260 = scalar_lea.vmem %s233, 16 [#allocation9]
        %261 = vst.msk [vmem:[%s260] sm:$0xff] %vm246, %v258
        %262 = vst.msk [vmem:[%s260 + $0x8] sm:$0xff] %vm246, %v259
        %s263 = scalar_lea.vmem %s202, 32 [#allocation2]
        %v264 = vld [vmem:[%s263] sm:$0xff]
        %v265 = vld [vmem:[%s263 + $0x8] sm:$0xff]
        %s266 = sld [smem:[#allocation6 + $0x2]]
        %v267 = vstv %s266
        %v268 = vmul.f32 %v264, %v267
        %v269 = vmul.f32 %v265, %v267
        %s270 = sld [smem:[#allocation7 + $0x2]]
        %v271 = vstv %s270
        %v272 = vadd.f32 %v268, %v271
        %v273 = vadd.f32 %v269, %v271
        %s274 = scalar_lea.vmem %s233, 32 [#allocation9]
        %275 = vst.msk [vmem:[%s274] sm:$0xff] %vm246, %v272
        %276 = vst.msk [vmem:[%s274 + $0x8] sm:$0xff] %vm246, %v273
        %s277 = scalar_lea.vmem %s202, 48 [#allocation2]
        %v278 = vld [vmem:[%s277] sm:$0xff]
        %v279 = vld [vmem:[%s277 + $0x8] sm:$0xff]
        %s280 = sld [smem:[#allocation6 + $0x3]]
        %v281 = vstv %s280
        %v282 = vmul.f32 %v278, %v281
        %v283 = vmul.f32 %v279, %v281
        %s284 = sld [smem:[#allocation7 + $0x3]]
        %v285 = vstv %s284
        %v286 = vadd.f32 %v282, %v285
        %v287 = vadd.f32 %v283, %v285
        %s288 = scalar_lea.vmem %s233, 48 [#allocation9]
        %289 = vst.msk [vmem:[%s288] sm:$0xff] %vm246, %v286
        %290 = vst.msk [vmem:[%s288 + $0x8] sm:$0xff] %vm246, %v287
        %s291 = sand.u32 %s114, 1
        %s292 = scalar_lea.sflag [#allocation4], %s291
        %s293 = sand.u32 %s114, 1
        %s294 = smul.addr %s293, 64
        %s295 = scalar_lea.vmem [#allocation9], %s294
        // Predicated region
        $region45: #{_lambda_.5} parent=31 // pred_check
          %p296 = pneg %p124
        $region46: #{_lambda_.5} parent=31 // pred_check_branch
          %298 = sbr.rel (%p296) target = $region48
        $region47: #{_lambda_.5} parent=31 // pred_region
          %s299 = smul.u32 2, %s27
          %s301 = ssub.s32 1024, 1024
          %302 = vsyncadd %s292, %s301
          %s303 = smul.addr %s26, 8
          %s304 = sadd.s32 %s299, %s303
          %s305 = smul.addr %s304, 128
          %s306 = scalar_lea.hbm %s3, %s305
          %s307 = sshll.u32 %s295, 4
          %s308 = int_to_ptr.vmem [resolvable:$true] %s307
          %313 = dma.vmem_to_hbm [thread:$0]  %s308, 1024, %s306, %s292, 128, 128, 8
        $region48: #{_lambda_.5} parent=31 // pred_fallthru
          _
      $region32: #{_lambda_.5} parent=5 // pred_fallthru
        _
      %p314 = scmp.le.s32.totalorder 2, %s17
      // Predicated region
      $region49: #{_lambda_.5} parent=5 // pred_check
        %p315 = pneg %p314
      $region50: #{_lambda_.5} parent=5 // pred_check_branch
        %317 = sbr.rel (%p315) target = $region52
      $region51: #{_lambda_.5} parent=5 // pred_region
        %s318 = ssub.s32 %s17, 2
        // Predicated region
        $region53: #{_lambda_.5} parent=51 // pred_check
          %p319 = pneg %p130
        $region54: #{_lambda_.5} parent=51 // pred_check_branch
          %321 = sbr.rel (%p319) target = $region56
        $region55: #{_lambda_.5} parent=51 // pred_region
          %s322 = sand.u32 %s115, 1
          %s323 = scalar_lea.sflag [#allocation4], %s322
          %s324 = sand.u32 %s115, 1
          %s325 = smul.addr %s324, 64
          %s326 = scalar_lea.vmem [#allocation9], %s325
          %327 = dma.done %s323, 1024
        $region56: #{_lambda_.5} parent=51 // pred_fallthru
          _
      $region52: #{_lambda_.5} parent=5 // pred_fallthru
        _
    $region6: #{_lambda_.5} parent=1 // loop_footer
      %s21 = sadd.s32 1, %s17
    $region7: #{_lambda_.5} parent=1 // loop_footer_branch
      %16 = sbr.rel target = $region3
    $region8: #{_lambda_.5} parent=1 // loop_exit
      _
    %328 = vsyncpa [#allocation3], 1
    %s329 = scalar_lea.sflag [#allocation3], 1
    %330 = vsyncpa %s329, 1
    %331 = vsyncpa [#allocation4], 1
    %s332 = scalar_lea.sflag [#allocation4], 1
    %333 = vsyncpa %s332, 1
    %334 = vsyncpa [#allocation5], 1
    %s335 = scalar_lea.sflag [#allocation5], 1
    %336 = vsyncpa %s335, 1
    %337 = vsyncpa [#allocation8], 1

// kernel: _lambda_.4
$region0: #{_lambda_.4}
  #allocation0 [shape = 'u32[]', space=smem, size = 0x4, offset = 0x4, fixed_abs, tag = 'smem constant byte address 0x4 - core index']
  #allocation1 [shape = 'u32[144,128]{1,0:T(1,128)}', space=vmem, size = 0x12000, scoped, tag = 'internal scratch']
  %s0 = inlined_call_operand.vmem [shape: f32[2,4,16,16], index: 0, kind: input, shape index: {}]
  %s1 = inlined_call_operand.vmem [shape: f32[48], index: 1, kind: input, shape index: {}]
  %s2 = inlined_call_operand.vmem [shape: f32[4], index: 2, kind: input, shape index: {}]
  %s3 = inlined_call_operand.vmem [shape: f32[4], index: 3, kind: input, shape index: {}]
  %s4 = inlined_call_operand.vmem [shape: f32[4], index: 4, kind: input, shape index: {}]
  %s5 = inlined_call_operand.hbm [shape: f32[2,4,16,16], index: 5, kind: output, shape index: {0}]
  %s6 = inlined_call_operand.vmem [shape: f32[2,2,4,16], index: 6, kind: output, shape index: {1}]
  %7 = xla_tuple %s5, %s6
  %s8 = sld [smem:[#allocation0]]
  $region77: #{_lambda_.4} parent=0
    _
  %s10 = ssub.s32 1, %s8
  %s11 = scalar_select 0, %s10, %s8
  $region1: #{_lambda_.4} parent=0
    #allocation2 [shape = 'u8[512]{0}', space=smem, size = 0x200, scoped, tag = 'input window, operand 1, single buffered']
    #allocation3 [shape = 's32[2]{0}', space=sflag, size = 0x8, scoped, tag = 'scoped memory for _lambda_.4']
    #allocation4 [shape = 's32[2]{0}', space=sflag, size = 0x8, scoped, tag = 'scoped memory for _lambda_.4']
    #allocation5 [shape = 'u8[512]{0}', space=smem, size = 0x200, scoped, tag = 'input window, operand 2, single buffered']
    #allocation6 [shape = 's32[1]{0}', space=sflag, size = 0x4, scoped, tag = 'scoped memory for _lambda_.4']
    #allocation7 [shape = 'u8[512]{0}', space=smem, size = 0x200, scoped, tag = 'input window, operand 3, single buffered']
    #allocation8 [shape = 'u8[512]{0}', space=smem, size = 0x200, scoped, tag = 'input window, operand 4, single buffered']
    #allocation9 [shape = 's32[1]{0}', space=sflag, size = 0x4, scoped, tag = 'scoped memory for _lambda_.4']
    #allocation10 [shape = 'u8[65536]{0}', space=vmem, size = 0x10000, scoped, tag = 'output window, operand 0']
    %12 = vsyncpa [#allocation4], 0
    %13 = vsyncpa [#allocation6], 0
    %14 = vsyncpa [#allocation9], 0
    %15 = vsyncpa [#allocation3], 0
    %s16 = scalar_lea.sflag [#allocation3], 1
    %17 = vsyncpa %s16, 0
    loop: start=0, step=1, limit=4
    $region2: #{_lambda_.4} parent=1 // loop_pre_header
      _
    $region3: #{_lambda_.4} parent=1 // loop_header
      %s19 = sphi 0, %s23
      %p20 = scmp.ge.s32.totalorder %s19, 4
      %s26 = sphi 0, %s38
      %s27 = sphi 0, %s34
      %s28 = sphi 0, %s26
      %s29 = sphi 0, %s27
      %s30 = sphi 0, %s28
      %s31 = sphi 0, %s29
      %s43 = sphi 0, %s45
      %s46 = sphi 0, %s43
      %s47 = sphi 0, %s46
      %s63 = sphi 0, %s47
      %s67 = sphi 0, %s67
      %s69 = sphi 0, %s67
      %s70 = sphi 0, %s69
      %s84 = sphi 0, %s70
      %s88 = sphi 0, %s88
      %s90 = sphi 0, %s88
      %s91 = sphi 0, %s90
      %s105 = sphi 0, %s91
      %s109 = sphi 0, %s109
      %s111 = sphi 0, %s109
      %s112 = sphi 0, %s111
      %s126 = sphi 0, %s112
      %s130 = sphi 0, %s130
      %s132 = sphi 0, %s130
      %s133 = sphi 0, %s132
      %s147 = sphi 0, %s133
      %s155 = sphi 0, %s157
      %s158 = sphi 0, %s155
      %s159 = sphi 0, %s158
      %s175 = sphi 0, %s159
      %s183 = sphi 0, %s185
      %s186 = sphi 0, %s183
      %s187 = sphi 0, %s186
      %s203 = sphi 0, %s187
    $region4: #{_lambda_.4} parent=1 // loop_header_branch
      %22 = sbr.rel (%p20) target = $region8
    $region5: #{_lambda_.4} parent=1 // loop_body
      %s24 = ssub.s32 %s19, 1
      %s25 = ssub.s32 %s19, 2
      %s32 = sadd.s32 1, %s27
      %p33 = scmp.ge.s32.totalorder %s32, 1
      %s34 = scalar_select %p33, 0, %s32
      %s35 = sadd.s32 1, %s26
      %s36 = scalar_select %p33, %s35, %s26
      %p37 = scmp.ge.s32.totalorder %s36, 2
      %s38 = scalar_select %p37, 0, %s36
      %s39 = ssub.s32 %s26, %s38
      %s40 = ssub.s32 %s27, %s34
      %s41 = sor.u32 %s39, %s40
      %p42 = scmp.eq.s32.totalorder %s41, 0
      %s44 = sadd.s32 %s43, 1
      %s45 = scalar_select %p42, %s43, %s44
      %p48 = pneg %p42
      %p49 = scmp.eq.s32.totalorder %s19, 1
      %p50 = por %p48, %p49
      %p51 = scmp.ne.s32.totalorder %s43, %s46
      %p52 = scmp.eq.s32.totalorder %s19, 0
      %p53 = por %p51, %p52
      %p54 = scmp.ne.s32.totalorder %s43, %s46
      %p55 = scmp.eq.s32.totalorder %s24, 1
      %p56 = por %p54, %p55
      %p57 = scmp.ne.s32.totalorder %s46, %s47
      %p58 = scmp.eq.s32.totalorder %s24, 0
      %p59 = por %p57, %p58
      %p60 = scmp.ne.s32.totalorder %s46, %s47
      %p61 = scmp.eq.s32.totalorder %s25, 1
      %p62 = por %p60, %p61
      %p64 = scmp.ne.s32.totalorder %s47, %s63
      %p65 = scmp.eq.s32.totalorder %s25, 0
      %p66 = por %p64, %p65
      %s68 = sadd.s32 %s67, 1
      %p71 = scmp.eq.s32.totalorder %s19, 1
      %p72 = scmp.ne.s32.totalorder %s67, %s69
      %p73 = scmp.eq.s32.totalorder %s19, 0
      %p74 = por %p72, %p73
      %p75 = scmp.ne.s32.totalorder %s67, %s69
      %p76 = scmp.eq.s32.totalorder %s24, 1
      %p77 = por %p75, %p76
      %p78 = scmp.ne.s32.totalorder %s69, %s70
      %p79 = scmp.eq.s32.totalorder %s24, 0
      %p80 = por %p78, %p79
      %p81 = scmp.ne.s32.totalorder %s69, %s70
      %p82 = scmp.eq.s32.totalorder %s25, 1
      %p83 = por %p81, %p82
      %p85 = scmp.ne.s32.totalorder %s70, %s84
      %p86 = scmp.eq.s32.totalorder %s25, 0
      %p87 = por %p85, %p86
      %s89 = sadd.s32 %s88, 1
      %p92 = scmp.eq.s32.totalorder %s19, 1
      %p93 = scmp.ne.s32.totalorder %s88, %s90
      %p94 = scmp.eq.s32.totalorder %s19, 0
      %p95 = por %p93, %p94
      %p96 = scmp.ne.s32.totalorder %s88, %s90
      %p97 = scmp.eq.s32.totalorder %s24, 1
      %p98 = por %p96, %p97
      %p99 = scmp.ne.s32.totalorder %s90, %s91
      %p100 = scmp.eq.s32.totalorder %s24, 0
      %p101 = por %p99, %p100
      %p102 = scmp.ne.s32.totalorder %s90, %s91
      %p103 = scmp.eq.s32.totalorder %s25, 1
      %p104 = por %p102, %p103
      %p106 = scmp.ne.s32.totalorder %s91, %s105
      %p107 = scmp.eq.s32.totalorder %s25, 0
      %p108 = por %p106, %p107
      %s110 = sadd.s32 %s109, 1
      %p113 = scmp.eq.s32.totalorder %s19, 1
      %p114 = scmp.ne.s32.totalorder %s109, %s111
      %p115 = scmp.eq.s32.totalorder %s19, 0
      %p116 = por %p114, %p115
      %p117 = scmp.ne.s32.totalorder %s109, %s111
      %p118 = scmp.eq.s32.totalorder %s24, 1
      %p119 = por %p117, %p118
      %p120 = scmp.ne.s32.totalorder %s111, %s112
      %p121 = scmp.eq.s32.totalorder %s24, 0
      %p122 = por %p120, %p121
      %p123 = scmp.ne.s32.totalorder %s111, %s112
      %p124 = scmp.eq.s32.totalorder %s25, 1
      %p125 = por %p123, %p124
      %p127 = scmp.ne.s32.totalorder %s112, %s126
      %p128 = scmp.eq.s32.totalorder %s25, 0
      %p129 = por %p127, %p128
      %s131 = sadd.s32 %s130, 1
      %p134 = scmp.eq.s32.totalorder %s19, 1
      %p135 = scmp.ne.s32.totalorder %s130, %s132
      %p136 = scmp.eq.s32.totalorder %s19, 0
      %p137 = por %p135, %p136
      %p138 = scmp.ne.s32.totalorder %s130, %s132
      %p139 = scmp.eq.s32.totalorder %s24, 1
      %p140 = por %p138, %p139
      %p141 = scmp.ne.s32.totalorder %s132, %s133
      %p142 = scmp.eq.s32.totalorder %s24, 0
      %p143 = por %p141, %p142
      %p144 = scmp.ne.s32.totalorder %s132, %s133
      %p145 = scmp.eq.s32.totalorder %s25, 1
      %p146 = por %p144, %p145
      %p148 = scmp.ne.s32.totalorder %s133, %s147
      %p149 = scmp.eq.s32.totalorder %s25, 0
      %p150 = por %p148, %p149
      %s151 = ssub.s32 %s26, %s38
      %s152 = ssub.s32 %s27, %s34
      %s153 = sor.u32 %s151, %s152
      %p154 = scmp.eq.s32.totalorder %s153, 0
      %s156 = sadd.s32 %s155, 1
      %s157 = scalar_select %p154, %s155, %s156
      %p160 = pneg %p154
      %p161 = scmp.eq.s32.totalorder %s19, 1
      %p162 = por %p160, %p161
      %p163 = scmp.ne.s32.totalorder %s155, %s158
      %p164 = scmp.eq.s32.totalorder %s19, 0
      %p165 = por %p163, %p164
      %p166 = scmp.ne.s32.totalorder %s155, %s158
      %p167 = scmp.eq.s32.totalorder %s24, 1
      %p168 = por %p166, %p167
      %p169 = scmp.ne.s32.totalorder %s158, %s159
      %p170 = scmp.eq.s32.totalorder %s24, 0
      %p171 = por %p169, %p170
      %p172 = scmp.ne.s32.totalorder %s158, %s159
      %p173 = scmp.eq.s32.totalorder %s25, 1
      %p174 = por %p172, %p173
      %p176 = scmp.ne.s32.totalorder %s159, %s175
      %p177 = scmp.eq.s32.totalorder %s25, 0
      %p178 = por %p176, %p177
      %s179 = sadd.s32 %s26, %s27
      %s180 = sadd.s32 %s38, %s34
      %s181 = ssub.s32 %s179, %s180
      %p182 = scmp.eq.s32.totalorder %s181, 0
      %s184 = sadd.s32 %s183, 1
      %s185 = scalar_select %p182, %s183, %s184
      %p188 = pneg %p182
      %p189 = scmp.eq.s32.totalorder %s19, 1
      %p190 = por %p188, %p189
      %p191 = scmp.ne.s32.totalorder %s183, %s186
      %p192 = scmp.eq.s32.totalorder %s19, 0
      %p193 = por %p191, %p192
      %p194 = scmp.ne.s32.totalorder %s183, %s186
      %p195 = scmp.eq.s32.totalorder %s24, 1
      %p196 = por %p194, %p195
      %p197 = scmp.ne.s32.totalorder %s186, %s187
      %p198 = scmp.eq.s32.totalorder %s24, 0
      %p199 = por %p197, %p198
      %p200 = scmp.ne.s32.totalorder %s186, %s187
      %p201 = scmp.eq.s32.totalorder %s25, 1
      %p202 = por %p200, %p201
      %p204 = scmp.ne.s32.totalorder %s187, %s203
      %p205 = scmp.eq.s32.totalorder %s25, 0
      %p206 = por %p204, %p205
      %p207 = scmp.le.s32.totalorder 1, %s19
      %p208 = scmp.lt.s32.totalorder %s19, 3
      %p209 = pnand %p207, %p208
      %p210 = pneg %p209
      // Predicated region
      $region9: #{_lambda_.4} parent=5 // pred_check
        _
      $region10: #{_lambda_.4} parent=5 // pred_check_branch
        %212 = sbr.rel (%p209) target = $region12
      $region11: #{_lambda_.4} parent=5 // pred_region
        %s213 = ssub.s32 %s19, 1
        // Predicated region
        $region13: #{_lambda_.4} parent=11 // pred_check
          %p214 = pneg %p80
        $region14: #{_lambda_.4} parent=11 // pred_check_branch
          %216 = sbr.rel (%p214) target = $region16
        $region15: #{_lambda_.4} parent=11 // pred_region
          %s218 = ssub.s32 16, 16
          %219 = vsyncadd [#allocation4], %s218
          %s221 = sshll.u32 %s1, 4
          %s222 = int_to_ptr.vmem [resolvable:$true] %s221
          %224 = dma.vmem_to_smem %s222, 16, [#allocation2], [#allocation4]
        $region16: #{_lambda_.4} parent=11 // pred_fallthru
          _
        // Predicated region
        $region17: #{_lambda_.4} parent=11 // pred_check
          %p225 = pneg %p101
        $region18: #{_lambda_.4} parent=11 // pred_check_branch
          %227 = sbr.rel (%p225) target = $region20
        $region19: #{_lambda_.4} parent=11 // pred_region
          %s229 = ssub.s32 16, 16
          %230 = vsyncadd [#allocation6], %s229
          %s232 = sshll.u32 %s2, 4
          %s233 = int_to_ptr.vmem [resolvable:$true] %s232
          %235 = dma.vmem_to_smem %s233, 16, [#allocation5], [#allocation6]
        $region20: #{_lambda_.4} parent=11 // pred_fallthru
          _
        // Predicated region
        $region21: #{_lambda_.4} parent=11 // pred_check
          %p236 = pneg %p122
        $region22: #{_lambda_.4} parent=11 // pred_check_branch
          %238 = sbr.rel (%p236) target = $region24
        $region23: #{_lambda_.4} parent=11 // pred_region
          %s240 = ssub.s32 16, 16
          %241 = vsyncadd [#allocation6], %s240
          %s243 = sshll.u32 %s3, 4
          %s244 = int_to_ptr.vmem [resolvable:$true] %s243
          %246 = dma.vmem_to_smem %s244, 16, [#allocation7], [#allocation6]
        $region24: #{_lambda_.4} parent=11 // pred_fallthru
          _
        // Predicated region
        $region25: #{_lambda_.4} parent=11 // pred_check
          %p247 = pneg %p143
        $region26: #{_lambda_.4} parent=11 // pred_check_branch
          %249 = sbr.rel (%p247) target = $region28
        $region27: #{_lambda_.4} parent=11 // pred_region
          %s251 = ssub.s32 16, 16
          %252 = vsyncadd [#allocation9], %s251
          %s254 = sshll.u32 %s4, 4
          %s255 = int_to_ptr.vmem [resolvable:$true] %s254
          %257 = dma.vmem_to_smem %s255, 16, [#allocation8], [#allocation9]
        $region28: #{_lambda_.4} parent=11 // pred_fallthru
          _
      $region12: #{_lambda_.4} parent=5 // pred_fallthru
        _
      %p258 = scmp.lt.s32.totalorder %s19, 2
      // Predicated region
      $region29: #{_lambda_.4} parent=5 // pred_check
        %p259 = pneg %p258
      $region30: #{_lambda_.4} parent=5 // pred_check_branch
        %261 = sbr.rel (%p259) target = $region32
      $region31: #{_lambda_.4} parent=5 // pred_region
        // Predicated region
        $region33: #{_lambda_.4} parent=31 // pred_check
          %p262 = pneg %p53
        $region34: #{_lambda_.4} parent=31 // pred_check_branch
          %264 = sbr.rel (%p262) target = $region36
        $region35: #{_lambda_.4} parent=31 // pred_region
          %s265 = smul.u32 2, %s27
          %p266 = scmp.lt.s32.totalorder %s26, 1
          %s267 = scalar_select %p266, %s26, 1
          %p268 = scmp.lt.s32.totalorder %s265, 1
          %s269 = scalar_select %p268, %s265, 1
          %s270 = smul.addr %s267, 8
          %s271 = sadd.s32 %s269, %s270
          %s272 = smul.addr %s271, 8
          %s273 = scalar_lea.vmem %s0, %s272
          %s274 = smul.u32 2, %s27
        $region36: #{_lambda_.4} parent=31 // pred_fallthru
          _
      $region32: #{_lambda_.4} parent=5 // pred_fallthru
        _
      %p275 = scmp.le.s32.totalorder 1, %s19
      %p276 = scmp.lt.s32.totalorder %s19, 3
      %p277 = pnand %p275, %p276
      %p278 = pneg %p277
      // Predicated region
      $region37: #{_lambda_.4} parent=5 // pred_check
        _
      $region38: #{_lambda_.4} parent=5 // pred_check_branch
        %280 = sbr.rel (%p277) target = $region40
      $region39: #{_lambda_.4} parent=5 // pred_region
        %s281 = ssub.s32 %s19, 1
        // Predicated region
        $region41: #{_lambda_.4} parent=39 // pred_check
          %p282 = pneg %p80
        $region42: #{_lambda_.4} parent=39 // pred_check_branch
          %284 = sbr.rel (%p282) target = $region44
        $region43: #{_lambda_.4} parent=39 // pred_region
          %285 = dma.done [#allocation4], 16
        $region44: #{_lambda_.4} parent=39 // pred_fallthru
          _
        // Predicated region
        $region45: #{_lambda_.4} parent=39 // pred_check
          %p286 = pneg %p101
        $region46: #{_lambda_.4} parent=39 // pred_check_branch
          %288 = sbr.rel (%p286) target = $region48
        $region47: #{_lambda_.4} parent=39 // pred_region
          %289 = dma.done [#allocation6], 16
        $region48: #{_lambda_.4} parent=39 // pred_fallthru
          _
        // Predicated region
        $region49: #{_lambda_.4} parent=39 // pred_check
          %p290 = pneg %p122
        $region50: #{_lambda_.4} parent=39 // pred_check_branch
          %292 = sbr.rel (%p290) target = $region52
        $region51: #{_lambda_.4} parent=39 // pred_region
          %293 = dma.done [#allocation6], 16
        $region52: #{_lambda_.4} parent=39 // pred_fallthru
          _
        // Predicated region
        $region53: #{_lambda_.4} parent=39 // pred_check
          %p294 = pneg %p143
        $region54: #{_lambda_.4} parent=39 // pred_check_branch
          %296 = sbr.rel (%p294) target = $region56
        $region55: #{_lambda_.4} parent=39 // pred_region
          %297 = dma.done [#allocation9], 16
        $region56: #{_lambda_.4} parent=39 // pred_fallthru
          _
        %298 = sfence
        %s299 = smul.u32 2, %s29
        %p300 = scmp.lt.s32.totalorder %s28, 1
        %s301 = scalar_select %p300, %s28, 1
        %p302 = scmp.lt.s32.totalorder %s299, 1
        %s303 = scalar_select %p302, %s299, 1
        %s304 = smul.addr %s301, 8
        %s305 = sadd.s32 %s303, %s304
        %s306 = smul.addr %s305, 8
        %s307 = scalar_lea.vmem %s0, %s306
        %p308 = pneg %p59
        %p309 = pneg %p56
        %p310 = pneg %p80
        %p311 = pneg %p77
        %p312 = pneg %p101
        %p313 = pneg %p98
        %p314 = pneg %p122
        %p315 = pneg %p119
        %p316 = pneg %p143
        %p317 = pneg %p140
        %p318 = pneg %p171
        %p319 = pneg %p168
        %s320 = sand.u32 %s158, 1
        %s321 = scalar_lea.sflag [#allocation3], %s320
        %s322 = sand.u32 %s158, 1
        %s323 = smul.addr %s322, 64
        %s324 = scalar_lea.vmem [#allocation10], %s323
        %p325 = pneg %p199
        %p326 = pneg %p196
        %s327 = sadd.s32 %s28, %s29
        %p328 = scmp.lt.s32.totalorder %s327, 1
        %s329 = scalar_select %p328, %s327, 1
        %s330 = smul.addr %s329, 2
        %s331 = smul.addr %s330, 4
        %s332 = scalar_lea.vmem %s6, %s331
        %s333 = smul.u32 2, %s29
        %p334 = scmp.lt.s32.totalorder %s28, 1
        %s335 = scalar_select %p334, %s28, 1
        %p336 = scmp.lt.s32.totalorder %s333, 1
        %s337 = scalar_select %p336, %s333, 1
        %s338 = smul.addr %s335, 8
        %s339 = sadd.s32 %s337, %s338
        %s340 = smul.addr %s339, 8
        %s341 = scalar_lea.vmem %s0, %s340
        %s342 = smul.u32 2, %s29
        %s343 = smul.u32 2, %s29
        %s344 = sadd.s32 %s28, %s29
        %p345 = scmp.lt.s32.totalorder %s344, 1
        %s346 = scalar_select %p345, %s344, 1
        %s347 = smul.addr %s346, 2
        %s348 = smul.addr %s347, 4
        %s349 = scalar_lea.vmem %s6, %s348
        %s350 = sadd.s32 %s28, %s29
        %v351 = vld [vmem:[%s341] sm:$0xff]
        %v352 = vld [vmem:[%s341 + $0x8] sm:$0xff]
        %s353 = sld [smem:[#allocation7]]
        %v354 = vstv %s353
        %v355 = vmul.f32 %v351, %v354
        %v356 = vmul.f32 %v352, %v354
        %s357 = sld [smem:[#allocation8]]
        %v358 = vstv %s357
        %v359 = vadd.f32 %v355, %v358
        %v360 = vadd.f32 %v356, %v358
        %363 = vrot.lane.b32.xlu0 %v359, 1
        %v364 = vpop.permute.xlu0 %363
        %365 = vrot.lane.b32.xlu0 %v360, 1
        %v366 = vpop.permute.xlu0 %365
        %vm369 = vcmask 7168
        %v370 = vsel %vm369, 0.0, %v364
        %v371 = vsel %vm369, 0.0, %v366
        %vm372 = vcmask 138240
        %v373 = vsel %vm372, %v370, 0.0
        %v374 = vsel %vm372, %v371, 0.0
        %s375 = sld [smem:[#allocation2]]
        %v376 = vstv %s375
        %v377 = vmul.f32 %v373, %v376
        %v378 = vmul.f32 %v374, %v376
        %s379 = sld [smem:[#allocation2 + $0xc]]
        %v380 = vstv %s379
        %v381 = vmul.f32 %v373, %v380
        %v382 = vmul.f32 %v374, %v380
        %s383 = sld [smem:[#allocation2 + $0x18]]
        %v384 = vstv %s383
        %v385 = vmul.f32 %v373, %v384
        %v386 = vmul.f32 %v374, %v384
        %s387 = sld [smem:[#allocation2 + $0x24]]
        %v388 = vstv %s387
        %v389 = vmul.f32 %v373, %v388
        %v390 = vmul.f32 %v374, %v388
        %s391 = sld [smem:[#allocation2 + $0x1]]
        %v392 = vstv %s391
        %v393 = vmul.f32 %v373, %v392
        %v394 = vmul.f32 %v374, %v392
        %397 = vrot.lane.b32.xlu0 %v393, 127
        %v398 = vpop.permute.xlu0 %397
        %399 = vrot.lane.b32.xlu0 %v394, 127
        %v400 = vpop.permute.xlu0 %399
        %v403 = vadd.f32 %v377, %v398
        %v404 = vadd.f32 %v378, %v400
        %s405 = sld [smem:[#allocation2 + $0xd]]
        %v406 = vstv %s405
        %v407 = vmul.f32 %v373, %v406
        %v408 = vmul.f32 %v374, %v406
        %411 = vrot.lane.b32.xlu0 %v407, 127
        %v412 = vpop.permute.xlu0 %411
        %413 = vrot.lane.b32.xlu0 %v408, 127
        %v414 = vpop.permute.xlu0 %413
        %v417 = vadd.f32 %v381, %v412
        %v418 = vadd.f32 %v382, %v414
        %s419 = sld [smem:[#allocation2 + $0x19]]
        %v420 = vstv %s419
        %v421 = vmul.f32 %v373, %v420
        %v422 = vmul.f32 %v374, %v420
        %425 = vrot.lane.b32.xlu0 %v421, 127
        %v426 = vpop.permute.xlu0 %425
        %427 = vrot.lane.b32.xlu0 %v422, 127
        %v428 = vpop.permute.xlu0 %427
        %v431 = vadd.f32 %v385, %v426
        %v432 = vadd.f32 %v386, %v428
        %s433 = sld [smem:[#allocation2 + $0x25]]
        %v434 = vstv %s433
        %v435 = vmul.f32 %v373, %v434
        %v436 = vmul.f32 %v374, %v434
        %439 = vrot.lane.b32.xlu0 %v435, 127
        %v440 = vpop.permute.xlu0 %439
        %441 = vrot.lane.b32.xlu0 %v436, 127
        %v442 = vpop.permute.xlu0 %441
        %v445 = vadd.f32 %v389, %v440
        %v446 = vadd.f32 %v390, %v442
        %s447 = sld [smem:[#allocation2 + $0x2]]
        %v448 = vstv %s447
        %v449 = vmul.f32 %v373, %v448
        %v450 = vmul.f32 %v374, %v448
        %453 = vrot.lane.b32.xlu0 %v449, 126
        %v454 = vpop.permute.xlu0 %453
        %455 = vrot.lane.b32.xlu0 %v450, 126
        %v456 = vpop.permute.xlu0 %455
        %v459 = vadd.f32 %v403, %v454
        %v460 = vadd.f32 %v404, %v456
        %s461 = sld [smem:[#allocation2 + $0xe]]
        %v462 = vstv %s461
        %v463 = vmul.f32 %v373, %v462
        %v464 = vmul.f32 %v374, %v462
        %467 = vrot.lane.b32.xlu0 %v463, 126
        %v468 = vpop.permute.xlu0 %467
        %469 = vrot.lane.b32.xlu0 %v464, 126
        %v470 = vpop.permute.xlu0 %469
        %v473 = vadd.f32 %v417, %v468
        %v474 = vadd.f32 %v418, %v470
        %s475 = sld [smem:[#allocation2 + $0x1a]]
        %v476 = vstv %s475
        %v477 = vmul.f32 %v373, %v476
        %v478 = vmul.f32 %v374, %v476
        %481 = vrot.lane.b32.xlu0 %v477, 126
        %v482 = vpop.permute.xlu0 %481
        %483 = vrot.lane.b32.xlu0 %v478, 126
        %v484 = vpop.permute.xlu0 %483
        %v487 = vadd.f32 %v431, %v482
        %v488 = vadd.f32 %v432, %v484
        %s489 = sld [smem:[#allocation2 + $0x26]]
        %v490 = vstv %s489
        %v491 = vmul.f32 %v373, %v490
        %v492 = vmul.f32 %v374, %v490
        %495 = vrot.lane.b32.xlu0 %v491, 126
        %v496 = vpop.permute.xlu0 %495
        %497 = vrot.lane.b32.xlu0 %v492, 126
        %v498 = vpop.permute.xlu0 %497
        %v501 = vadd.f32 %v445, %v496
        %v502 = vadd.f32 %v446, %v498
        %s503 = scalar_lea.vmem %s341, 16
        %v504 = vld [vmem:[%s503] sm:$0xff]
        %v505 = vld [vmem:[%s503 + $0x8] sm:$0xff]
        %s506 = sld [smem:[#allocation7 + $0x1]]
        %v507 = vstv %s506
        %v508 = vmul.f32 %v504, %v507
        %v509 = vmul.f32 %v505, %v507
        %s510 = sld [smem:[#allocation8 + $0x1]]
        %v511 = vstv %s510
        %v512 = vadd.f32 %v508, %v511
        %v513 = vadd.f32 %v509, %v511
        %516 = vrot.lane.b32.xlu0 %v512, 1
        %v517 = vpop.permute.xlu0 %516
        %518 = vrot.lane.b32.xlu0 %v513, 1
        %v519 = vpop.permute.xlu0 %518
        %v522 = vsel %vm369, 0.0, %v517
        %v523 = vsel %vm369, 0.0, %v519
        %v524 = vsel %vm372, %v522, 0.0
        %v525 = vsel %vm372, %v523, 0.0
        %s526 = sld [smem:[#allocation2 + $0x3]]
        %v527 = vstv %s526
        %v528 = vmul.f32 %v524, %v527
        %v529 = vmul.f32 %v525, %v527
        %v530 = vadd.f32 %v459, %v528
        %v531 = vadd.f32 %v460, %v529
        %s532 = sld [smem:[#allocation2 + $0xf]]
        %v533 = vstv %s532
        %v534 = vmul.f32 %v524, %v533
        %v535 = vmul.f32 %v525, %v533
        %v536 = vadd.f32 %v473, %v534
        %v537 = vadd.f32 %v474, %v535
        %s538 = sld [smem:[#allocation2 + $0x1b]]
        %v539 = vstv %s538
        %v540 = vmul.f32 %v524, %v539
        %v541 = vmul.f32 %v525, %v539
        %v542 = vadd.f32 %v487, %v540
        %v543 = vadd.f32 %v488, %v541
        %s544 = sld [smem:[#allocation2 + $0x27]]
        %v545 = vstv %s544
        %v546 = vmul.f32 %v524, %v545
        %v547 = vmul.f32 %v525, %v545
        %v548 = vadd.f32 %v501, %v546
        %v549 = vadd.f32 %v502, %v547
        %s550 = sld [smem:[#allocation2 + $0x4]]
        %v551 = vstv %s550
        %v552 = vmul.f32 %v524, %v551
        %v553 = vmul.f32 %v525, %v551
        %556 = vrot.lane.b32.xlu0 %v552, 127
        %v557 = vpop.permute.xlu0 %556
        %558 = vrot.lane.b32.xlu0 %v553, 127
        %v559 = vpop.permute.xlu0 %558
        %v562 = vadd.f32 %v530, %v557
        %v563 = vadd.f32 %v531, %v559
        %s564 = sld [smem:[#allocation2 + $0x10]]
        %v565 = vstv %s564
        %v566 = vmul.f32 %v524, %v565
        %v567 = vmul.f32 %v525, %v565
        %570 = vrot.lane.b32.xlu0 %v566, 127
        %v571 = vpop.permute.xlu0 %570
        %572 = vrot.lane.b32.xlu0 %v567, 127
        %v573 = vpop.permute.xlu0 %572
        %v576 = vadd.f32 %v536, %v571
        %v577 = vadd.f32 %v537, %v573
        %s578 = sld [smem:[#allocation2 + $0x1c]]
        %v579 = vstv %s578
        %v580 = vmul.f32 %v524, %v579
        %v581 = vmul.f32 %v525, %v579
        %584 = vrot.lane.b32.xlu0 %v580, 127
        %v585 = vpop.permute.xlu0 %584
        %586 = vrot.lane.b32.xlu0 %v581, 127
        %v587 = vpop.permute.xlu0 %586
        %v590 = vadd.f32 %v542, %v585
        %v591 = vadd.f32 %v543, %v587
        %s592 = sld [smem:[#allocation2 + $0x28]]
        %v593 = vstv %s592
        %v594 = vmul.f32 %v524, %v593
        %v595 = vmul.f32 %v525, %v593
        %598 = vrot.lane.b32.xlu0 %v594, 127
        %v599 = vpop.permute.xlu0 %598
        %600 = vrot.lane.b32.xlu0 %v595, 127
        %v601 = vpop.permute.xlu0 %600
        %v604 = vadd.f32 %v548, %v599
        %v605 = vadd.f32 %v549, %v601
        %s606 = sld [smem:[#allocation2 + $0x5]]
        %v607 = vstv %s606
        %v608 = vmul.f32 %v524, %v607
        %v609 = vmul.f32 %v525, %v607
        %612 = vrot.lane.b32.xlu0 %v608, 126
        %v613 = vpop.permute.xlu0 %612
        %614 = vrot.lane.b32.xlu0 %v609, 126
        %v615 = vpop.permute.xlu0 %614
        %v618 = vadd.f32 %v562, %v613
        %v619 = vadd.f32 %v563, %v615
        %s620 = sld [smem:[#allocation2 + $0x11]]
        %v621 = vstv %s620
        %v622 = vmul.f32 %v524, %v621
        %v623 = vmul.f32 %v525, %v621
        %626 = vrot.lane.b32.xlu0 %v622, 126
        %v627 = vpop.permute.xlu0 %626
        %628 = vrot.lane.b32.xlu0 %v623, 126
        %v629 = vpop.permute.xlu0 %628
        %v632 = vadd.f32 %v576, %v627
        %v633 = vadd.f32 %v577, %v629
        %s634 = sld [smem:[#allocation2 + $0x1d]]
        %v635 = vstv %s634
        %v636 = vmul.f32 %v524, %v635
        %v637 = vmul.f32 %v525, %v635
        %640 = vrot.lane.b32.xlu0 %v636, 126
        %v641 = vpop.permute.xlu0 %640
        %642 = vrot.lane.b32.xlu0 %v637, 126
        %v643 = vpop.permute.xlu0 %642
        %v646 = vadd.f32 %v590, %v641
        %v647 = vadd.f32 %v591, %v643
        %s648 = sld [smem:[#allocation2 + $0x29]]
        %v649 = vstv %s648
        %v650 = vmul.f32 %v524, %v649
        %v651 = vmul.f32 %v525, %v649
        %654 = vrot.lane.b32.xlu0 %v650, 126
        %v655 = vpop.permute.xlu0 %654
        %656 = vrot.lane.b32.xlu0 %v651, 126
        %v657 = vpop.permute.xlu0 %656
        %v660 = vadd.f32 %v604, %v655
        %v661 = vadd.f32 %v605, %v657
        %s662 = scalar_lea.vmem %s341, 32
        %v663 = vld [vmem:[%s662] sm:$0xff]
        %v664 = vld [vmem:[%s662 + $0x8] sm:$0xff]
        %s665 = sld [smem:[#allocation7 + $0x2]]
        %v666 = vstv %s665
        %v667 = vmul.f32 %v663, %v666
        %v668 = vmul.f32 %v664, %v666
        %s669 = sld [smem:[#allocation8 + $0x2]]
        %v670 = vstv %s669
        %v671 = vadd.f32 %v667, %v670
        %v672 = vadd.f32 %v668, %v670
        %675 = vrot.lane.b32.xlu0 %v671, 1
        %v676 = vpop.permute.xlu0 %675
        %677 = vrot.lane.b32.xlu0 %v672, 1
        %v678 = vpop.permute.xlu0 %677
        %v681 = vsel %vm369, 0.0, %v676
        %v682 = vsel %vm369, 0.0, %v678
        %v683 = vsel %vm372, %v681, 0.0
        %v684 = vsel %vm372, %v682, 0.0
        %s685 = sld [smem:[#allocation2 + $0x6]]
        %v686 = vstv %s685
        %v687 = vmul.f32 %v683, %v686
        %v688 = vmul.f32 %v684, %v686
        %v689 = vadd.f32 %v618, %v687
        %v690 = vadd.f32 %v619, %v688
        %s691 = sld [smem:[#allocation2 + $0x12]]
        %v692 = vstv %s691
        %v693 = vmul.f32 %v683, %v692
        %v694 = vmul.f32 %v684, %v692
        %v695 = vadd.f32 %v632, %v693
        %v696 = vadd.f32 %v633, %v694
        %s697 = sld [smem:[#allocation2 + $0x1e]]
        %v698 = vstv %s697
        %v699 = vmul.f32 %v683, %v698
        %v700 = vmul.f32 %v684, %v698
        %v701 = vadd.f32 %v646, %v699
        %v702 = vadd.f32 %v647, %v700
        %s703 = sld [smem:[#allocation2 + $0x2a]]
        %v704 = vstv %s703
        %v705 = vmul.f32 %v683, %v704
        %v706 = vmul.f32 %v684, %v704
        %v707 = vadd.f32 %v660, %v705
        %v708 = vadd.f32 %v661, %v706
        %s709 = sld [smem:[#allocation2 + $0x7]]
        %v710 = vstv %s709
        %v711 = vmul.f32 %v683, %v710
        %v712 = vmul.f32 %v684, %v710
        %715 = vrot.lane.b32.xlu0 %v711, 127
        %v716 = vpop.permute.xlu0 %715
        %717 = vrot.lane.b32.xlu0 %v712, 127
        %v718 = vpop.permute.xlu0 %717
        %v721 = vadd.f32 %v689, %v716
        %v722 = vadd.f32 %v690, %v718
        %s723 = sld [smem:[#allocation2 + $0x13]]
        %v724 = vstv %s723
        %v725 = vmul.f32 %v683, %v724
        %v726 = vmul.f32 %v684, %v724
        %729 = vrot.lane.b32.xlu0 %v725, 127
        %v730 = vpop.permute.xlu0 %729
        %731 = vrot.lane.b32.xlu0 %v726, 127
        %v732 = vpop.permute.xlu0 %731
        %v735 = vadd.f32 %v695, %v730
        %v736 = vadd.f32 %v696, %v732
        %s737 = sld [smem:[#allocation2 + $0x1f]]
        %v738 = vstv %s737
        %v739 = vmul.f32 %v683, %v738
        %v740 = vmul.f32 %v684, %v738
        %743 = vrot.lane.b32.xlu0 %v739, 127
        %v744 = vpop.permute.xlu0 %743
        %745 = vrot.lane.b32.xlu0 %v740, 127
        %v746 = vpop.permute.xlu0 %745
        %v749 = vadd.f32 %v701, %v744
        %v750 = vadd.f32 %v702, %v746
        %s751 = sld [smem:[#allocation2 + $0x2b]]
        %v752 = vstv %s751
        %v753 = vmul.f32 %v683, %v752
        %v754 = vmul.f32 %v684, %v752
        %757 = vrot.lane.b32.xlu0 %v753, 127
        %v758 = vpop.permute.xlu0 %757
        %759 = vrot.lane.b32.xlu0 %v754, 127
        %v760 = vpop.permute.xlu0 %759
        %v763 = vadd.f32 %v707, %v758
        %v764 = vadd.f32 %v708, %v760
        %s765 = sld [smem:[#allocation2 + $0x8]]
        %v766 = vstv %s765
        %v767 = vmul.f32 %v683, %v766
        %v768 = vmul.f32 %v684, %v766
        %771 = vrot.lane.b32.xlu0 %v767, 126
        %v772 = vpop.permute.xlu0 %771
        %773 = vrot.lane.b32.xlu0 %v768, 126
        %v774 = vpop.permute.xlu0 %773
        %v777 = vadd.f32 %v721, %v772
        %v778 = vadd.f32 %v722, %v774
        %s779 = sld [smem:[#allocation2 + $0x14]]
        %v780 = vstv %s779
        %v781 = vmul.f32 %v683, %v780
        %v782 = vmul.f32 %v684, %v780
        %785 = vrot.lane.b32.xlu0 %v781, 126
        %v786 = vpop.permute.xlu0 %785
        %787 = vrot.lane.b32.xlu0 %v782, 126
        %v788 = vpop.permute.xlu0 %787
        %v791 = vadd.f32 %v735, %v786
        %v792 = vadd.f32 %v736, %v788
        %s793 = sld [smem:[#allocation2 + $0x20]]
        %v794 = vstv %s793
        %v795 = vmul.f32 %v683, %v794
        %v796 = vmul.f32 %v684, %v794
        %799 = vrot.lane.b32.xlu0 %v795, 126
        %v800 = vpop.permute.xlu0 %799
        %801 = vrot.lane.b32.xlu0 %v796, 126
        %v802 = vpop.permute.xlu0 %801
        %v805 = vadd.f32 %v749, %v800
        %v806 = vadd.f32 %v750, %v802
        %s807 = sld [smem:[#allocation2 + $0x2c]]
        %v808 = vstv %s807
        %v809 = vmul.f32 %v683, %v808
        %v810 = vmul.f32 %v684, %v808
        %813 = vrot.lane.b32.xlu0 %v809, 126
        %v814 = vpop.permute.xlu0 %813
        %815 = vrot.lane.b32.xlu0 %v810, 126
        %v816 = vpop.permute.xlu0 %815
        %v819 = vadd.f32 %v763, %v814
        %v820 = vadd.f32 %v764, %v816
        %s821 = scalar_lea.vmem %s341, 48
        %v822 = vld [vmem:[%s821] sm:$0xff]
        %v823 = vld [vmem:[%s821 + $0x8] sm:$0xff]
        %s824 = sld [smem:[#allocation7 + $0x3]]
        %v825 = vstv %s824
        %v826 = vmul.f32 %v822, %v825
        %v827 = vmul.f32 %v823, %v825
        %s828 = sld [smem:[#allocation8 + $0x3]]
        %v829 = vstv %s828
        %v830 = vadd.f32 %v826, %v829
        %v831 = vadd.f32 %v827, %v829
        %834 = vrot.lane.b32.xlu0 %v830, 1
        %v835 = vpop.permute.xlu0 %834
        %836 = vrot.lane.b32.xlu0 %v831, 1
        %v837 = vpop.permute.xlu0 %836
        %v840 = vsel %vm369, 0.0, %v835
        %v841 = vsel %vm369, 0.0, %v837
        %v842 = vsel %vm372, %v840, 0.0
        %v843 = vsel %vm372, %v841, 0.0
        %s844 = sld [smem:[#allocation2 + $0x9]]
        %v845 = vstv %s844
        %v846 = vmul.f32 %v842, %v845
        %v847 = vmul.f32 %v843, %v845
        %v848 = vadd.f32 %v777, %v846
        %v849 = vadd.f32 %v778, %v847
        %s850 = sld [smem:[#allocation2 + $0x15]]
        %v851 = vstv %s850
        %v852 = vmul.f32 %v842, %v851
        %v853 = vmul.f32 %v843, %v851
        %v854 = vadd.f32 %v791, %v852
        %v855 = vadd.f32 %v792, %v853
        %s856 = sld [smem:[#allocation2 + $0x21]]
        %v857 = vstv %s856
        %v858 = vmul.f32 %v842, %v857
        %v859 = vmul.f32 %v843, %v857
        %v860 = vadd.f32 %v805, %v858
        %v861 = vadd.f32 %v806, %v859
        %s862 = sld [smem:[#allocation2 + $0x2d]]
        %v863 = vstv %s862
        %v864 = vmul.f32 %v842, %v863
        %v865 = vmul.f32 %v843, %v863
        %v866 = vadd.f32 %v819, %v864
        %v867 = vadd.f32 %v820, %v865
        %s868 = sld [smem:[#allocation2 + $0xa]]
        %v869 = vstv %s868
        %v870 = vmul.f32 %v842, %v869
        %v871 = vmul.f32 %v843, %v869
        %874 = vrot.lane.b32.xlu0 %v870, 127
        %v875 = vpop.permute.xlu0 %874
        %876 = vrot.lane.b32.xlu0 %v871, 127
        %v877 = vpop.permute.xlu0 %876
        %v880 = vadd.f32 %v848, %v875
        %v881 = vadd.f32 %v849, %v877
        %s882 = sld [smem:[#allocation2 + $0x16]]
        %v883 = vstv %s882
        %v884 = vmul.f32 %v842, %v883
        %v885 = vmul.f32 %v843, %v883
        %888 = vrot.lane.b32.xlu0 %v884, 127
        %v889 = vpop.permute.xlu0 %888
        %890 = vrot.lane.b32.xlu0 %v885, 127
        %v891 = vpop.permute.xlu0 %890
        %v894 = vadd.f32 %v854, %v889
        %v895 = vadd.f32 %v855, %v891
        %s896 = sld [smem:[#allocation2 + $0x22]]
        %v897 = vstv %s896
        %v898 = vmul.f32 %v842, %v897
        %v899 = vmul.f32 %v843, %v897
        %902 = vrot.lane.b32.xlu0 %v898, 127
        %v903 = vpop.permute.xlu0 %902
        %904 = vrot.lane.b32.xlu0 %v899, 127
        %v905 = vpop.permute.xlu0 %904
        %v908 = vadd.f32 %v860, %v903
        %v909 = vadd.f32 %v861, %v905
        %s910 = sld [smem:[#allocation2 + $0x2e]]
        %v911 = vstv %s910
        %v912 = vmul.f32 %v842, %v911
        %v913 = vmul.f32 %v843, %v911
        %916 = vrot.lane.b32.xlu0 %v912, 127
        %v917 = vpop.permute.xlu0 %916
        %918 = vrot.lane.b32.xlu0 %v913, 127
        %v919 = vpop.permute.xlu0 %918
        %v922 = vadd.f32 %v866, %v917
        %v923 = vadd.f32 %v867, %v919
        %s924 = sld [smem:[#allocation2 + $0xb]]
        %v925 = vstv %s924
        %v926 = vmul.f32 %v842, %v925
        %v927 = vmul.f32 %v843, %v925
        %930 = vrot.lane.b32.xlu0 %v926, 126
        %v931 = vpop.permute.xlu0 %930
        %932 = vrot.lane.b32.xlu0 %v927, 126
        %v933 = vpop.permute.xlu0 %932
        %v936 = vadd.f32 %v880, %v931
        %v937 = vadd.f32 %v881, %v933
        %s938 = sld [smem:[#allocation2 + $0x17]]
        %v939 = vstv %s938
        %v940 = vmul.f32 %v842, %v939
        %v941 = vmul.f32 %v843, %v939
        %944 = vrot.lane.b32.xlu0 %v940, 126
        %v945 = vpop.permute.xlu0 %944
        %946 = vrot.lane.b32.xlu0 %v941, 126
        %v947 = vpop.permute.xlu0 %946
        %v950 = vadd.f32 %v894, %v945
        %v951 = vadd.f32 %v895, %v947
        %s952 = sld [smem:[#allocation2 + $0x23]]
        %v953 = vstv %s952
        %v954 = vmul.f32 %v842, %v953
        %v955 = vmul.f32 %v843, %v953
        %958 = vrot.lane.b32.xlu0 %v954, 126
        %v959 = vpop.permute.xlu0 %958
        %960 = vrot.lane.b32.xlu0 %v955, 126
        %v961 = vpop.permute.xlu0 %960
        %v964 = vadd.f32 %v908, %v959
        %v965 = vadd.f32 %v909, %v961
        %s966 = sld [smem:[#allocation2 + $0x2f]]
        %v967 = vstv %s966
        %v968 = vmul.f32 %v842, %v967
        %v969 = vmul.f32 %v843, %v967
        %972 = vrot.lane.b32.xlu0 %v968, 126
        %v973 = vpop.permute.xlu0 %972
        %974 = vrot.lane.b32.xlu0 %v969, 126
        %v975 = vpop.permute.xlu0 %974
        %v978 = vadd.f32 %v922, %v973
        %v979 = vadd.f32 %v923, %v975
        %s980 = sld [smem:[#allocation5]]
        %v981 = vstv %s980
        %v982 = vadd.f32 %v936, %v981
        %v983 = vadd.f32 %v937, %v981
        %vm984 = vcmask 130048
        %985 = vst.msk [vmem:[%s324] sm:$0xff] %vm984, %v982
        %986 = vst.msk [vmem:[%s324 + $0x8] sm:$0xff] %vm984, %v983
        %v987 = vsel %vm984, %v982, 0.0
        %v988 = vsel %vm984, %v983, 0.0
        %v989 = vadd.f32 %v987, %v988
        %v990 = vrot.slane %v989, 4
        %v991 = vadd.f32 %v989, %v990
        %v992 = vrot.slane %v991, 2
        %v993 = vadd.f32 %v991, %v992
        %v994 = vrot.slane %v993, 1
        %v995 = vadd.f32 %v993, %v994
        %vm996 = vcmask 122880
        %997 = vst.msk [vmem:[%s349] sm:$0x1] %vm996, %v995
        %v998 = vmul.f32 %v982, %v982
        %v999 = vmul.f32 %v983, %v983
        %v1000 = vsel %vm984, %v998, 0.0
        %v1001 = vsel %vm984, %v999, 0.0
        %v1002 = vadd.f32 %v1000, %v1001
        %v1003 = vrot.slane %v1002, 4
        %v1004 = vadd.f32 %v1002, %v1003
        %v1005 = vrot.slane %v1004, 2
        %v1006 = vadd.f32 %v1004, %v1005
        %v1007 = vrot.slane %v1006, 1
        %v1008 = vadd.f32 %v1006, %v1007
        %s1009 = scalar_lea.vmem %s349, 4
        %1010 = vst.msk [vmem:[%s1009] sm:$0x1] %vm996, %v1008
        %s1011 = sld [smem:[#allocation5 + $0x1]]
        %v1012 = vstv %s1011
        %v1013 = vadd.f32 %v950, %v1012
        %v1014 = vadd.f32 %v951, %v1012
        %s1015 = scalar_lea.vmem %s324, 16 [#allocation10]
        %1016 = vst.msk [vmem:[%s1015] sm:$0xff] %vm984, %v1013
        %1017 = vst.msk [vmem:[%s1015 + $0x8] sm:$0xff] %vm984, %v1014
        %v1018 = vsel %vm984, %v1013, 0.0
        %v1019 = vsel %vm984, %v1014, 0.0
        %v1020 = vadd.f32 %v1018, %v1019
        %v1021 = vrot.slane %v1020, 4
        %v1022 = vadd.f32 %v1020, %v1021
        %v1023 = vrot.slane %v1022, 2
        %v1024 = vadd.f32 %v1022, %v1023
        %v1025 = vrot.slane %v1024, 1
        %v1026 = vadd.f32 %v1024, %v1025
        %1027 = vst.msk [vmem:[%s349 + $0x1] sm:$0x1] %vm996, %v1026
        %v1028 = vmul.f32 %v1013, %v1013
        %v1029 = vmul.f32 %v1014, %v1014
        %v1030 = vsel %vm984, %v1028, 0.0
        %v1031 = vsel %vm984, %v1029, 0.0
        %v1032 = vadd.f32 %v1030, %v1031
        %v1033 = vrot.slane %v1032, 4
        %v1034 = vadd.f32 %v1032, %v1033
        %v1035 = vrot.slane %v1034, 2
        %v1036 = vadd.f32 %v1034, %v1035
        %v1037 = vrot.slane %v1036, 1
        %v1038 = vadd.f32 %v1036, %v1037
        %1039 = vst.msk [vmem:[%s1009 + $0x1] sm:$0x1] %vm996, %v1038
        %s1040 = sld [smem:[#allocation5 + $0x2]]
        %v1041 = vstv %s1040
        %v1042 = vadd.f32 %v964, %v1041
        %v1043 = vadd.f32 %v965, %v1041
        %s1044 = scalar_lea.vmem %s324, 32 [#allocation10]
        %1045 = vst.msk [vmem:[%s1044] sm:$0xff] %vm984, %v1042
        %1046 = vst.msk [vmem:[%s1044 + $0x8] sm:$0xff] %vm984, %v1043
        %v1047 = vsel %vm984, %v1042, 0.0
        %v1048 = vsel %vm984, %v1043, 0.0
        %v1049 = vadd.f32 %v1047, %v1048
        %v1050 = vrot.slane %v1049, 4
        %v1051 = vadd.f32 %v1049, %v1050
        %v1052 = vrot.slane %v1051, 2
        %v1053 = vadd.f32 %v1051, %v1052
        %v1054 = vrot.slane %v1053, 1
        %v1055 = vadd.f32 %v1053, %v1054
        %1056 = vst.msk [vmem:[%s349 + $0x2] sm:$0x1] %vm996, %v1055
        %v1057 = vmul.f32 %v1042, %v1042
        %v1058 = vmul.f32 %v1043, %v1043
        %v1059 = vsel %vm984, %v1057, 0.0
        %v1060 = vsel %vm984, %v1058, 0.0
        %v1061 = vadd.f32 %v1059, %v1060
        %v1062 = vrot.slane %v1061, 4
        %v1063 = vadd.f32 %v1061, %v1062
        %v1064 = vrot.slane %v1063, 2
        %v1065 = vadd.f32 %v1063, %v1064
        %v1066 = vrot.slane %v1065, 1
        %v1067 = vadd.f32 %v1065, %v1066
        %1068 = vst.msk [vmem:[%s1009 + $0x2] sm:$0x1] %vm996, %v1067
        %s1069 = sld [smem:[#allocation5 + $0x3]]
        %v1070 = vstv %s1069
        %v1071 = vadd.f32 %v978, %v1070
        %v1072 = vadd.f32 %v979, %v1070
        %s1073 = scalar_lea.vmem %s324, 48 [#allocation10]
        %1074 = vst.msk [vmem:[%s1073] sm:$0xff] %vm984, %v1071
        %1075 = vst.msk [vmem:[%s1073 + $0x8] sm:$0xff] %vm984, %v1072
        %v1076 = vsel %vm984, %v1071, 0.0
        %v1077 = vsel %vm984, %v1072, 0.0
        %v1078 = vadd.f32 %v1076, %v1077
        %v1079 = vrot.slane %v1078, 4
        %v1080 = vadd.f32 %v1078, %v1079
        %v1081 = vrot.slane %v1080, 2
        %v1082 = vadd.f32 %v1080, %v1081
        %v1083 = vrot.slane %v1082, 1
        %v1084 = vadd.f32 %v1082, %v1083
        %1085 = vst.msk [vmem:[%s349 + $0x3] sm:$0x1] %vm996, %v1084
        %v1086 = vmul.f32 %v1071, %v1071
        %v1087 = vmul.f32 %v1072, %v1072
        %v1088 = vsel %vm984, %v1086, 0.0
        %v1089 = vsel %vm984, %v1087, 0.0
        %v1090 = vadd.f32 %v1088, %v1089
        %v1091 = vrot.slane %v1090, 4
        %v1092 = vadd.f32 %v1090, %v1091
        %v1093 = vrot.slane %v1092, 2
        %v1094 = vadd.f32 %v1092, %v1093
        %v1095 = vrot.slane %v1094, 1
        %v1096 = vadd.f32 %v1094, %v1095
        %1097 = vst.msk [vmem:[%s1009 + $0x3] sm:$0x1] %vm996, %v1096
        %s1098 = sand.u32 %s158, 1
        %s1099 = scalar_lea.sflag [#allocation3], %s1098
        %s1100 = sand.u32 %s158, 1
        %s1101 = smul.addr %s1100, 64
        %s1102 = scalar_lea.vmem [#allocation10], %s1101
        %s1103 = sadd.s32 %s28, %s29
        %p1104 = scmp.lt.s32.totalorder %s1103, 1
        %s1105 = scalar_select %p1104, %s1103, 1
        %s1106 = smul.addr %s1105, 2
        %s1107 = smul.addr %s1106, 4
        %s1108 = scalar_lea.vmem %s6, %s1107
        // Predicated region
        $region57: #{_lambda_.4} parent=39 // pred_check
          %p1109 = pneg %p168
        $region58: #{_lambda_.4} parent=39 // pred_check_branch
          %1111 = sbr.rel (%p1109) target = $region60
        $region59: #{_lambda_.4} parent=39 // pred_region
          %s1112 = smul.u32 2, %s29
          %s1114 = ssub.s32 1024, 1024
          %1115 = vsyncadd %s1099, %s1114
          %s1116 = smul.addr %s28, 8
          %s1117 = sadd.s32 %s1112, %s1116
          %s1118 = smul.addr %s1117, 128
          %s1119 = scalar_lea.hbm %s5, %s1118
          %s1120 = sshll.u32 %s1102, 4
          %s1121 = int_to_ptr.vmem [resolvable:$true] %s1120
          %1126 = dma.vmem_to_hbm [thread:$0]  %s1121, 1024, %s1119, %s1099, 128, 128, 8
        $region60: #{_lambda_.4} parent=39 // pred_fallthru
          _
        // Predicated region
        $region61: #{_lambda_.4} parent=39 // pred_check
          %p1127 = pneg %p196
        $region62: #{_lambda_.4} parent=39 // pred_check_branch
          %1129 = sbr.rel (%p1127) target = $region64
        $region63: #{_lambda_.4} parent=39 // pred_region
          %s1130 = sadd.s32 %s28, %s29
        $region64: #{_lambda_.4} parent=39 // pred_fallthru
          _
      $region40: #{_lambda_.4} parent=5 // pred_fallthru
        _
      %p1131 = scmp.le.s32.totalorder 2, %s19
      // Predicated region
      $region65: #{_lambda_.4} parent=5 // pred_check
        %p1132 = pneg %p1131
      $region66: #{_lambda_.4} parent=5 // pred_check_branch
        %1134 = sbr.rel (%p1132) target = $region68
      $region67: #{_lambda_.4} parent=5 // pred_region
        %s1135 = ssub.s32 %s19, 2
        // Predicated region
        $region69: #{_lambda_.4} parent=67 // pred_check
          %p1136 = pneg %p174
        $region70: #{_lambda_.4} parent=67 // pred_check_branch
          %1138 = sbr.rel (%p1136) target = $region72
        $region71: #{_lambda_.4} parent=67 // pred_region
          %s1139 = sand.u32 %s159, 1
          %s1140 = scalar_lea.sflag [#allocation3], %s1139
          %s1141 = sand.u32 %s159, 1
          %s1142 = smul.addr %s1141, 64
          %s1143 = scalar_lea.vmem [#allocation10], %s1142
          %1144 = dma.done %s1140, 1024
        $region72: #{_lambda_.4} parent=67 // pred_fallthru
          _
        // Predicated region
        $region73: #{_lambda_.4} parent=67 // pred_check
          %p1145 = pneg %p202
        $region74: #{_lambda_.4} parent=67 // pred_check_branch
          %1147 = sbr.rel (%p1145) target = $region76
        $region75: #{_lambda_.4} parent=67 // pred_region
          %s1148 = sadd.s32 %s30, %s31
          %p1149 = scmp.lt.s32.totalorder %s1148, 1
          %s1150 = scalar_select %p1149, %s1148, 1
          %s1151 = smul.addr %s1150, 2
          %s1152 = smul.addr %s1151, 4
          %s1153 = scalar_lea.vmem %s6, %s1152
        $region76: #{_lambda_.4} parent=67 // pred_fallthru
          _
      $region68: #{_lambda_.4} parent=5 // pred_fallthru
        _
    $region6: #{_lambda_.4} parent=1 // loop_footer
      %s23 = sadd.s32 1, %s19
    $region7: #{_lambda_.4} parent=1 // loop_footer_branch
      %18 = sbr.rel target = $region3
    $region8: #{_lambda_.4} parent=1 // loop_exit
      _
    %1154 = vsyncpa [#allocation3], 1
    %s1155 = scalar_lea.sflag [#allocation3], 1
    %1156 = vsyncpa %s1155, 1
    %1157 = vsyncpa [#allocation4], 1
    %s1158 = scalar_lea.sflag [#allocation4], 1
    %1159 = vsyncpa %s1158, 1
    %1160 = vsyncpa [#allocation6], 1
    %1161 = vsyncpa [#allocation9], 1

// kernel: _lambda_.3
$region0: #{_lambda_.3}
  #allocation0 [shape = 'u32[]', space=smem, size = 0x4, offset = 0x4, fixed_abs, tag = 'smem constant byte address 0x4 - core index']
  #allocation1 [shape = 'u32[144,128]{1,0:T(1,128)}', space=vmem, size = 0x12000, scoped, tag = 'internal scratch']
  %s0 = inlined_call_operand.hbm [shape: f32[2,4,16,16], index: 0, kind: input, shape index: {}]
  %s1 = inlined_call_operand.vmem [shape: f32[48], index: 1, kind: input, shape index: {}]
  %s2 = inlined_call_operand.vmem [shape: f32[4], index: 2, kind: input, shape index: {}]
  %s3 = inlined_call_operand.vmem [shape: f32[2,4,16,16], index: 3, kind: output, shape index: {0}]
  %s4 = inlined_call_operand.vmem [shape: f32[2,2,4,16], index: 4, kind: output, shape index: {1}]
  %5 = xla_tuple %s3, %s4
  %s6 = sld [smem:[#allocation0]]
  $region65: #{_lambda_.3} parent=0
    _
  %s8 = ssub.s32 1, %s6
  %s9 = scalar_select 0, %s8, %s6
  $region1: #{_lambda_.3} parent=0
    #allocation2 [shape = 'u8[65536]{0}', space=vmem, size = 0x10000, scoped, tag = 'input window, operand 0']
    #allocation3 [shape = 's32[2]{0}', space=sflag, size = 0x8, scoped, tag = 'scoped memory for _lambda_.3']
    #allocation4 [shape = 's32[2]{0}', space=sflag, size = 0x8, scoped, tag = 'scoped memory for _lambda_.3']
    #allocation5 [shape = 'u8[512]{0}', space=smem, size = 0x200, scoped, tag = 'input window, operand 1, single buffered']
    #allocation6 [shape = 'u8[512]{0}', space=smem, size = 0x200, scoped, tag = 'input window, operand 2, single buffered']
    #allocation7 [shape = 's32[1]{0}', space=sflag, size = 0x4, scoped, tag = 'scoped memory for _lambda_.3']
    %10 = vsyncpa [#allocation3], 0
    %s11 = scalar_lea.sflag [#allocation3], 1
    %12 = vsyncpa %s11, 0
    %13 = vsyncpa [#allocation4], 0
    %14 = vsyncpa [#allocation7], 0
    loop: start=0, step=1, limit=4
    $region2: #{_lambda_.3} parent=1 // loop_pre_header
      _
    $region3: #{_lambda_.3} parent=1 // loop_header
      %s16 = sphi 0, %s20
      %p17 = scmp.ge.s32.totalorder %s16, 4
      %s23 = sphi 0, %s35
      %s24 = sphi 0, %s31
      %s25 = sphi 0, %s23
      %s26 = sphi 0, %s24
      %s27 = sphi 0, %s25
      %s28 = sphi 0, %s26
      %s40 = sphi 0, %s42
      %s43 = sphi 0, %s40
      %s44 = sphi 0, %s43
      %s60 = sphi 0, %s44
      %s64 = sphi 0, %s64
      %s66 = sphi 0, %s64
      %s67 = sphi 0, %s66
      %s81 = sphi 0, %s67
      %s85 = sphi 0, %s85
      %s87 = sphi 0, %s85
      %s88 = sphi 0, %s87
      %s102 = sphi 0, %s88
      %s110 = sphi 0, %s112
      %s113 = sphi 0, %s110
      %s114 = sphi 0, %s113
      %s130 = sphi 0, %s114
      %s138 = sphi 0, %s140
      %s141 = sphi 0, %s138
      %s142 = sphi 0, %s141
      %s158 = sphi 0, %s142
    $region4: #{_lambda_.3} parent=1 // loop_header_branch
      %19 = sbr.rel (%p17) target = $region8
    $region5: #{_lambda_.3} parent=1 // loop_body
      %s21 = ssub.s32 %s16, 1
      %s22 = ssub.s32 %s16, 2
      %s29 = sadd.s32 1, %s24
      %p30 = scmp.ge.s32.totalorder %s29, 1
      %s31 = scalar_select %p30, 0, %s29
      %s32 = sadd.s32 1, %s23
      %s33 = scalar_select %p30, %s32, %s23
      %p34 = scmp.ge.s32.totalorder %s33, 2
      %s35 = scalar_select %p34, 0, %s33
      %s36 = ssub.s32 %s23, %s35
      %s37 = ssub.s32 %s24, %s31
      %s38 = sor.u32 %s36, %s37
      %p39 = scmp.eq.s32.totalorder %s38, 0
      %s41 = sadd.s32 %s40, 1
      %s42 = scalar_select %p39, %s40, %s41
      %p45 = pneg %p39
      %p46 = scmp.eq.s32.totalorder %s16, 1
      %p47 = por %p45, %p46
      %p48 = scmp.ne.s32.totalorder %s40, %s43
      %p49 = scmp.eq.s32.totalorder %s16, 0
      %p50 = por %p48, %p49
      %p51 = scmp.ne.s32.totalorder %s40, %s43
      %p52 = scmp.eq.s32.totalorder %s21, 1
      %p53 = por %p51, %p52
      %p54 = scmp.ne.s32.totalorder %s43, %s44
      %p55 = scmp.eq.s32.totalorder %s21, 0
      %p56 = por %p54, %p55
      %p57 = scmp.ne.s32.totalorder %s43, %s44
      %p58 = scmp.eq.s32.totalorder %s22, 1
      %p59 = por %p57, %p58
      %p61 = scmp.ne.s32.totalorder %s44, %s60
      %p62 = scmp.eq.s32.totalorder %s22, 0
      %p63 = por %p61, %p62
      %s65 = sadd.s32 %s64, 1
      %p68 = scmp.eq.s32.totalorder %s16, 1
      %p69 = scmp.ne.s32.totalorder %s64, %s66
      %p70 = scmp.eq.s32.totalorder %s16, 0
      %p71 = por %p69, %p70
      %p72 = scmp.ne.s32.totalorder %s64, %s66
      %p73 = scmp.eq.s32.totalorder %s21, 1
      %p74 = por %p72, %p73
      %p75 = scmp.ne.s32.totalorder %s66, %s67
      %p76 = scmp.eq.s32.totalorder %s21, 0
      %p77 = por %p75, %p76
      %p78 = scmp.ne.s32.totalorder %s66, %s67
      %p79 = scmp.eq.s32.totalorder %s22, 1
      %p80 = por %p78, %p79
      %p82 = scmp.ne.s32.totalorder %s67, %s81
      %p83 = scmp.eq.s32.totalorder %s22, 0
      %p84 = por %p82, %p83
      %s86 = sadd.s32 %s85, 1
      %p89 = scmp.eq.s32.totalorder %s16, 1
      %p90 = scmp.ne.s32.totalorder %s85, %s87
      %p91 = scmp.eq.s32.totalorder %s16, 0
      %p92 = por %p90, %p91
      %p93 = scmp.ne.s32.totalorder %s85, %s87
      %p94 = scmp.eq.s32.totalorder %s21, 1
      %p95 = por %p93, %p94
      %p96 = scmp.ne.s32.totalorder %s87, %s88
      %p97 = scmp.eq.s32.totalorder %s21, 0
      %p98 = por %p96, %p97
      %p99 = scmp.ne.s32.totalorder %s87, %s88
      %p100 = scmp.eq.s32.totalorder %s22, 1
      %p101 = por %p99, %p100
      %p103 = scmp.ne.s32.totalorder %s88, %s102
      %p104 = scmp.eq.s32.totalorder %s22, 0
      %p105 = por %p103, %p104
      %s106 = ssub.s32 %s23, %s35
      %s107 = ssub.s32 %s24, %s31
      %s108 = sor.u32 %s106, %s107
      %p109 = scmp.eq.s32.totalorder %s108, 0
      %s111 = sadd.s32 %s110, 1
      %s112 = scalar_select %p109, %s110, %s111
      %p115 = pneg %p109
      %p116 = scmp.eq.s32.totalorder %s16, 1
      %p117 = por %p115, %p116
      %p118 = scmp.ne.s32.totalorder %s110, %s113
      %p119 = scmp.eq.s32.totalorder %s16, 0
      %p120 = por %p118, %p119
      %p121 = scmp.ne.s32.totalorder %s110, %s113
      %p122 = scmp.eq.s32.totalorder %s21, 1
      %p123 = por %p121, %p122
      %p124 = scmp.ne.s32.totalorder %s113, %s114
      %p125 = scmp.eq.s32.totalorder %s21, 0
      %p126 = por %p124, %p125
      %p127 = scmp.ne.s32.totalorder %s113, %s114
      %p128 = scmp.eq.s32.totalorder %s22, 1
      %p129 = por %p127, %p128
      %p131 = scmp.ne.s32.totalorder %s114, %s130
      %p132 = scmp.eq.s32.totalorder %s22, 0
      %p133 = por %p131, %p132
      %s134 = sadd.s32 %s23, %s24
      %s135 = sadd.s32 %s35, %s31
      %s136 = ssub.s32 %s134, %s135
      %p137 = scmp.eq.s32.totalorder %s136, 0
      %s139 = sadd.s32 %s138, 1
      %s140 = scalar_select %p137, %s138, %s139
      %p143 = pneg %p137
      %p144 = scmp.eq.s32.totalorder %s16, 1
      %p145 = por %p143, %p144
      %p146 = scmp.ne.s32.totalorder %s138, %s141
      %p147 = scmp.eq.s32.totalorder %s16, 0
      %p148 = por %p146, %p147
      %p149 = scmp.ne.s32.totalorder %s138, %s141
      %p150 = scmp.eq.s32.totalorder %s21, 1
      %p151 = por %p149, %p150
      %p152 = scmp.ne.s32.totalorder %s141, %s142
      %p153 = scmp.eq.s32.totalorder %s21, 0
      %p154 = por %p152, %p153
      %p155 = scmp.ne.s32.totalorder %s141, %s142
      %p156 = scmp.eq.s32.totalorder %s22, 1
      %p157 = por %p155, %p156
      %p159 = scmp.ne.s32.totalorder %s142, %s158
      %p160 = scmp.eq.s32.totalorder %s22, 0
      %p161 = por %p159, %p160
      %p162 = scmp.le.s32.totalorder 1, %s16
      %p163 = scmp.lt.s32.totalorder %s16, 3
      %p164 = pnand %p162, %p163
      %p165 = pneg %p164
      // Predicated region
      $region9: #{_lambda_.3} parent=5 // pred_check
        _
      $region10: #{_lambda_.3} parent=5 // pred_check_branch
        %167 = sbr.rel (%p164) target = $region12
      $region11: #{_lambda_.3} parent=5 // pred_region
        %s168 = ssub.s32 %s16, 1
        // Predicated region
        $region13: #{_lambda_.3} parent=11 // pred_check
          %p169 = pneg %p77
        $region14: #{_lambda_.3} parent=11 // pred_check_branch
          %171 = sbr.rel (%p169) target = $region16
        $region15: #{_lambda_.3} parent=11 // pred_region
          %s173 = ssub.s32 16, 16
          %174 = vsyncadd [#allocation4], %s173
          %s176 = sshll.u32 %s1, 4
          %s177 = int_to_ptr.vmem [resolvable:$true] %s176
          %179 = dma.vmem_to_smem %s177, 16, [#allocation5], [#allocation4]
        $region16: #{_lambda_.3} parent=11 // pred_fallthru
          _
        // Predicated region
        $region17: #{_lambda_.3} parent=11 // pred_check
          %p180 = pneg %p98
        $region18: #{_lambda_.3} parent=11 // pred_check_branch
          %182 = sbr.rel (%p180) target = $region20
        $region19: #{_lambda_.3} parent=11 // pred_region
          %s184 = ssub.s32 16, 16
          %185 = vsyncadd [#allocation7], %s184
          %s187 = sshll.u32 %s2, 4
          %s188 = int_to_ptr.vmem [resolvable:$true] %s187
          %190 = dma.vmem_to_smem %s188, 16, [#allocation6], [#allocation7]
        $region20: #{_lambda_.3} parent=11 // pred_fallthru
          _
      $region12: #{_lambda_.3} parent=5 // pred_fallthru
        _
      %p191 = scmp.lt.s32.totalorder %s16, 2
      // Predicated region
      $region21: #{_lambda_.3} parent=5 // pred_check
        %p192 = pneg %p191
      $region22: #{_lambda_.3} parent=5 // pred_check_branch
        %194 = sbr.rel (%p192) target = $region24
      $region23: #{_lambda_.3} parent=5 // pred_region
        // Predicated region
        $region25: #{_lambda_.3} parent=23 // pred_check
          %p195 = pneg %p50
        $region26: #{_lambda_.3} parent=23 // pred_check_branch
          %197 = sbr.rel (%p195) target = $region28
        $region27: #{_lambda_.3} parent=23 // pred_region
          %s198 = sand.u32 %s40, 1
          %s199 = scalar_lea.sflag [#allocation3], %s198
          %s200 = sand.u32 %s40, 1
          %s201 = smul.addr %s200, 64
          %s202 = scalar_lea.vmem [#allocation2], %s201
          %s204 = ssub.s32 1024, 1024
          %205 = vsyncadd %s199, %s204
          %s206 = smul.addr %s23, 8
          %s207 = sadd.s32 %s24, %s206
          %s208 = smul.addr %s207, 128
          %s209 = scalar_lea.hbm %s0, %s208
          %s210 = sshll.u32 %s202, 4
          %s211 = int_to_ptr.vmem [resolvable:$true] %s210
          %216 = dma.hbm_to_vmem [thread:$0]  %s209, 1024, %s211, %s199, 128, 128, 8
        $region28: #{_lambda_.3} parent=23 // pred_fallthru
          _
      $region24: #{_lambda_.3} parent=5 // pred_fallthru
        _
      %p217 = scmp.le.s32.totalorder 1, %s16
      %p218 = scmp.lt.s32.totalorder %s16, 3
      %p219 = pnand %p217, %p218
      %p220 = pneg %p219
      // Predicated region
      $region29: #{_lambda_.3} parent=5 // pred_check
        _
      $region30: #{_lambda_.3} parent=5 // pred_check_branch
        %222 = sbr.rel (%p219) target = $region32
      $region31: #{_lambda_.3} parent=5 // pred_region
        %s223 = ssub.s32 %s16, 1
        %s224 = sand.u32 %s43, 1
        %s225 = scalar_lea.sflag [#allocation3], %s224
        %s226 = sand.u32 %s43, 1
        %s227 = smul.addr %s226, 64
        %s228 = scalar_lea.vmem [#allocation2], %s227
        // Predicated region
        $region33: #{_lambda_.3} parent=31 // pred_check
          %p229 = pneg %p56
        $region34: #{_lambda_.3} parent=31 // pred_check_branch
          %231 = sbr.rel (%p229) target = $region36
        $region35: #{_lambda_.3} parent=31 // pred_region
          %232 = dma.done %s225, 1024
        $region36: #{_lambda_.3} parent=31 // pred_fallthru
          _
        // Predicated region
        $region37: #{_lambda_.3} parent=31 // pred_check
          %p233 = pneg %p77
        $region38: #{_lambda_.3} parent=31 // pred_check_branch
          %235 = sbr.rel (%p233) target = $region40
        $region39: #{_lambda_.3} parent=31 // pred_region
          %236 = dma.done [#allocation4], 16
        $region40: #{_lambda_.3} parent=31 // pred_fallthru
          _
        // Predicated region
        $region41: #{_lambda_.3} parent=31 // pred_check
          %p237 = pneg %p98
        $region42: #{_lambda_.3} parent=31 // pred_check_branch
          %239 = sbr.rel (%p237) target = $region44
        $region43: #{_lambda_.3} parent=31 // pred_region
          %240 = dma.done [#allocation7], 16
        $region44: #{_lambda_.3} parent=31 // pred_fallthru
          _
        %241 = sfence
        %s242 = sand.u32 %s43, 1
        %s243 = scalar_lea.sflag [#allocation3], %s242
        %s244 = sand.u32 %s43, 1
        %s245 = smul.addr %s244, 64
        %s246 = scalar_lea.vmem [#allocation2], %s245
        %p247 = pneg %p56
        %p248 = pneg %p53
        %p249 = pneg %p77
        %p250 = pneg %p74
        %p251 = pneg %p98
        %p252 = pneg %p95
        %p253 = pneg %p126
        %p254 = pneg %p123
        %p255 = scmp.lt.s32.totalorder %s25, 1
        %s256 = scalar_select %p255, %s25, 1
        %p257 = scmp.lt.s32.totalorder %s26, 0
        %s258 = scalar_select %p257, %s26, 0
        %s259 = smul.addr %s256, 8
        %s260 = sadd.s32 %s258, %s259
        %s261 = smul.addr %s260, 8
        %s262 = scalar_lea.vmem %s3, %s261
        %p263 = pneg %p154
        %p264 = pneg %p151
        %s265 = sadd.s32 %s25, %s26
        %p266 = scmp.lt.s32.totalorder %s265, 1
        %s267 = scalar_select %p266, %s265, 1
        %s268 = smul.addr %s267, 2
        %s269 = smul.addr %s268, 4
        %s270 = scalar_lea.vmem %s4, %s269
        %p271 = scmp.lt.s32.totalorder %s25, 1
        %s272 = scalar_select %p271, %s25, 1
        %p273 = scmp.lt.s32.totalorder %s26, 0
        %s274 = scalar_select %p273, %s26, 0
        %s275 = smul.addr %s272, 8
        %s276 = sadd.s32 %s274, %s275
        %s277 = smul.addr %s276, 8
        %s278 = scalar_lea.vmem %s3, %s277
        %s279 = sadd.s32 %s25, %s26
        %p280 = scmp.lt.s32.totalorder %s279, 1
        %s281 = scalar_select %p280, %s279, 1
        %s282 = smul.addr %s281, 2
        %s283 = smul.addr %s282, 4
        %s284 = scalar_lea.vmem %s4, %s283
        %s285 = sadd.s32 %s25, %s26
        %v286 = vld [vmem:[%s228] sm:$0xff]
        %v287 = vld [vmem:[%s228 + $0x8] sm:$0xff]
        %vm290 = vcmask 1040384
        %v291 = vrot.slane %v286, 7
        %v292 = vrot.slane %v287, 7
        %v293 = vsel %vm290, %v291, %v292
        %v297 = vsel %vm290, 0.0, %v291
        %v298 = vsel %vm290, %v292, 0.0
        %s299 = sld [smem:[#allocation5]]
        %v300 = vstv %s299
        %v301 = vmul.f32 %v297, %v300
        %v302 = vmul.f32 %v293, %v300
        %s303 = sld [smem:[#allocation5 + $0xc]]
        %v304 = vstv %s303
        %v305 = vmul.f32 %v297, %v304
        %v306 = vmul.f32 %v293, %v304
        %s307 = sld [smem:[#allocation5 + $0x18]]
        %v308 = vstv %s307
        %v309 = vmul.f32 %v297, %v308
        %v310 = vmul.f32 %v293, %v308
        %s311 = sld [smem:[#allocation5 + $0x24]]
        %v312 = vstv %s311
        %v313 = vmul.f32 %v297, %v312
        %v314 = vmul.f32 %v293, %v312
        %s315 = sld [smem:[#allocation5 + $0x1]]
        %v316 = vstv %s315
        %v317 = vmul.f32 %v297, %v316
        %v318 = vmul.f32 %v293, %v316
        %v319 = vmul.f32 %v298, %v316
        %vm323 = vcmask 1046528
        %v324 = vrot.slane %v317, 1
        %v325 = vrot.slane %v318, 1
        %v326 = vsel %vm323, %v324, %v325
        %v327 = vrot.slane %v319, 1
        %v328 = vsel %vm323, %v325, %v327
        %v331 = vadd.f32 %v301, %v326
        %v332 = vadd.f32 %v302, %v328
        %s333 = sld [smem:[#allocation5 + $0xd]]
        %v334 = vstv %s333
        %v335 = vmul.f32 %v297, %v334
        %v336 = vmul.f32 %v293, %v334
        %v337 = vmul.f32 %v298, %v334
        %v341 = vrot.slane %v335, 1
        %v342 = vrot.slane %v336, 1
        %v343 = vsel %vm323, %v341, %v342
        %v344 = vrot.slane %v337, 1
        %v345 = vsel %vm323, %v342, %v344
        %v348 = vadd.f32 %v305, %v343
        %v349 = vadd.f32 %v306, %v345
        %s350 = sld [smem:[#allocation5 + $0x19]]
        %v351 = vstv %s350
        %v352 = vmul.f32 %v297, %v351
        %v353 = vmul.f32 %v293, %v351
        %v354 = vmul.f32 %v298, %v351
        %v358 = vrot.slane %v352, 1
        %v359 = vrot.slane %v353, 1
        %v360 = vsel %vm323, %v358, %v359
        %v361 = vrot.slane %v354, 1
        %v362 = vsel %vm323, %v359, %v361
        %v365 = vadd.f32 %v309, %v360
        %v366 = vadd.f32 %v310, %v362
        %s367 = sld [smem:[#allocation5 + $0x25]]
        %v368 = vstv %s367
        %v369 = vmul.f32 %v297, %v368
        %v370 = vmul.f32 %v293, %v368
        %v371 = vmul.f32 %v298, %v368
        %v375 = vrot.slane %v369, 1
        %v376 = vrot.slane %v370, 1
        %v377 = vsel %vm323, %v375, %v376
        %v378 = vrot.slane %v371, 1
        %v379 = vsel %vm323, %v376, %v378
        %v382 = vadd.f32 %v313, %v377
        %v383 = vadd.f32 %v314, %v379
        %s384 = sld [smem:[#allocation5 + $0x2]]
        %v385 = vstv %s384
        %v386 = vmul.f32 %v297, %v385
        %v387 = vmul.f32 %v293, %v385
        %v388 = vmul.f32 %v298, %v385
        %vm392 = vcmask 1045504
        %v393 = vrot.slane %v386, 2
        %v394 = vrot.slane %v387, 2
        %v395 = vsel %vm392, %v393, %v394
        %v396 = vrot.slane %v388, 2
        %v397 = vsel %vm392, %v394, %v396
        %v400 = vadd.f32 %v331, %v395
        %v401 = vadd.f32 %v332, %v397
        %s402 = sld [smem:[#allocation5 + $0xe]]
        %v403 = vstv %s402
        %v404 = vmul.f32 %v297, %v403
        %v405 = vmul.f32 %v293, %v403
        %v406 = vmul.f32 %v298, %v403
        %v410 = vrot.slane %v404, 2
        %v411 = vrot.slane %v405, 2
        %v412 = vsel %vm392, %v410, %v411
        %v413 = vrot.slane %v406, 2
        %v414 = vsel %vm392, %v411, %v413
        %v417 = vadd.f32 %v348, %v412
        %v418 = vadd.f32 %v349, %v414
        %s419 = sld [smem:[#allocation5 + $0x1a]]
        %v420 = vstv %s419
        %v421 = vmul.f32 %v297, %v420
        %v422 = vmul.f32 %v293, %v420
        %v423 = vmul.f32 %v298, %v420
        %v427 = vrot.slane %v421, 2
        %v428 = vrot.slane %v422, 2
        %v429 = vsel %vm392, %v427, %v428
        %v430 = vrot.slane %v423, 2
        %v431 = vsel %vm392, %v428, %v430
        %v434 = vadd.f32 %v365, %v429
        %v435 = vadd.f32 %v366, %v431
        %s436 = sld [smem:[#allocation5 + $0x26]]
        %v437 = vstv %s436
        %v438 = vmul.f32 %v297, %v437
        %v439 = vmul.f32 %v293, %v437
        %v440 = vmul.f32 %v298, %v437
        %v444 = vrot.slane %v438, 2
        %v445 = vrot.slane %v439, 2
        %v446 = vsel %vm392, %v444, %v445
        %v447 = vrot.slane %v440, 2
        %v448 = vsel %vm392, %v445, %v447
        %v451 = vadd.f32 %v382, %v446
        %v452 = vadd.f32 %v383, %v448
        %s453 = scalar_lea.vmem %s228, 16 [#allocation2]
        %v454 = vld [vmem:[%s453] sm:$0xff]
        %v455 = vld [vmem:[%s453 + $0x8] sm:$0xff]
        %v458 = vrot.slane %v454, 7
        %v459 = vrot.slane %v455, 7
        %v460 = vsel %vm290, %v458, %v459
        %v464 = vsel %vm290, 0.0, %v458
        %v465 = vsel %vm290, %v459, 0.0
        %s466 = sld [smem:[#allocation5 + $0x3]]
        %v467 = vstv %s466
        %v468 = vmul.f32 %v464, %v467
        %v469 = vmul.f32 %v460, %v467
        %v470 = vadd.f32 %v400, %v468
        %v471 = vadd.f32 %v401, %v469
        %s472 = sld [smem:[#allocation5 + $0xf]]
        %v473 = vstv %s472
        %v474 = vmul.f32 %v464, %v473
        %v475 = vmul.f32 %v460, %v473
        %v476 = vadd.f32 %v417, %v474
        %v477 = vadd.f32 %v418, %v475
        %s478 = sld [smem:[#allocation5 + $0x1b]]
        %v479 = vstv %s478
        %v480 = vmul.f32 %v464, %v479
        %v481 = vmul.f32 %v460, %v479
        %v482 = vadd.f32 %v434, %v480
        %v483 = vadd.f32 %v435, %v481
        %s484 = sld [smem:[#allocation5 + $0x27]]
        %v485 = vstv %s484
        %v486 = vmul.f32 %v464, %v485
        %v487 = vmul.f32 %v460, %v485
        %v488 = vadd.f32 %v451, %v486
        %v489 = vadd.f32 %v452, %v487
        %s490 = sld [smem:[#allocation5 + $0x4]]
        %v491 = vstv %s490
        %v492 = vmul.f32 %v464, %v491
        %v493 = vmul.f32 %v460, %v491
        %v494 = vmul.f32 %v465, %v491
        %v498 = vrot.slane %v492, 1
        %v499 = vrot.slane %v493, 1
        %v500 = vsel %vm323, %v498, %v499
        %v501 = vrot.slane %v494, 1
        %v502 = vsel %vm323, %v499, %v501
        %v505 = vadd.f32 %v470, %v500
        %v506 = vadd.f32 %v471, %v502
        %s507 = sld [smem:[#allocation5 + $0x10]]
        %v508 = vstv %s507
        %v509 = vmul.f32 %v464, %v508
        %v510 = vmul.f32 %v460, %v508
        %v511 = vmul.f32 %v465, %v508
        %v515 = vrot.slane %v509, 1
        %v516 = vrot.slane %v510, 1
        %v517 = vsel %vm323, %v515, %v516
        %v518 = vrot.slane %v511, 1
        %v519 = vsel %vm323, %v516, %v518
        %v522 = vadd.f32 %v476, %v517
        %v523 = vadd.f32 %v477, %v519
        %s524 = sld [smem:[#allocation5 + $0x1c]]
        %v525 = vstv %s524
        %v526 = vmul.f32 %v464, %v525
        %v527 = vmul.f32 %v460, %v525
        %v528 = vmul.f32 %v465, %v525
        %v532 = vrot.slane %v526, 1
        %v533 = vrot.slane %v527, 1
        %v534 = vsel %vm323, %v532, %v533
        %v535 = vrot.slane %v528, 1
        %v536 = vsel %vm323, %v533, %v535
        %v539 = vadd.f32 %v482, %v534
        %v540 = vadd.f32 %v483, %v536
        %s541 = sld [smem:[#allocation5 + $0x28]]
        %v542 = vstv %s541
        %v543 = vmul.f32 %v464, %v542
        %v544 = vmul.f32 %v460, %v542
        %v545 = vmul.f32 %v465, %v542
        %v549 = vrot.slane %v543, 1
        %v550 = vrot.slane %v544, 1
        %v551 = vsel %vm323, %v549, %v550
        %v552 = vrot.slane %v545, 1
        %v553 = vsel %vm323, %v550, %v552
        %v556 = vadd.f32 %v488, %v551
        %v557 = vadd.f32 %v489, %v553
        %s558 = sld [smem:[#allocation5 + $0x5]]
        %v559 = vstv %s558
        %v560 = vmul.f32 %v464, %v559
        %v561 = vmul.f32 %v460, %v559
        %v562 = vmul.f32 %v465, %v559
        %v566 = vrot.slane %v560, 2
        %v567 = vrot.slane %v561, 2
        %v568 = vsel %vm392, %v566, %v567
        %v569 = vrot.slane %v562, 2
        %v570 = vsel %vm392, %v567, %v569
        %v573 = vadd.f32 %v505, %v568
        %v574 = vadd.f32 %v506, %v570
        %s575 = sld [smem:[#allocation5 + $0x11]]
        %v576 = vstv %s575
        %v577 = vmul.f32 %v464, %v576
        %v578 = vmul.f32 %v460, %v576
        %v579 = vmul.f32 %v465, %v576
        %v583 = vrot.slane %v577, 2
        %v584 = vrot.slane %v578, 2
        %v585 = vsel %vm392, %v583, %v584
        %v586 = vrot.slane %v579, 2
        %v587 = vsel %vm392, %v584, %v586
        %v590 = vadd.f32 %v522, %v585
        %v591 = vadd.f32 %v523, %v587
        %s592 = sld [smem:[#allocation5 + $0x1d]]
        %v593 = vstv %s592
        %v594 = vmul.f32 %v464, %v593
        %v595 = vmul.f32 %v460, %v593
        %v596 = vmul.f32 %v465, %v593
        %v600 = vrot.slane %v594, 2
        %v601 = vrot.slane %v595, 2
        %v602 = vsel %vm392, %v600, %v601
        %v603 = vrot.slane %v596, 2
        %v604 = vsel %vm392, %v601, %v603
        %v607 = vadd.f32 %v539, %v602
        %v608 = vadd.f32 %v540, %v604
        %s609 = sld [smem:[#allocation5 + $0x29]]
        %v610 = vstv %s609
        %v611 = vmul.f32 %v464, %v610
        %v612 = vmul.f32 %v460, %v610
        %v613 = vmul.f32 %v465, %v610
        %v617 = vrot.slane %v611, 2
        %v618 = vrot.slane %v612, 2
        %v619 = vsel %vm392, %v617, %v618
        %v620 = vrot.slane %v613, 2
        %v621 = vsel %vm392, %v618, %v620
        %v624 = vadd.f32 %v556, %v619
        %v625 = vadd.f32 %v557, %v621
        %s626 = scalar_lea.vmem %s228, 32 [#allocation2]
        %v627 = vld [vmem:[%s626] sm:$0xff]
        %v628 = vld [vmem:[%s626 + $0x8] sm:$0xff]
        %v631 = vrot.slane %v627, 7
        %v632 = vrot.slane %v628, 7
        %v633 = vsel %vm290, %v631, %v632
        %v637 = vsel %vm290, 0.0, %v631
        %v638 = vsel %vm290, %v632, 0.0
        %s639 = sld [smem:[#allocation5 + $0x6]]
        %v640 = vstv %s639
        %v641 = vmul.f32 %v637, %v640
        %v642 = vmul.f32 %v633, %v640
        %v643 = vadd.f32 %v573, %v641
        %v644 = vadd.f32 %v574, %v642
        %s645 = sld [smem:[#allocation5 + $0x12]]
        %v646 = vstv %s645
        %v647 = vmul.f32 %v637, %v646
        %v648 = vmul.f32 %v633, %v646
        %v649 = vadd.f32 %v590, %v647
        %v650 = vadd.f32 %v591, %v648
        %s651 = sld [smem:[#allocation5 + $0x1e]]
        %v652 = vstv %s651
        %v653 = vmul.f32 %v637, %v652
        %v654 = vmul.f32 %v633, %v652
        %v655 = vadd.f32 %v607, %v653
        %v656 = vadd.f32 %v608, %v654
        %s657 = sld [smem:[#allocation5 + $0x2a]]
        %v658 = vstv %s657
        %v659 = vmul.f32 %v637, %v658
        %v660 = vmul.f32 %v633, %v658
        %v661 = vadd.f32 %v624, %v659
        %v662 = vadd.f32 %v625, %v660
        %s663 = sld [smem:[#allocation5 + $0x7]]
        %v664 = vstv %s663
        %v665 = vmul.f32 %v637, %v664
        %v666 = vmul.f32 %v633, %v664
        %v667 = vmul.f32 %v638, %v664
        %v671 = vrot.slane %v665, 1
        %v672 = vrot.slane %v666, 1
        %v673 = vsel %vm323, %v671, %v672
        %v674 = vrot.slane %v667, 1
        %v675 = vsel %vm323, %v672, %v674
        %v678 = vadd.f32 %v643, %v673
        %v679 = vadd.f32 %v644, %v675
        %s680 = sld [smem:[#allocation5 + $0x13]]
        %v681 = vstv %s680
        %v682 = vmul.f32 %v637, %v681
        %v683 = vmul.f32 %v633, %v681
        %v684 = vmul.f32 %v638, %v681
        %v688 = vrot.slane %v682, 1
        %v689 = vrot.slane %v683, 1
        %v690 = vsel %vm323, %v688, %v689
        %v691 = vrot.slane %v684, 1
        %v692 = vsel %vm323, %v689, %v691
        %v695 = vadd.f32 %v649, %v690
        %v696 = vadd.f32 %v650, %v692
        %s697 = sld [smem:[#allocation5 + $0x1f]]
        %v698 = vstv %s697
        %v699 = vmul.f32 %v637, %v698
        %v700 = vmul.f32 %v633, %v698
        %v701 = vmul.f32 %v638, %v698
        %v705 = vrot.slane %v699, 1
        %v706 = vrot.slane %v700, 1
        %v707 = vsel %vm323, %v705, %v706
        %v708 = vrot.slane %v701, 1
        %v709 = vsel %vm323, %v706, %v708
        %v712 = vadd.f32 %v655, %v707
        %v713 = vadd.f32 %v656, %v709
        %s714 = sld [smem:[#allocation5 + $0x2b]]
        %v715 = vstv %s714
        %v716 = vmul.f32 %v637, %v715
        %v717 = vmul.f32 %v633, %v715
        %v718 = vmul.f32 %v638, %v715
        %v722 = vrot.slane %v716, 1
        %v723 = vrot.slane %v717, 1
        %v724 = vsel %vm323, %v722, %v723
        %v725 = vrot.slane %v718, 1
        %v726 = vsel %vm323, %v723, %v725
        %v729 = vadd.f32 %v661, %v724
        %v730 = vadd.f32 %v662, %v726
        %s731 = sld [smem:[#allocation5 + $0x8]]
        %v732 = vstv %s731
        %v733 = vmul.f32 %v637, %v732
        %v734 = vmul.f32 %v633, %v732
        %v735 = vmul.f32 %v638, %v732
        %v739 = vrot.slane %v733, 2
        %v740 = vrot.slane %v734, 2
        %v741 = vsel %vm392, %v739, %v740
        %v742 = vrot.slane %v735, 2
        %v743 = vsel %vm392, %v740, %v742
        %v746 = vadd.f32 %v678, %v741
        %v747 = vadd.f32 %v679, %v743
        %s748 = sld [smem:[#allocation5 + $0x14]]
        %v749 = vstv %s748
        %v750 = vmul.f32 %v637, %v749
        %v751 = vmul.f32 %v633, %v749
        %v752 = vmul.f32 %v638, %v749
        %v756 = vrot.slane %v750, 2
        %v757 = vrot.slane %v751, 2
        %v758 = vsel %vm392, %v756, %v757
        %v759 = vrot.slane %v752, 2
        %v760 = vsel %vm392, %v757, %v759
        %v763 = vadd.f32 %v695, %v758
        %v764 = vadd.f32 %v696, %v760
        %s765 = sld [smem:[#allocation5 + $0x20]]
        %v766 = vstv %s765
        %v767 = vmul.f32 %v637, %v766
        %v768 = vmul.f32 %v633, %v766
        %v769 = vmul.f32 %v638, %v766
        %v773 = vrot.slane %v767, 2
        %v774 = vrot.slane %v768, 2
        %v775 = vsel %vm392, %v773, %v774
        %v776 = vrot.slane %v769, 2
        %v777 = vsel %vm392, %v774, %v776
        %v780 = vadd.f32 %v712, %v775
        %v781 = vadd.f32 %v713, %v777
        %s782 = sld [smem:[#allocation5 + $0x2c]]
        %v783 = vstv %s782
        %v784 = vmul.f32 %v637, %v783
        %v785 = vmul.f32 %v633, %v783
        %v786 = vmul.f32 %v638, %v783
        %v790 = vrot.slane %v784, 2
        %v791 = vrot.slane %v785, 2
        %v792 = vsel %vm392, %v790, %v791
        %v793 = vrot.slane %v786, 2
        %v794 = vsel %vm392, %v791, %v793
        %v797 = vadd.f32 %v729, %v792
        %v798 = vadd.f32 %v730, %v794
        %s799 = scalar_lea.vmem %s228, 48 [#allocation2]
        %v800 = vld [vmem:[%s799] sm:$0xff]
        %v801 = vld [vmem:[%s799 + $0x8] sm:$0xff]
        %v804 = vrot.slane %v800, 7
        %v805 = vrot.slane %v801, 7
        %v806 = vsel %vm290, %v804, %v805
        %v810 = vsel %vm290, 0.0, %v804
        %v811 = vsel %vm290, %v805, 0.0
        %s812 = sld [smem:[#allocation5 + $0x9]]
        %v813 = vstv %s812
        %v814 = vmul.f32 %v810, %v813
        %v815 = vmul.f32 %v806, %v813
        %v816 = vadd.f32 %v746, %v814
        %v817 = vadd.f32 %v747, %v815
        %s818 = sld [smem:[#allocation5 + $0x15]]
        %v819 = vstv %s818
        %v820 = vmul.f32 %v810, %v819
        %v821 = vmul.f32 %v806, %v819
        %v822 = vadd.f32 %v763, %v820
        %v823 = vadd.f32 %v764, %v821
        %s824 = sld [smem:[#allocation5 + $0x21]]
        %v825 = vstv %s824
        %v826 = vmul.f32 %v810, %v825
        %v827 = vmul.f32 %v806, %v825
        %v828 = vadd.f32 %v780, %v826
        %v829 = vadd.f32 %v781, %v827
        %s830 = sld [smem:[#allocation5 + $0x2d]]
        %v831 = vstv %s830
        %v832 = vmul.f32 %v810, %v831
        %v833 = vmul.f32 %v806, %v831
        %v834 = vadd.f32 %v797, %v832
        %v835 = vadd.f32 %v798, %v833
        %s836 = sld [smem:[#allocation5 + $0xa]]
        %v837 = vstv %s836
        %v838 = vmul.f32 %v810, %v837
        %v839 = vmul.f32 %v806, %v837
        %v840 = vmul.f32 %v811, %v837
        %v844 = vrot.slane %v838, 1
        %v845 = vrot.slane %v839, 1
        %v846 = vsel %vm323, %v844, %v845
        %v847 = vrot.slane %v840, 1
        %v848 = vsel %vm323, %v845, %v847
        %v851 = vadd.f32 %v816, %v846
        %v852 = vadd.f32 %v817, %v848
        %s853 = sld [smem:[#allocation5 + $0x16]]
        %v854 = vstv %s853
        %v855 = vmul.f32 %v810, %v854
        %v856 = vmul.f32 %v806, %v854
        %v857 = vmul.f32 %v811, %v854
        %v861 = vrot.slane %v855, 1
        %v862 = vrot.slane %v856, 1
        %v863 = vsel %vm323, %v861, %v862
        %v864 = vrot.slane %v857, 1
        %v865 = vsel %vm323, %v862, %v864
        %v868 = vadd.f32 %v822, %v863
        %v869 = vadd.f32 %v823, %v865
        %s870 = sld [smem:[#allocation5 + $0x22]]
        %v871 = vstv %s870
        %v872 = vmul.f32 %v810, %v871
        %v873 = vmul.f32 %v806, %v871
        %v874 = vmul.f32 %v811, %v871
        %v878 = vrot.slane %v872, 1
        %v879 = vrot.slane %v873, 1
        %v880 = vsel %vm323, %v878, %v879
        %v881 = vrot.slane %v874, 1
        %v882 = vsel %vm323, %v879, %v881
        %v885 = vadd.f32 %v828, %v880
        %v886 = vadd.f32 %v829, %v882
        %s887 = sld [smem:[#allocation5 + $0x2e]]
        %v888 = vstv %s887
        %v889 = vmul.f32 %v810, %v888
        %v890 = vmul.f32 %v806, %v888
        %v891 = vmul.f32 %v811, %v888
        %v895 = vrot.slane %v889, 1
        %v896 = vrot.slane %v890, 1
        %v897 = vsel %vm323, %v895, %v896
        %v898 = vrot.slane %v891, 1
        %v899 = vsel %vm323, %v896, %v898
        %v902 = vadd.f32 %v834, %v897
        %v903 = vadd.f32 %v835, %v899
        %s904 = sld [smem:[#allocation5 + $0xb]]
        %v905 = vstv %s904
        %v906 = vmul.f32 %v810, %v905
        %v907 = vmul.f32 %v806, %v905
        %v908 = vmul.f32 %v811, %v905
        %v912 = vrot.slane %v906, 2
        %v913 = vrot.slane %v907, 2
        %v914 = vsel %vm392, %v912, %v913
        %v915 = vrot.slane %v908, 2
        %v916 = vsel %vm392, %v913, %v915
        %v919 = vadd.f32 %v851, %v914
        %v920 = vadd.f32 %v852, %v916
        %s921 = sld [smem:[#allocation5 + $0x17]]
        %v922 = vstv %s921
        %v923 = vmul.f32 %v810, %v922
        %v924 = vmul.f32 %v806, %v922
        %v925 = vmul.f32 %v811, %v922
        %v929 = vrot.slane %v923, 2
        %v930 = vrot.slane %v924, 2
        %v931 = vsel %vm392, %v929, %v930
        %v932 = vrot.slane %v925, 2
        %v933 = vsel %vm392, %v930, %v932
        %v936 = vadd.f32 %v868, %v931
        %v937 = vadd.f32 %v869, %v933
        %s938 = sld [smem:[#allocation5 + $0x23]]
        %v939 = vstv %s938
        %v940 = vmul.f32 %v810, %v939
        %v941 = vmul.f32 %v806, %v939
        %v942 = vmul.f32 %v811, %v939
        %v946 = vrot.slane %v940, 2
        %v947 = vrot.slane %v941, 2
        %v948 = vsel %vm392, %v946, %v947
        %v949 = vrot.slane %v942, 2
        %v950 = vsel %vm392, %v947, %v949
        %v953 = vadd.f32 %v885, %v948
        %v954 = vadd.f32 %v886, %v950
        %s955 = sld [smem:[#allocation5 + $0x2f]]
        %v956 = vstv %s955
        %v957 = vmul.f32 %v810, %v956
        %v958 = vmul.f32 %v806, %v956
        %v959 = vmul.f32 %v811, %v956
        %v963 = vrot.slane %v957, 2
        %v964 = vrot.slane %v958, 2
        %v965 = vsel %vm392, %v963, %v964
        %v966 = vrot.slane %v959, 2
        %v967 = vsel %vm392, %v964, %v966
        %v970 = vadd.f32 %v902, %v965
        %v971 = vadd.f32 %v903, %v967
        %s972 = sld [smem:[#allocation6]]
        %v973 = vstv %s972
        %v974 = vadd.f32 %v919, %v973
        %v975 = vadd.f32 %v920, %v973
        %vm976 = vcmask 130048
        %977 = vst.msk [vmem:[%s278] sm:$0xff] %vm976, %v974
        %978 = vst.msk [vmem:[%s278 + $0x8] sm:$0xff] %vm976, %v975
        %v979 = vsel %vm976, %v974, 0.0
        %v980 = vsel %vm976, %v975, 0.0
        %v981 = vadd.f32 %v979, %v980
        %v982 = vrot.slane %v981, 4
        %v983 = vadd.f32 %v981, %v982
        %v984 = vrot.slane %v983, 2
        %v985 = vadd.f32 %v983, %v984
        %v986 = vrot.slane %v985, 1
        %v987 = vadd.f32 %v985, %v986
        %vm988 = vcmask 122880
        %989 = vst.msk [vmem:[%s284] sm:$0x1] %vm988, %v987
        %v990 = vmul.f32 %v974, %v974
        %v991 = vmul.f32 %v975, %v975
        %v992 = vsel %vm976, %v990, 0.0
        %v993 = vsel %vm976, %v991, 0.0
        %v994 = vadd.f32 %v992, %v993
        %v995 = vrot.slane %v994, 4
        %v996 = vadd.f32 %v994, %v995
        %v997 = vrot.slane %v996, 2
        %v998 = vadd.f32 %v996, %v997
        %v999 = vrot.slane %v998, 1
        %v1000 = vadd.f32 %v998, %v999
        %s1001 = scalar_lea.vmem %s284, 4
        %1002 = vst.msk [vmem:[%s1001] sm:$0x1] %vm988, %v1000
        %s1003 = sld [smem:[#allocation6 + $0x1]]
        %v1004 = vstv %s1003
        %v1005 = vadd.f32 %v936, %v1004
        %v1006 = vadd.f32 %v937, %v1004
        %s1007 = scalar_lea.vmem %s278, 16
        %1008 = vst.msk [vmem:[%s1007] sm:$0xff] %vm976, %v1005
        %1009 = vst.msk [vmem:[%s1007 + $0x8] sm:$0xff] %vm976, %v1006
        %v1010 = vsel %vm976, %v1005, 0.0
        %v1011 = vsel %vm976, %v1006, 0.0
        %v1012 = vadd.f32 %v1010, %v1011
        %v1013 = vrot.slane %v1012, 4
        %v1014 = vadd.f32 %v1012, %v1013
        %v1015 = vrot.slane %v1014, 2
        %v1016 = vadd.f32 %v1014, %v1015
        %v1017 = vrot.slane %v1016, 1
        %v1018 = vadd.f32 %v1016, %v1017
        %1019 = vst.msk [vmem:[%s284 + $0x1] sm:$0x1] %vm988, %v1018
        %v1020 = vmul.f32 %v1005, %v1005
        %v1021 = vmul.f32 %v1006, %v1006
        %v1022 = vsel %vm976, %v1020, 0.0
        %v1023 = vsel %vm976, %v1021, 0.0
        %v1024 = vadd.f32 %v1022, %v1023
        %v1025 = vrot.slane %v1024, 4
        %v1026 = vadd.f32 %v1024, %v1025
        %v1027 = vrot.slane %v1026, 2
        %v1028 = vadd.f32 %v1026, %v1027
        %v1029 = vrot.slane %v1028, 1
        %v1030 = vadd.f32 %v1028, %v1029
        %1031 = vst.msk [vmem:[%s1001 + $0x1] sm:$0x1] %vm988, %v1030
        %s1032 = sld [smem:[#allocation6 + $0x2]]
        %v1033 = vstv %s1032
        %v1034 = vadd.f32 %v953, %v1033
        %v1035 = vadd.f32 %v954, %v1033
        %s1036 = scalar_lea.vmem %s278, 32
        %1037 = vst.msk [vmem:[%s1036] sm:$0xff] %vm976, %v1034
        %1038 = vst.msk [vmem:[%s1036 + $0x8] sm:$0xff] %vm976, %v1035
        %v1039 = vsel %vm976, %v1034, 0.0
        %v1040 = vsel %vm976, %v1035, 0.0
        %v1041 = vadd.f32 %v1039, %v1040
        %v1042 = vrot.slane %v1041, 4
        %v1043 = vadd.f32 %v1041, %v1042
        %v1044 = vrot.slane %v1043, 2
        %v1045 = vadd.f32 %v1043, %v1044
        %v1046 = vrot.slane %v1045, 1
        %v1047 = vadd.f32 %v1045, %v1046
        %1048 = vst.msk [vmem:[%s284 + $0x2] sm:$0x1] %vm988, %v1047
        %v1049 = vmul.f32 %v1034, %v1034
        %v1050 = vmul.f32 %v1035, %v1035
        %v1051 = vsel %vm976, %v1049, 0.0
        %v1052 = vsel %vm976, %v1050, 0.0
        %v1053 = vadd.f32 %v1051, %v1052
        %v1054 = vrot.slane %v1053, 4
        %v1055 = vadd.f32 %v1053, %v1054
        %v1056 = vrot.slane %v1055, 2
        %v1057 = vadd.f32 %v1055, %v1056
        %v1058 = vrot.slane %v1057, 1
        %v1059 = vadd.f32 %v1057, %v1058
        %1060 = vst.msk [vmem:[%s1001 + $0x2] sm:$0x1] %vm988, %v1059
        %s1061 = sld [smem:[#allocation6 + $0x3]]
        %v1062 = vstv %s1061
        %v1063 = vadd.f32 %v970, %v1062
        %v1064 = vadd.f32 %v971, %v1062
        %s1065 = scalar_lea.vmem %s278, 48
        %1066 = vst.msk [vmem:[%s1065] sm:$0xff] %vm976, %v1063
        %1067 = vst.msk [vmem:[%s1065 + $0x8] sm:$0xff] %vm976, %v1064
        %v1068 = vsel %vm976, %v1063, 0.0
        %v1069 = vsel %vm976, %v1064, 0.0
        %v1070 = vadd.f32 %v1068, %v1069
        %v1071 = vrot.slane %v1070, 4
        %v1072 = vadd.f32 %v1070, %v1071
        %v1073 = vrot.slane %v1072, 2
        %v1074 = vadd.f32 %v1072, %v1073
        %v1075 = vrot.slane %v1074, 1
        %v1076 = vadd.f32 %v1074, %v1075
        %1077 = vst.msk [vmem:[%s284 + $0x3] sm:$0x1] %vm988, %v1076
        %v1078 = vmul.f32 %v1063, %v1063
        %v1079 = vmul.f32 %v1064, %v1064
        %v1080 = vsel %vm976, %v1078, 0.0
        %v1081 = vsel %vm976, %v1079, 0.0
        %v1082 = vadd.f32 %v1080, %v1081
        %v1083 = vrot.slane %v1082, 4
        %v1084 = vadd.f32 %v1082, %v1083
        %v1085 = vrot.slane %v1084, 2
        %v1086 = vadd.f32 %v1084, %v1085
        %v1087 = vrot.slane %v1086, 1
        %v1088 = vadd.f32 %v1086, %v1087
        %1089 = vst.msk [vmem:[%s1001 + $0x3] sm:$0x1] %vm988, %v1088
        %p1090 = scmp.lt.s32.totalorder %s25, 1
        %s1091 = scalar_select %p1090, %s25, 1
        %p1092 = scmp.lt.s32.totalorder %s26, 0
        %s1093 = scalar_select %p1092, %s26, 0
        %s1094 = smul.addr %s1091, 8
        %s1095 = sadd.s32 %s1093, %s1094
        %s1096 = smul.addr %s1095, 8
        %s1097 = scalar_lea.vmem %s3, %s1096
        %s1098 = sadd.s32 %s25, %s26
        %p1099 = scmp.lt.s32.totalorder %s1098, 1
        %s1100 = scalar_select %p1099, %s1098, 1
        %s1101 = smul.addr %s1100, 2
        %s1102 = smul.addr %s1101, 4
        %s1103 = scalar_lea.vmem %s4, %s1102
        // Predicated region
        $region45: #{_lambda_.3} parent=31 // pred_check
          %p1104 = pneg %p123
        $region46: #{_lambda_.3} parent=31 // pred_check_branch
          %1106 = sbr.rel (%p1104) target = $region48
        $region47: #{_lambda_.3} parent=31 // pred_region
          _
        $region48: #{_lambda_.3} parent=31 // pred_fallthru
          _
        // Predicated region
        $region49: #{_lambda_.3} parent=31 // pred_check
          %p1107 = pneg %p151
        $region50: #{_lambda_.3} parent=31 // pred_check_branch
          %1109 = sbr.rel (%p1107) target = $region52
        $region51: #{_lambda_.3} parent=31 // pred_region
          %s1110 = sadd.s32 %s25, %s26
        $region52: #{_lambda_.3} parent=31 // pred_fallthru
          _
      $region32: #{_lambda_.3} parent=5 // pred_fallthru
        _
      %p1111 = scmp.le.s32.totalorder 2, %s16
      // Predicated region
      $region53: #{_lambda_.3} parent=5 // pred_check
        %p1112 = pneg %p1111
      $region54: #{_lambda_.3} parent=5 // pred_check_branch
        %1114 = sbr.rel (%p1112) target = $region56
      $region55: #{_lambda_.3} parent=5 // pred_region
        %s1115 = ssub.s32 %s16, 2
        // Predicated region
        $region57: #{_lambda_.3} parent=55 // pred_check
          %p1116 = pneg %p129
        $region58: #{_lambda_.3} parent=55 // pred_check_branch
          %1118 = sbr.rel (%p1116) target = $region60
        $region59: #{_lambda_.3} parent=55 // pred_region
          %p1119 = scmp.lt.s32.totalorder %s27, 1
          %s1120 = scalar_select %p1119, %s27, 1
          %p1121 = scmp.lt.s32.totalorder %s28, 0
          %s1122 = scalar_select %p1121, %s28, 0
          %s1123 = smul.addr %s1120, 8
          %s1124 = sadd.s32 %s1122, %s1123
          %s1125 = smul.addr %s1124, 8
          %s1126 = scalar_lea.vmem %s3, %s1125
        $region60: #{_lambda_.3} parent=55 // pred_fallthru
          _
        // Predicated region
        $region61: #{_lambda_.3} parent=55 // pred_check
          %p1127 = pneg %p157
        $region62: #{_lambda_.3} parent=55 // pred_check_branch
          %1129 = sbr.rel (%p1127) target = $region64
        $region63: #{_lambda_.3} parent=55 // pred_region
          %s1130 = sadd.s32 %s27, %s28
          %p1131 = scmp.lt.s32.totalorder %s1130, 1
          %s1132 = scalar_select %p1131, %s1130, 1
          %s1133 = smul.addr %s1132, 2
          %s1134 = smul.addr %s1133, 4
          %s1135 = scalar_lea.vmem %s4, %s1134
        $region64: #{_lambda_.3} parent=55 // pred_fallthru
          _
      $region56: #{_lambda_.3} parent=5 // pred_fallthru
        _
    $region6: #{_lambda_.3} parent=1 // loop_footer
      %s20 = sadd.s32 1, %s16
    $region7: #{_lambda_.3} parent=1 // loop_footer_branch
      %15 = sbr.rel target = $region3
    $region8: #{_lambda_.3} parent=1 // loop_exit
      _
    %1136 = vsyncpa [#allocation3], 1
    %s1137 = scalar_lea.sflag [#allocation3], 1
    %1138 = vsyncpa %s1137, 1
    %1139 = vsyncpa [#allocation4], 1
    %s1140 = scalar_lea.sflag [#allocation4], 1
    %1141 = vsyncpa %s1140, 1
    %1142 = vsyncpa [#allocation7], 1

</llo_original>
